<compile_context>
chip_gen: v6e
topology: v6e:2x2x1
jax: 0.10.0
libtpu: 0.0.40
codegen_flags: <defaults>
</compile_context>

<pallas_src>
import functools
import math

import jax
import jax.numpy as jnp
from jax.experimental import pallas as pl
from jax.experimental.pallas import tpu as pltpu

ALPHA = 1.0          # weight of shrink-map loss
BETA = 10.0          # weight of threshold-map loss
GAMMA = 5.0          # weight of focal intersection loss
OHEM_RATIO = 3.0
EPS = 1e-6
FOCAL_ALPHA = 0.25
FOCAL_GAMMA = 2.0    # hard-coded as a square below

# ---- OHEM cumulative-histogram edges (trace-time Python floats). ----
# Negative BCE values are -log(1-p) clamped to [0, 100]; 32 log-spaced edges
# plus a virtual edge at 0 (total negative count / sum) give an interpolated
# top-k sum that is exact when k covers all negatives and accurate to a small
# fraction of a percent otherwise, at ~6 VPU ops / edge / pixel-vreg.
_N_EDGES = 32
_EDGES = tuple(
    math.exp(math.log(1e-3) + i * (math.log(100.0) - math.log(1e-3)) / (_N_EDGES - 1))
    for i in range(_N_EDGES))

# slots in the per-batch accumulator output
(_POS_LOSS, _POS_CNT, _NEG_CNT, _NEG_LOSS, _L1_NUM, _L1_DEN,
 _DICE_INT, _DICE_PRED, _FOCAL) = range(9)
_NBASE = 9
_HIST_C0 = _NBASE                  # counts  of (neg_loss > edge_e)
_HIST_S0 = _NBASE + _N_EDGES       # sums    of max(neg_loss - edge_e, 0)
_NACC = _NBASE + 2 * _N_EDGES      # 73 accumulated quantities per batch

_MAX_TILE_ROWS = 256               # 256 rows x 128 lanes = 32k pixels / tile


def _round_up(x, m):
    return (x + m - 1) // m * m


def _vreg_sum(x):
    """Reduce (rows, 128) -> (8, 128) with tile-aligned VPU adds only."""
    acc = x[0:8, :]
    for r in range(8, x.shape[0], 8):
        acc = acc + x[r:r + 8, :]
    return acc


def _focal_map(x, t):
    """segmentation_models_pytorch focal_loss_with_logits (alpha=.25, gamma=2),
    per-element.  For targets in {0,1} this sigmoid/pt form is mathematically
    identical to the softplus form but needs 2 EUP transcendentals, not 3."""
    p = jax.nn.sigmoid(x)
    pt = p * t + (1.0 - p) * (1.0 - t)
    logpt = -jnp.log(jnp.maximum(pt, 1e-12))
    one_m_pt = 1.0 - pt
    loss = one_m_pt * one_m_pt * logpt               # gamma == 2
    return loss * (FOCAL_ALPHA * t + (1.0 - FOCAL_ALPHA) * (1.0 - t))


def _db_loss_kernel(pred_ref, smap_ref, smask_ref, tmap_ref, tmask_ref,
                    acc_ref, *, hw, tile_rows, padded):
    t_idx = pl.program_id(1)

    @pl.when(t_idx == 0)
    def _():
        acc_ref[...] = jnp.zeros_like(acc_ref)

    def acc(i, m):                                   # (tile_rows,128) -> +=(8,128)
        acc_ref[0, i] += _vreg_sum(m)

    shrink_map = smap_ref[0].astype(jnp.float32)     # raw labels {0,1,2}
    shrink_mask = smask_ref[0].astype(jnp.float32)
    thr_map = tmap_ref[0]
    thr_mask = tmask_ref[0].astype(jnp.float32)

    shrink_pred = pred_ref[0, 0]                     # probabilities
    thr_pred = pred_ref[0, 1]
    bin_pred = pred_ref[0, 2]
    inter_pred0 = pred_ref[0, 3]                     # intersection logits
    inter_pred1 = pred_ref[0, 4]

    # ---- target construction (mirrors the torch clone/assign logic) ----
    gt = jnp.where(shrink_map == 2.0, 0.0, shrink_map)        # shrink target
    t1 = jnp.where(shrink_map == 1.0, 0.0, shrink_map)
    t1 = jnp.where(t1 == 2.0, 1.0, t1)                        # intersection tgt 1
    t0 = (t1 == 0.0).astype(jnp.float32)                      # intersection tgt 0

    # ---- BalanceCrossEntropyLoss pieces ----
    pos = gt * shrink_mask
    neg = (1.0 - gt) * shrink_mask
    log_p = jnp.maximum(jnp.log(shrink_pred), -100.0)          # torch BCE clamp
    log_1mp = jnp.maximum(jnp.log1p(-shrink_pred), -100.0)
    bce = -(gt * log_p + (1.0 - gt) * log_1mp)
    neg_loss = bce * neg
    acc(_POS_LOSS, bce * pos)
    acc(_POS_CNT, pos)                                         # also dice gt sum
    acc(_NEG_CNT, neg)
    acc(_NEG_LOSS, neg_loss)

    # ---- MaskL1Loss pieces ----
    acc(_L1_NUM, jnp.abs(thr_pred - thr_map) * thr_mask)
    acc(_L1_DEN, thr_mask)

    # ---- DiceLoss pieces (binary maps vs shrink target) ----
    acc(_DICE_INT, bin_pred * pos)
    acc(_DICE_PRED, bin_pred * shrink_mask)

    # ---- Focal loss pieces (2 intersection channels, summed) ----
    focal = _focal_map(inter_pred0, t0) + _focal_map(inter_pred1, t1)
    if padded:   # zero the contribution of pixels that only exist as padding
        row = jax.lax.broadcasted_iota(jnp.int32, (tile_rows, 128), 0)
        lane = jax.lax.broadcasted_iota(jnp.int32, (tile_rows, 128), 1)
        pix = (row + t_idx * tile_rows) * 128 + lane
        focal = jnp.where(pix < hw, focal, 0.0)
    acc(_FOCAL, focal)

    # ---- OHEM cumulative histogram of the negative BCE losses ----
    # Per edge: count of values above the edge and sum of their excess.
    # Processed one (8,128) vreg-group at a time to keep live values tiny.
    for e, tau in enumerate(_EDGES):
        cnt_p = jnp.zeros((8, 128), jnp.float32)
        sum_p = jnp.zeros((8, 128), jnp.float32)
        for r in range(0, tile_rows, 8):
            d = neg_loss[r:r + 8, :] - tau
            hit = (d > 0.0).astype(jnp.float32)
            cnt_p = cnt_p + hit
            sum_p = sum_p + hit * d
        acc_ref[0, _HIST_C0 + e] += cnt_p
        acc_ref[0, _HIST_S0 + e] += sum_p


@jax.jit
def db_loss_intersection(pred, shrink_map, shrink_mask,
                         threshold_map, threshold_mask):
    B, C, H, W = pred.shape
    assert C == 5, "expect 5 prediction channels (shrink, thr, bin, inter x2)"
    HW = H * W

    # --- lane-dense retiling: flatten pixels, pad to tile_rows*128 multiple ---
    n_rows0 = -(-HW // 128)
    grid_t = max(1, -(-n_rows0 // _MAX_TILE_ROWS))
    tile_rows = _round_up(-(-n_rows0 // grid_t), 16)
    n_rows = tile_rows * grid_t
    n_pix = n_rows * 128
    pad = n_pix - HW
    padded = pad > 0

    def prep(x, dt):
        x = x.reshape(B, HW).astype(dt)
        if pad:
            x = jnp.pad(x, ((0, 0), (0, pad)))
        return x.reshape(B, n_rows, 128)

    pred_r = pred.astype(jnp.float32).reshape(B, C, HW)
    if pad:
        pred_r = jnp.pad(pred_r, ((0, 0), (0, 0), (0, pad)))
    pred_r = pred_r.reshape(B, C, n_rows, 128)

    smap = prep(shrink_map, jnp.bfloat16)       # {0,1,2}: lossless in bf16
    smask = prep(shrink_mask, jnp.bfloat16)     # {0,1}
    tmask = prep(threshold_mask, jnp.bfloat16)  # {0,1}
    tmap = prep(threshold_map, jnp.float32)     # continuous target: keep f32

    block_in_bytes = tile_rows * 128 * (C * 4 + 2 + 2 + 2 + 4)
    acc_bytes = _NACC * 8 * 128 * 4
    vmem_limit = int(min(64 * 2**20,
                         4 * block_in_bytes + 4 * acc_bytes + (16 << 20)))

    kernel = functools.partial(_db_loss_kernel, hw=HW, tile_rows=tile_rows,
                               padded=padded)

    acc = pl.pallas_call(
        kernel,
        out_shape=jax.ShapeDtypeStruct((B, _NACC, 8, 128), jnp.float32),
        grid_spec=pltpu.PrefetchScalarGridSpec(
            num_scalar_prefetch=0,
            grid=(B, grid_t),
            in_specs=[
                pl.BlockSpec((1, C, tile_rows, 128), lambda b, t: (b, 0, t, 0)),
                pl.BlockSpec((1, tile_rows, 128), lambda b, t: (b, t, 0)),
                pl.BlockSpec((1, tile_rows, 128), lambda b, t: (b, t, 0)),
                pl.BlockSpec((1, tile_rows, 128), lambda b, t: (b, t, 0)),
                pl.BlockSpec((1, tile_rows, 128), lambda b, t: (b, t, 0)),
            ],
            out_specs=pl.BlockSpec((1, _NACC, 8, 128),
                                   lambda b, t: (b, 0, 0, 0)),
        ),
        compiler_params=pltpu.CompilerParams(
            dimension_semantics=("parallel", "arbitrary"),
            vmem_limit_bytes=vmem_limit),
    )(pred_r, smap, smask, tmap, tmask)

    g = jnp.sum(acc, axis=(0, 2, 3))            # (NACC,) global sums

    pos_loss_sum = g[_POS_LOSS]
    pos_sum = g[_POS_CNT]
    neg_sum = g[_NEG_CNT]
    neg_loss_sum = g[_NEG_LOSS]

    # --- BalanceCrossEntropyLoss (OHEM) tail, sort-free ---
    pos_count = jnp.floor(pos_sum)                              # torch int()
    k = jnp.minimum(jnp.floor(neg_sum), jnp.floor(pos_count * OHEM_RATIO))
    taus = jnp.concatenate([jnp.zeros((1,), jnp.float32),
                            jnp.asarray(_EDGES, jnp.float32)])
    cnt = jnp.concatenate([neg_sum[None], g[_HIST_C0:_HIST_C0 + _N_EDGES]])
    exc = jnp.concatenate([neg_loss_sum[None], g[_HIST_S0:_HIST_S0 + _N_EDGES]])
    # largest edge index j with cnt[j] >= k (cnt is non-increasing)
    j = jnp.sum((cnt >= k).astype(jnp.int32)) - 1
    j = jnp.clip(j, 0, _N_EDGES - 1)
    cj, cj1 = cnt[j], cnt[j + 1]
    sj, tj, tj1 = exc[j], taus[j], taus[j + 1]
    frac = jnp.clip((cj - k) / jnp.maximum(cj - cj1, 1e-6), 0.0, 1.0)
    tau_hat = tj + frac * (tj1 - tj)
    s_hat = sj - (tau_hat - tj) * 0.5 * (cj + k)
    # TODO(synk): exact dynamic-k top-k has no clean Pallas equivalent; the
    # CVaR identity topk = sum(max(x - tau_k, 0)) + k*tau_k is evaluated from
    # the in-kernel cumulative histogram with linear interpolation (exact for
    # k == all negatives, sub-percent boundary-bin approximation otherwise).
    neg_topk_sum = jnp.clip(s_hat + k * tau_hat, 0.0, neg_loss_sum)
    neg_topk_sum = jnp.where(k > 0, neg_topk_sum, 0.0)
    loss_shrink_maps = (pos_loss_sum + neg_topk_sum) / (pos_count + k + EPS)

    # --- MaskL1Loss ---
    loss_threshold_maps = g[_L1_NUM] / (g[_L1_DEN] + EPS)

    # --- DiceLoss on binary maps (dice_gt sum == pos_sum) ---
    union = g[_DICE_PRED] + pos_sum + EPS
    loss_binary_maps = 1.0 - 2.0 * g[_DICE_INT] / union

    # --- Focal loss (mean over B*2*H*W elements) ---
    loss_focal_intersec = g[_FOCAL] / jnp.float32(B * 2 * H * W)

    loss = (ALPHA * loss_shrink_maps + BETA * loss_threshold_maps +
            loss_binary_maps + GAMMA * loss_focal_intersec)

    return dict(loss_shrink_maps=loss_shrink_maps,
                loss_threshold_maps=loss_threshold_maps,
                loss_binary_maps=loss_binary_maps,
                loss_focal_intersec=loss_focal_intersec,
                loss=loss)


if __name__ == "__main__":
    B, C, H, W = 2, 5, 16, 16
    key = jax.random.PRNGKey(0)
    k1, k2, k3, k4, k5 = jax.random.split(key, 5)

    # probabilities for shrink / threshold / binary channels; arbitrary values
    # for the two intersection channels (treated as logits by the focal loss)
    pred = jax.nn.sigmoid(jax.random.normal(k1, (B, C, H, W), jnp.float32))

    # shrink_map labels in {0, 1, 2}
    shrink_map = jax.random.randint(k2, (B, H, W), 0, 3).astype(jnp.float32)
    shrink_mask = (jax.random.uniform(k3, (B, H, W)) > 0.1).astype(jnp.float32)
    threshold_map = jax.random.uniform(k4, (B, H, W)).astype(jnp.float32)
    threshold_mask = (jax.random.uniform(k5, (B, H, W)) > 0.3).astype(jnp.float32)

    metrics = db_loss_intersection(pred, shrink_map, shrink_mask,
                                   threshold_map, threshold_mask)
    metrics = jax.block_until_ready(metrics)
    for name in ("loss_shrink_maps", "loss_threshold_maps", "loss_binary_maps",
                 "loss_focal_intersec", "loss"):
        assert jnp.isfinite(metrics[name]).item(), name
    print("KERNEL_OK")
</pallas_src>

<mosaic_0001>
module attributes {stable_mosaic.version = 11 : i64} {
  func.func @_db_loss_kernel(%arg0: i32, %arg1: i32, %arg2: memref<1x5x16x128xf32, #tpu.memory_space<vmem>>, %arg3: memref<1x16x128xbf16, #tpu.memory_space<vmem>>, %arg4: memref<1x16x128xbf16, #tpu.memory_space<vmem>>, %arg5: memref<1x16x128xf32, #tpu.memory_space<vmem>>, %arg6: memref<1x16x128xbf16, #tpu.memory_space<vmem>>, %arg7: memref<1x73x8x128xf32, #tpu.memory_space<vmem>>) attributes {dimension_semantics = [#tpu.dimension_semantics<parallel>, #tpu.dimension_semantics<arbitrary>], iteration_bounds = array<i64: 2, 1>, scalar_prefetch = 0 : i64, scratch_operands = 0 : i64, tpu.core_type = #tpu.core_type<tc>, window_params = [{transform_indices = @transform_0, window_bounds = array<i64: 1, 5, 16, 128>}, {transform_indices = @transform_1, window_bounds = array<i64: 1, 16, 128>}, {transform_indices = @transform_2, window_bounds = array<i64: 1, 16, 128>}, {transform_indices = @transform_3, window_bounds = array<i64: 1, 16, 128>}, {transform_indices = @transform_4, window_bounds = array<i64: 1, 16, 128>}, {transform_indices = @transform_5, window_bounds = array<i64: 1, 73, 8, 128>}]} {
    %c0_i32 = arith.constant 0 : i32
    %0 = arith.cmpi eq, %arg1, %c0_i32 : i32
    %1 = arith.extui %0 : i1 to i32
    %c0_i32_0 = arith.constant 0 : i32
    %2 = arith.cmpi ne, %1, %c0_i32_0 : i32
    scf.if %2 {
      %cst_767 = arith.constant 0.000000e+00 : f32
      %1306 = vector.broadcast %cst_767 : f32 to vector<1x73x8x128xf32>
      %c0_768 = arith.constant 0 : index
      %c0_769 = arith.constant 0 : index
      %c0_770 = arith.constant 0 : index
      %c0_771 = arith.constant 0 : index
      %1307 = vector.load %arg7[%c0_768, %c0_769, %c0_770, %c0_771] : memref<1x73x8x128xf32, #tpu.memory_space<vmem>>, vector<1x73x8x128xf32>
      tpu.vector_store %arg7[%c0_768, %c0_769, %c0_770, %c0_771], %1306 {strides = array<i32>} : memref<1x73x8x128xf32, #tpu.memory_space<vmem>>, vector<1x73x8x128xf32>,
    } else {
    }
    %c0 = arith.constant 0 : index
    %c0_1 = arith.constant 0 : index
    %c0_2 = arith.constant 0 : index
    %3 = vector.load %arg3[%c0, %c0_1, %c0_2] : memref<1x16x128xbf16, #tpu.memory_space<vmem>>, vector<1x16x128xbf16>
    %4 = vector.shape_cast %3 : vector<1x16x128xbf16> to vector<16x128xbf16>
    %5 = arith.extf %4 : vector<16x128xbf16> to vector<16x128xf32>
    %c0_3 = arith.constant 0 : index
    %c0_4 = arith.constant 0 : index
    %c0_5 = arith.constant 0 : index
    %6 = vector.load %arg4[%c0_3, %c0_4, %c0_5] : memref<1x16x128xbf16, #tpu.memory_space<vmem>>, vector<1x16x128xbf16>
    %7 = vector.shape_cast %6 : vector<1x16x128xbf16> to vector<16x128xbf16>
    %8 = arith.extf %7 : vector<16x128xbf16> to vector<16x128xf32>
    %c0_6 = arith.constant 0 : index
    %c0_7 = arith.constant 0 : index
    %c0_8 = arith.constant 0 : index
    %9 = vector.load %arg5[%c0_6, %c0_7, %c0_8] : memref<1x16x128xf32, #tpu.memory_space<vmem>>, vector<1x16x128xf32>
    %10 = vector.shape_cast %9 : vector<1x16x128xf32> to vector<16x128xf32>
    %c0_9 = arith.constant 0 : index
    %c0_10 = arith.constant 0 : index
    %c0_11 = arith.constant 0 : index
    %11 = vector.load %arg6[%c0_9, %c0_10, %c0_11] : memref<1x16x128xbf16, #tpu.memory_space<vmem>>, vector<1x16x128xbf16>
    %12 = vector.shape_cast %11 : vector<1x16x128xbf16> to vector<16x128xbf16>
    %13 = arith.extf %12 : vector<16x128xbf16> to vector<16x128xf32>
    %c0_12 = arith.constant 0 : index
    %c0_13 = arith.constant 0 : index
    %c0_14 = arith.constant 0 : index
    %c0_15 = arith.constant 0 : index
    %14 = vector.load %arg2[%c0_12, %c0_13, %c0_14, %c0_15] : memref<1x5x16x128xf32, #tpu.memory_space<vmem>>, vector<1x1x16x128xf32>
    %15 = vector.shape_cast %14 : vector<1x1x16x128xf32> to vector<16x128xf32>
    %c0_16 = arith.constant 0 : index
    %c1 = arith.constant 1 : index
    %c0_17 = arith.constant 0 : index
    %c0_18 = arith.constant 0 : index
    %16 = vector.load %arg2[%c0_16, %c1, %c0_17, %c0_18] : memref<1x5x16x128xf32, #tpu.memory_space<vmem>>, vector<1x1x16x128xf32>
    %17 = vector.shape_cast %16 : vector<1x1x16x128xf32> to vector<16x128xf32>
    %c0_19 = arith.constant 0 : index
    %c2 = arith.constant 2 : index
    %c0_20 = arith.constant 0 : index
    %c0_21 = arith.constant 0 : index
    %18 = vector.load %arg2[%c0_19, %c2, %c0_20, %c0_21] : memref<1x5x16x128xf32, #tpu.memory_space<vmem>>, vector<1x1x16x128xf32>
    %19 = vector.shape_cast %18 : vector<1x1x16x128xf32> to vector<16x128xf32>
    %c0_22 = arith.constant 0 : index
    %c3 = arith.constant 3 : index
    %c0_23 = arith.constant 0 : index
    %c0_24 = arith.constant 0 : index
    %20 = vector.load %arg2[%c0_22, %c3, %c0_23, %c0_24] : memref<1x5x16x128xf32, #tpu.memory_space<vmem>>, vector<1x1x16x128xf32>
    %21 = vector.shape_cast %20 : vector<1x1x16x128xf32> to vector<16x128xf32>
    %c0_25 = arith.constant 0 : index
    %c4 = arith.constant 4 : index
    %c0_26 = arith.constant 0 : index
    %c0_27 = arith.constant 0 : index
    %22 = vector.load %arg2[%c0_25, %c4, %c0_26, %c0_27] : memref<1x5x16x128xf32, #tpu.memory_space<vmem>>, vector<1x1x16x128xf32>
    %23 = vector.shape_cast %22 : vector<1x1x16x128xf32> to vector<16x128xf32>
    %cst = arith.constant 2.000000e+00 : f32
    %24 = vector.broadcast %cst : f32 to vector<16x128xf32>
    %25 = arith.cmpf oeq, %5, %24 : vector<16x128xf32>
    %cst_28 = arith.constant 0.000000e+00 : f32
    %26 = vector.broadcast %cst_28 : f32 to vector<16x128xf32>
    %27 = arith.select %25, %26, %5 : vector<16x128xi1>, vector<16x128xf32>
    %cst_29 = arith.constant 1.000000e+00 : f32
    %28 = vector.broadcast %cst_29 : f32 to vector<16x128xf32>
    %29 = arith.cmpf oeq, %5, %28 : vector<16x128xf32>
    %cst_30 = arith.constant 0.000000e+00 : f32
    %30 = vector.broadcast %cst_30 : f32 to vector<16x128xf32>
    %31 = arith.select %29, %30, %5 : vector<16x128xi1>, vector<16x128xf32>
    %cst_31 = arith.constant 2.000000e+00 : f32
    %32 = vector.broadcast %cst_31 : f32 to vector<16x128xf32>
    %33 = arith.cmpf oeq, %31, %32 : vector<16x128xf32>
    %cst_32 = arith.constant 1.000000e+00 : f32
    %34 = vector.broadcast %cst_32 : f32 to vector<16x128xf32>
    %35 = arith.select %33, %34, %31 : vector<16x128xi1>, vector<16x128xf32>
    %cst_33 = arith.constant 0.000000e+00 : f32
    %36 = vector.broadcast %cst_33 : f32 to vector<16x128xf32>
    %37 = arith.cmpf oeq, %35, %36 : vector<16x128xf32>
    %38 = arith.extui %37 : vector<16x128xi1> to vector<16x128xi32>
    %39 = arith.sitofp %38 : vector<16x128xi32> to vector<16x128xf32>
    %40 = arith.mulf %27, %8 : vector<16x128xf32>
    %cst_34 = arith.constant 1.000000e+00 : f32
    %41 = vector.broadcast %cst_34 : f32 to vector<16x128xf32>
    %42 = arith.subf %41, %27 : vector<16x128xf32>
    %43 = arith.mulf %42, %8 : vector<16x128xf32>
    %44 = math.log %15 : vector<16x128xf32>
    %cst_35 = arith.constant -1.000000e+02 : f32
    %45 = vector.broadcast %cst_35 : f32 to vector<16x128xf32>
    %46 = arith.maximumf %44, %45 : vector<16x128xf32>
    %cst_36 = arith.constant 0.000000e+00 : f32
    %47 = vector.broadcast %cst_36 : f32 to vector<16x128xf32>
    %48 = arith.subf %47, %15 : vector<16x128xf32>
    %49 = math.log1p %48 : vector<16x128xf32>
    %cst_37 = arith.constant -1.000000e+02 : f32
    %50 = vector.broadcast %cst_37 : f32 to vector<16x128xf32>
    %51 = arith.maximumf %49, %50 : vector<16x128xf32>
    %52 = arith.mulf %27, %46 : vector<16x128xf32>
    %cst_38 = arith.constant 1.000000e+00 : f32
    %53 = vector.broadcast %cst_38 : f32 to vector<16x128xf32>
    %54 = arith.subf %53, %27 : vector<16x128xf32>
    %55 = arith.mulf %54, %51 : vector<16x128xf32>
    %56 = arith.addf %52, %55 : vector<16x128xf32>
    %cst_39 = arith.constant 0.000000e+00 : f32
    %57 = vector.broadcast %cst_39 : f32 to vector<16x128xf32>
    %58 = arith.subf %57, %56 : vector<16x128xf32>
    %59 = arith.mulf %58, %43 : vector<16x128xf32>
    %60 = arith.mulf %58, %40 : vector<16x128xf32>
    %c0_40 = arith.constant 0 : index
    %c0_41 = arith.constant 0 : index
    %c0_42 = arith.constant 0 : index
    %c0_43 = arith.constant 0 : index
    %61 = vector.load %arg7[%c0_40, %c0_41, %c0_42, %c0_43] : memref<1x73x8x128xf32, #tpu.memory_space<vmem>>, vector<1x1x8x128xf32>
    %62 = vector.shape_cast %61 : vector<1x1x8x128xf32> to vector<8x128xf32>
    %63 = vector.extract_strided_slice %60 {offsets = [0, 0], sizes = [8, 128], strides = [1, 1]} : vector<16x128xf32> to vector<8x128xf32>
    %64 = vector.extract_strided_slice %60 {offsets = [8, 0], sizes = [8, 128], strides = [1, 1]} : vector<16x128xf32> to vector<8x128xf32>
    %65 = arith.addf %63, %64 : vector<8x128xf32>
    %66 = arith.addf %62, %65 : vector<8x128xf32>
    %c0_44 = arith.constant 0 : index
    %c0_45 = arith.constant 0 : index
    %c0_46 = arith.constant 0 : index
    %c0_47 = arith.constant 0 : index
    %67 = vector.load %arg7[%c0_44, %c0_45, %c0_46, %c0_47] : memref<1x73x8x128xf32, #tpu.memory_space<vmem>>, vector<1x1x8x128xf32>
    %68 = vector.shape_cast %67 : vector<1x1x8x128xf32> to vector<8x128xf32>
    %69 = vector.shape_cast %66 : vector<8x128xf32> to vector<1x1x8x128xf32>
    tpu.vector_store %arg7[%c0_44, %c0_45, %c0_46, %c0_47], %69 {strides = array<i32>} : memref<1x73x8x128xf32, #tpu.memory_space<vmem>>, vector<1x1x8x128xf32>,
    %c0_48 = arith.constant 0 : index
    %c1_49 = arith.constant 1 : index
    %c0_50 = arith.constant 0 : index
    %c0_51 = arith.constant 0 : index
    %70 = vector.load %arg7[%c0_48, %c1_49, %c0_50, %c0_51] : memref<1x73x8x128xf32, #tpu.memory_space<vmem>>, vector<1x1x8x128xf32>
    %71 = vector.shape_cast %70 : vector<1x1x8x128xf32> to vector<8x128xf32>
    %72 = vector.extract_strided_slice %40 {offsets = [0, 0], sizes = [8, 128], strides = [1, 1]} : vector<16x128xf32> to vector<8x128xf32>
    %73 = vector.extract_strided_slice %40 {offsets = [8, 0], sizes = [8, 128], strides = [1, 1]} : vector<16x128xf32> to vector<8x128xf32>
    %74 = arith.addf %72, %73 : vector<8x128xf32>
    %75 = arith.addf %71, %74 : vector<8x128xf32>
    %c0_52 = arith.constant 0 : index
    %c1_53 = arith.constant 1 : index
    %c0_54 = arith.constant 0 : index
    %c0_55 = arith.constant 0 : index
    %76 = vector.load %arg7[%c0_52, %c1_53, %c0_54, %c0_55] : memref<1x73x8x128xf32, #tpu.memory_space<vmem>>, vector<1x1x8x128xf32>
    %77 = vector.shape_cast %76 : vector<1x1x8x128xf32> to vector<8x128xf32>
    %78 = vector.shape_cast %75 : vector<8x128xf32> to vector<1x1x8x128xf32>
    tpu.vector_store %arg7[%c0_52, %c1_53, %c0_54, %c0_55], %78 {strides = array<i32>} : memref<1x73x8x128xf32, #tpu.memory_space<vmem>>, vector<1x1x8x128xf32>,
    %c0_56 = arith.constant 0 : index
    %c2_57 = arith.constant 2 : index
    %c0_58 = arith.constant 0 : index
    %c0_59 = arith.constant 0 : index
    %79 = vector.load %arg7[%c0_56, %c2_57, %c0_58, %c0_59] : memref<1x73x8x128xf32, #tpu.memory_space<vmem>>, vector<1x1x8x128xf32>
    %80 = vector.shape_cast %79 : vector<1x1x8x128xf32> to vector<8x128xf32>
    %81 = vector.extract_strided_slice %43 {offsets = [0, 0], sizes = [8, 128], strides = [1, 1]} : vector<16x128xf32> to vector<8x128xf32>
    %82 = vector.extract_strided_slice %43 {offsets = [8, 0], sizes = [8, 128], strides = [1, 1]} : vector<16x128xf32> to vector<8x128xf32>
    %83 = arith.addf %81, %82 : vector<8x128xf32>
    %84 = arith.addf %80, %83 : vector<8x128xf32>
    %c0_60 = arith.constant 0 : index
    %c2_61 = arith.constant 2 : index
    %c0_62 = arith.constant 0 : index
    %c0_63 = arith.constant 0 : index
    %85 = vector.load %arg7[%c0_60, %c2_61, %c0_62, %c0_63] : memref<1x73x8x128xf32, #tpu.memory_space<vmem>>, vector<1x1x8x128xf32>
    %86 = vector.shape_cast %85 : vector<1x1x8x128xf32> to vector<8x128xf32>
    %87 = vector.shape_cast %84 : vector<8x128xf32> to vector<1x1x8x128xf32>
    tpu.vector_store %arg7[%c0_60, %c2_61, %c0_62, %c0_63], %87 {strides = array<i32>} : memref<1x73x8x128xf32, #tpu.memory_space<vmem>>, vector<1x1x8x128xf32>,
    %c0_64 = arith.constant 0 : index
    %c3_65 = arith.constant 3 : index
    %c0_66 = arith.constant 0 : index
    %c0_67 = arith.constant 0 : index
    %88 = vector.load %arg7[%c0_64, %c3_65, %c0_66, %c0_67] : memref<1x73x8x128xf32, #tpu.memory_space<vmem>>, vector<1x1x8x128xf32>
    %89 = vector.shape_cast %88 : vector<1x1x8x128xf32> to vector<8x128xf32>
    %90 = vector.extract_strided_slice %59 {offsets = [0, 0], sizes = [8, 128], strides = [1, 1]} : vector<16x128xf32> to vector<8x128xf32>
    %91 = vector.extract_strided_slice %59 {offsets = [8, 0], sizes = [8, 128], strides = [1, 1]} : vector<16x128xf32> to vector<8x128xf32>
    %92 = arith.addf %90, %91 : vector<8x128xf32>
    %93 = arith.addf %89, %92 : vector<8x128xf32>
    %c0_68 = arith.constant 0 : index
    %c3_69 = arith.constant 3 : index
    %c0_70 = arith.constant 0 : index
    %c0_71 = arith.constant 0 : index
    %94 = vector.load %arg7[%c0_68, %c3_69, %c0_70, %c0_71] : memref<1x73x8x128xf32, #tpu.memory_space<vmem>>, vector<1x1x8x128xf32>
    %95 = vector.shape_cast %94 : vector<1x1x8x128xf32> to vector<8x128xf32>
    %96 = vector.shape_cast %93 : vector<8x128xf32> to vector<1x1x8x128xf32>
    tpu.vector_store %arg7[%c0_68, %c3_69, %c0_70, %c0_71], %96 {strides = array<i32>} : memref<1x73x8x128xf32, #tpu.memory_space<vmem>>, vector<1x1x8x128xf32>,
    %97 = arith.subf %17, %10 : vector<16x128xf32>
    %98 = math.absf %97 : vector<16x128xf32>
    %99 = arith.mulf %98, %13 : vector<16x128xf32>
    %c0_72 = arith.constant 0 : index
    %c4_73 = arith.constant 4 : index
    %c0_74 = arith.constant 0 : index
    %c0_75 = arith.constant 0 : index
    %100 = vector.load %arg7[%c0_72, %c4_73, %c0_74, %c0_75] : memref<1x73x8x128xf32, #tpu.memory_space<vmem>>, vector<1x1x8x128xf32>
    %101 = vector.shape_cast %100 : vector<1x1x8x128xf32> to vector<8x128xf32>
    %102 = vector.extract_strided_slice %99 {offsets = [0, 0], sizes = [8, 128], strides = [1, 1]} : vector<16x128xf32> to vector<8x128xf32>
    %103 = vector.extract_strided_slice %99 {offsets = [8, 0], sizes = [8, 128], strides = [1, 1]} : vector<16x128xf32> to vector<8x128xf32>
    %104 = arith.addf %102, %103 : vector<8x128xf32>
    %105 = arith.addf %101, %104 : vector<8x128xf32>
    %c0_76 = arith.constant 0 : index
    %c4_77 = arith.constant 4 : index
    %c0_78 = arith.constant 0 : index
    %c0_79 = arith.constant 0 : index
    %106 = vector.load %arg7[%c0_76, %c4_77, %c0_78, %c0_79] : memref<1x73x8x128xf32, #tpu.memory_space<vmem>>, vector<1x1x8x128xf32>
    %107 = vector.shape_cast %106 : vector<1x1x8x128xf32> to vector<8x128xf32>
    %108 = vector.shape_cast %105 : vector<8x128xf32> to vector<1x1x8x128xf32>
    tpu.vector_store %arg7[%c0_76, %c4_77, %c0_78, %c0_79], %108 {strides = array<i32>} : memref<1x73x8x128xf32, #tpu.memory_space<vmem>>, vector<1x1x8x128xf32>,
    %c0_80 = arith.constant 0 : index
    %c5 = arith.constant 5 : index
    %c0_81 = arith.constant 0 : index
    %c0_82 = arith.constant 0 : index
    %109 = vector.load %arg7[%c0_80, %c5, %c0_81, %c0_82] : memref<1x73x8x128xf32, #tpu.memory_space<vmem>>, vector<1x1x8x128xf32>
    %110 = vector.shape_cast %109 : vector<1x1x8x128xf32> to vector<8x128xf32>
    %111 = vector.extract_strided_slice %13 {offsets = [0, 0], sizes = [8, 128], strides = [1, 1]} : vector<16x128xf32> to vector<8x128xf32>
    %112 = vector.extract_strided_slice %13 {offsets = [8, 0], sizes = [8, 128], strides = [1, 1]} : vector<16x128xf32> to vector<8x128xf32>
    %113 = arith.addf %111, %112 : vector<8x128xf32>
    %114 = arith.addf %110, %113 : vector<8x128xf32>
    %c0_83 = arith.constant 0 : index
    %c5_84 = arith.constant 5 : index
    %c0_85 = arith.constant 0 : index
    %c0_86 = arith.constant 0 : index
    %115 = vector.load %arg7[%c0_83, %c5_84, %c0_85, %c0_86] : memref<1x73x8x128xf32, #tpu.memory_space<vmem>>, vector<1x1x8x128xf32>
    %116 = vector.shape_cast %115 : vector<1x1x8x128xf32> to vector<8x128xf32>
    %117 = vector.shape_cast %114 : vector<8x128xf32> to vector<1x1x8x128xf32>
    tpu.vector_store %arg7[%c0_83, %c5_84, %c0_85, %c0_86], %117 {strides = array<i32>} : memref<1x73x8x128xf32, #tpu.memory_space<vmem>>, vector<1x1x8x128xf32>,
    %118 = arith.mulf %19, %40 : vector<16x128xf32>
    %c0_87 = arith.constant 0 : index
    %c6 = arith.constant 6 : index
    %c0_88 = arith.constant 0 : index
    %c0_89 = arith.constant 0 : index
    %119 = vector.load %arg7[%c0_87, %c6, %c0_88, %c0_89] : memref<1x73x8x128xf32, #tpu.memory_space<vmem>>, vector<1x1x8x128xf32>
    %120 = vector.shape_cast %119 : vector<1x1x8x128xf32> to vector<8x128xf32>
    %121 = vector.extract_strided_slice %118 {offsets = [0, 0], sizes = [8, 128], strides = [1, 1]} : vector<16x128xf32> to vector<8x128xf32>
    %122 = vector.extract_strided_slice %118 {offsets = [8, 0], sizes = [8, 128], strides = [1, 1]} : vector<16x128xf32> to vector<8x128xf32>
    %123 = arith.addf %121, %122 : vector<8x128xf32>
    %124 = arith.addf %120, %123 : vector<8x128xf32>
    %c0_90 = arith.constant 0 : index
    %c6_91 = arith.constant 6 : index
    %c0_92 = arith.constant 0 : index
    %c0_93 = arith.constant 0 : index
    %125 = vector.load %arg7[%c0_90, %c6_91, %c0_92, %c0_93] : memref<1x73x8x128xf32, #tpu.memory_space<vmem>>, vector<1x1x8x128xf32>
    %126 = vector.shape_cast %125 : vector<1x1x8x128xf32> to vector<8x128xf32>
    %127 = vector.shape_cast %124 : vector<8x128xf32> to vector<1x1x8x128xf32>
    tpu.vector_store %arg7[%c0_90, %c6_91, %c0_92, %c0_93], %127 {strides = array<i32>} : memref<1x73x8x128xf32, #tpu.memory_space<vmem>>, vector<1x1x8x128xf32>,
    %128 = arith.mulf %19, %8 : vector<16x128xf32>
    %c0_94 = arith.constant 0 : index
    %c7 = arith.constant 7 : index
    %c0_95 = arith.constant 0 : index
    %c0_96 = arith.constant 0 : index
    %129 = vector.load %arg7[%c0_94, %c7, %c0_95, %c0_96] : memref<1x73x8x128xf32, #tpu.memory_space<vmem>>, vector<1x1x8x128xf32>
    %130 = vector.shape_cast %129 : vector<1x1x8x128xf32> to vector<8x128xf32>
    %131 = vector.extract_strided_slice %128 {offsets = [0, 0], sizes = [8, 128], strides = [1, 1]} : vector<16x128xf32> to vector<8x128xf32>
    %132 = vector.extract_strided_slice %128 {offsets = [8, 0], sizes = [8, 128], strides = [1, 1]} : vector<16x128xf32> to vector<8x128xf32>
    %133 = arith.addf %131, %132 : vector<8x128xf32>
    %134 = arith.addf %130, %133 : vector<8x128xf32>
    %c0_97 = arith.constant 0 : index
    %c7_98 = arith.constant 7 : index
    %c0_99 = arith.constant 0 : index
    %c0_100 = arith.constant 0 : index
    %135 = vector.load %arg7[%c0_97, %c7_98, %c0_99, %c0_100] : memref<1x73x8x128xf32, #tpu.memory_space<vmem>>, vector<1x1x8x128xf32>
    %136 = vector.shape_cast %135 : vector<1x1x8x128xf32> to vector<8x128xf32>
    %137 = vector.shape_cast %134 : vector<8x128xf32> to vector<1x1x8x128xf32>
    tpu.vector_store %arg7[%c0_97, %c7_98, %c0_99, %c0_100], %137 {strides = array<i32>} : memref<1x73x8x128xf32, #tpu.memory_space<vmem>>, vector<1x1x8x128xf32>,
    %138 = arith.negf %21 : vector<16x128xf32>
    %139 = math.exp %138 : vector<16x128xf32>
    %cst_101 = arith.constant 1.000000e+00 : f32
    %140 = vector.broadcast %cst_101 : f32 to vector<16x128xf32>
    %141 = arith.addf %140, %139 : vector<16x128xf32>
    %142 = arith.divf %140, %141 : vector<16x128xf32>
    %143 = arith.mulf %142, %39 : vector<16x128xf32>
    %cst_102 = arith.constant 1.000000e+00 : f32
    %144 = vector.broadcast %cst_102 : f32 to vector<16x128xf32>
    %145 = arith.subf %144, %142 : vector<16x128xf32>
    %cst_103 = arith.constant 1.000000e+00 : f32
    %146 = vector.broadcast %cst_103 : f32 to vector<16x128xf32>
    %147 = arith.subf %146, %39 : vector<16x128xf32>
    %148 = arith.mulf %145, %147 : vector<16x128xf32>
    %149 = arith.addf %143, %148 : vector<16x128xf32>
    %cst_104 = arith.constant 9.99999996E-13 : f32
    %150 = vector.broadcast %cst_104 : f32 to vector<16x128xf32>
    %151 = arith.maximumf %149, %150 : vector<16x128xf32>
    %152 = math.log %151 : vector<16x128xf32>
    %cst_105 = arith.constant 0.000000e+00 : f32
    %153 = vector.broadcast %cst_105 : f32 to vector<16x128xf32>
    %154 = arith.subf %153, %152 : vector<16x128xf32>
    %cst_106 = arith.constant 1.000000e+00 : f32
    %155 = vector.broadcast %cst_106 : f32 to vector<16x128xf32>
    %156 = arith.subf %155, %149 : vector<16x128xf32>
    %157 = arith.mulf %156, %156 : vector<16x128xf32>
    %158 = arith.mulf %157, %154 : vector<16x128xf32>
    %cst_107 = arith.constant 2.500000e-01 : f32
    %159 = vector.broadcast %cst_107 : f32 to vector<16x128xf32>
    %160 = arith.mulf %159, %39 : vector<16x128xf32>
    %cst_108 = arith.constant 1.000000e+00 : f32
    %161 = vector.broadcast %cst_108 : f32 to vector<16x128xf32>
    %162 = arith.subf %161, %39 : vector<16x128xf32>
    %cst_109 = arith.constant 7.500000e-01 : f32
    %163 = vector.broadcast %cst_109 : f32 to vector<16x128xf32>
    %164 = arith.mulf %163, %162 : vector<16x128xf32>
    %165 = arith.addf %160, %164 : vector<16x128xf32>
    %166 = arith.mulf %158, %165 : vector<16x128xf32>
    %167 = arith.negf %23 : vector<16x128xf32>
    %168 = math.exp %167 : vector<16x128xf32>
    %cst_110 = arith.constant 1.000000e+00 : f32
    %169 = vector.broadcast %cst_110 : f32 to vector<16x128xf32>
    %170 = arith.addf %169, %168 : vector<16x128xf32>
    %171 = arith.divf %169, %170 : vector<16x128xf32>
    %172 = arith.mulf %171, %35 : vector<16x128xf32>
    %cst_111 = arith.constant 1.000000e+00 : f32
    %173 = vector.broadcast %cst_111 : f32 to vector<16x128xf32>
    %174 = arith.subf %173, %171 : vector<16x128xf32>
    %cst_112 = arith.constant 1.000000e+00 : f32
    %175 = vector.broadcast %cst_112 : f32 to vector<16x128xf32>
    %176 = arith.subf %175, %35 : vector<16x128xf32>
    %177 = arith.mulf %174, %176 : vector<16x128xf32>
    %178 = arith.addf %172, %177 : vector<16x128xf32>
    %cst_113 = arith.constant 9.99999996E-13 : f32
    %179 = vector.broadcast %cst_113 : f32 to vector<16x128xf32>
    %180 = arith.maximumf %178, %179 : vector<16x128xf32>
    %181 = math.log %180 : vector<16x128xf32>
    %cst_114 = arith.constant 0.000000e+00 : f32
    %182 = vector.broadcast %cst_114 : f32 to vector<16x128xf32>
    %183 = arith.subf %182, %181 : vector<16x128xf32>
    %cst_115 = arith.constant 1.000000e+00 : f32
    %184 = vector.broadcast %cst_115 : f32 to vector<16x128xf32>
    %185 = arith.subf %184, %178 : vector<16x128xf32>
    %186 = arith.mulf %185, %185 : vector<16x128xf32>
    %187 = arith.mulf %186, %183 : vector<16x128xf32>
    %cst_116 = arith.constant 2.500000e-01 : f32
    %188 = vector.broadcast %cst_116 : f32 to vector<16x128xf32>
    %189 = arith.mulf %188, %35 : vector<16x128xf32>
    %cst_117 = arith.constant 1.000000e+00 : f32
    %190 = vector.broadcast %cst_117 : f32 to vector<16x128xf32>
    %191 = arith.subf %190, %35 : vector<16x128xf32>
    %cst_118 = arith.constant 7.500000e-01 : f32
    %192 = vector.broadcast %cst_118 : f32 to vector<16x128xf32>
    %193 = arith.mulf %192, %191 : vector<16x128xf32>
    %194 = arith.addf %189, %193 : vector<16x128xf32>
    %195 = arith.mulf %187, %194 : vector<16x128xf32>
    %196 = arith.addf %166, %195 : vector<16x128xf32>
    %197 = tpu.iota {dimensions = array<i32: 0>} : vector<16x128xi32>
    %198 = tpu.iota {dimensions = array<i32: 1>} : vector<16x128xi32>
    %c16_i32 = arith.constant 16 : i32
    %199 = arith.muli %arg1, %c16_i32 : i32
    %200 = vector.broadcast %199 : i32 to vector<16x128xi32>
    %201 = arith.addi %197, %200 : vector<16x128xi32>
    %c128_i32 = arith.constant 128 : i32
    %202 = vector.broadcast %c128_i32 : i32 to vector<16x128xi32>
    %203 = arith.muli %201, %202 : vector<16x128xi32>
    %204 = arith.addi %203, %198 : vector<16x128xi32>
    %c256_i32 = arith.constant 256 : i32
    %205 = vector.broadcast %c256_i32 : i32 to vector<16x128xi32>
    %206 = arith.cmpi slt, %204, %205 : vector<16x128xi32>
    %cst_119 = arith.constant 0.000000e+00 : f32
    %207 = vector.broadcast %cst_119 : f32 to vector<16x128xf32>
    %208 = arith.select %206, %196, %207 : vector<16x128xi1>, vector<16x128xf32>
    %c0_120 = arith.constant 0 : index
    %c8 = arith.constant 8 : index
    %c0_121 = arith.constant 0 : index
    %c0_122 = arith.constant 0 : index
    %209 = vector.load %arg7[%c0_120, %c8, %c0_121, %c0_122] : memref<1x73x8x128xf32, #tpu.memory_space<vmem>>, vector<1x1x8x128xf32>
    %210 = vector.shape_cast %209 : vector<1x1x8x128xf32> to vector<8x128xf32>
    %211 = vector.extract_strided_slice %208 {offsets = [0, 0], sizes = [8, 128], strides = [1, 1]} : vector<16x128xf32> to vector<8x128xf32>
    %212 = vector.extract_strided_slice %208 {offsets = [8, 0], sizes = [8, 128], strides = [1, 1]} : vector<16x128xf32> to vector<8x128xf32>
    %213 = arith.addf %211, %212 : vector<8x128xf32>
    %214 = arith.addf %210, %213 : vector<8x128xf32>
    %c0_123 = arith.constant 0 : index
    %c8_124 = arith.constant 8 : index
    %c0_125 = arith.constant 0 : index
    %c0_126 = arith.constant 0 : index
    %215 = vector.load %arg7[%c0_123, %c8_124, %c0_125, %c0_126] : memref<1x73x8x128xf32, #tpu.memory_space<vmem>>, vector<1x1x8x128xf32>
    %216 = vector.shape_cast %215 : vector<1x1x8x128xf32> to vector<8x128xf32>
    %217 = vector.shape_cast %214 : vector<8x128xf32> to vector<1x1x8x128xf32>
    tpu.vector_store %arg7[%c0_123, %c8_124, %c0_125, %c0_126], %217 {strides = array<i32>} : memref<1x73x8x128xf32, #tpu.memory_space<vmem>>, vector<1x1x8x128xf32>,
    %cst_127 = arith.constant 0.000000e+00 : f32
    %218 = vector.broadcast %cst_127 : f32 to vector<8x128xf32>
    %cst_128 = arith.constant 0.000000e+00 : f32
    %219 = vector.broadcast %cst_128 : f32 to vector<8x128xf32>
    %220 = vector.extract_strided_slice %59 {offsets = [0, 0], sizes = [8, 128], strides = [1, 1]} : vector<16x128xf32> to vector<8x128xf32>
    %cst_129 = arith.constant 1.000000e-03 : f32
    %221 = vector.broadcast %cst_129 : f32 to vector<8x128xf32>
    %222 = arith.subf %220, %221 : vector<8x128xf32>
    %cst_130 = arith.constant 0.000000e+00 : f32
    %223 = vector.broadcast %cst_130 : f32 to vector<8x128xf32>
    %224 = arith.cmpf ogt, %222, %223 : vector<8x128xf32>
    %225 = arith.extui %224 : vector<8x128xi1> to vector<8x128xi32>
    %226 = arith.sitofp %225 : vector<8x128xi32> to vector<8x128xf32>
    %227 = arith.addf %218, %226 : vector<8x128xf32>
    %228 = arith.mulf %226, %222 : vector<8x128xf32>
    %229 = arith.addf %219, %228 : vector<8x128xf32>
    %230 = vector.extract_strided_slice %59 {offsets = [8, 0], sizes = [8, 128], strides = [1, 1]} : vector<16x128xf32> to vector<8x128xf32>
    %cst_131 = arith.constant 1.000000e-03 : f32
    %231 = vector.broadcast %cst_131 : f32 to vector<8x128xf32>
    %232 = arith.subf %230, %231 : vector<8x128xf32>
    %cst_132 = arith.constant 0.000000e+00 : f32
    %233 = vector.broadcast %cst_132 : f32 to vector<8x128xf32>
    %234 = arith.cmpf ogt, %232, %233 : vector<8x128xf32>
    %235 = arith.extui %234 : vector<8x128xi1> to vector<8x128xi32>
    %236 = arith.sitofp %235 : vector<8x128xi32> to vector<8x128xf32>
    %237 = arith.addf %227, %236 : vector<8x128xf32>
    %238 = arith.mulf %236, %232 : vector<8x128xf32>
    %239 = arith.addf %229, %238 : vector<8x128xf32>
    %c0_133 = arith.constant 0 : index
    %c9 = arith.constant 9 : index
    %c0_134 = arith.constant 0 : index
    %c0_135 = arith.constant 0 : index
    %240 = vector.load %arg7[%c0_133, %c9, %c0_134, %c0_135] : memref<1x73x8x128xf32, #tpu.memory_space<vmem>>, vector<1x1x8x128xf32>
    %241 = vector.shape_cast %240 : vector<1x1x8x128xf32> to vector<8x128xf32>
    %242 = arith.addf %241, %237 : vector<8x128xf32>
    %c0_136 = arith.constant 0 : index
    %c9_137 = arith.constant 9 : index
    %c0_138 = arith.constant 0 : index
    %c0_139 = arith.constant 0 : index
    %243 = vector.load %arg7[%c0_136, %c9_137, %c0_138, %c0_139] : memref<1x73x8x128xf32, #tpu.memory_space<vmem>>, vector<1x1x8x128xf32>
    %244 = vector.shape_cast %243 : vector<1x1x8x128xf32> to vector<8x128xf32>
    %245 = vector.shape_cast %242 : vector<8x128xf32> to vector<1x1x8x128xf32>
    tpu.vector_store %arg7[%c0_136, %c9_137, %c0_138, %c0_139], %245 {strides = array<i32>} : memref<1x73x8x128xf32, #tpu.memory_space<vmem>>, vector<1x1x8x128xf32>,
    %c0_140 = arith.constant 0 : index
    %c41 = arith.constant 41 : index
    %c0_141 = arith.constant 0 : index
    %c0_142 = arith.constant 0 : index
    %246 = vector.load %arg7[%c0_140, %c41, %c0_141, %c0_142] : memref<1x73x8x128xf32, #tpu.memory_space<vmem>>, vector<1x1x8x128xf32>
    %247 = vector.shape_cast %246 : vector<1x1x8x128xf32> to vector<8x128xf32>
    %248 = arith.addf %247, %239 : vector<8x128xf32>
    %c0_143 = arith.constant 0 : index
    %c41_144 = arith.constant 41 : index
    %c0_145 = arith.constant 0 : index
    %c0_146 = arith.constant 0 : index
    %249 = vector.load %arg7[%c0_143, %c41_144, %c0_145, %c0_146] : memref<1x73x8x128xf32, #tpu.memory_space<vmem>>, vector<1x1x8x128xf32>
    %250 = vector.shape_cast %249 : vector<1x1x8x128xf32> to vector<8x128xf32>
    %251 = vector.shape_cast %248 : vector<8x128xf32> to vector<1x1x8x128xf32>
    tpu.vector_store %arg7[%c0_143, %c41_144, %c0_145, %c0_146], %251 {strides = array<i32>} : memref<1x73x8x128xf32, #tpu.memory_space<vmem>>, vector<1x1x8x128xf32>,
    %cst_147 = arith.constant 0.000000e+00 : f32
    %252 = vector.broadcast %cst_147 : f32 to vector<8x128xf32>
    %cst_148 = arith.constant 0.000000e+00 : f32
    %253 = vector.broadcast %cst_148 : f32 to vector<8x128xf32>
    %254 = vector.extract_strided_slice %59 {offsets = [0, 0], sizes = [8, 128], strides = [1, 1]} : vector<16x128xf32> to vector<8x128xf32>
    %cst_149 = arith.constant 0.00144974072 : f32
    %255 = vector.broadcast %cst_149 : f32 to vector<8x128xf32>
    %256 = arith.subf %254, %255 : vector<8x128xf32>
    %cst_150 = arith.constant 0.000000e+00 : f32
    %257 = vector.broadcast %cst_150 : f32 to vector<8x128xf32>
    %258 = arith.cmpf ogt, %256, %257 : vector<8x128xf32>
    %259 = arith.extui %258 : vector<8x128xi1> to vector<8x128xi32>
    %260 = arith.sitofp %259 : vector<8x128xi32> to vector<8x128xf32>
    %261 = arith.addf %252, %260 : vector<8x128xf32>
    %262 = arith.mulf %260, %256 : vector<8x128xf32>
    %263 = arith.addf %253, %262 : vector<8x128xf32>
    %264 = vector.extract_strided_slice %59 {offsets = [8, 0], sizes = [8, 128], strides = [1, 1]} : vector<16x128xf32> to vector<8x128xf32>
    %cst_151 = arith.constant 0.00144974072 : f32
    %265 = vector.broadcast %cst_151 : f32 to vector<8x128xf32>
    %266 = arith.subf %264, %265 : vector<8x128xf32>
    %cst_152 = arith.constant 0.000000e+00 : f32
    %267 = vector.broadcast %cst_152 : f32 to vector<8x128xf32>
    %268 = arith.cmpf ogt, %266, %267 : vector<8x128xf32>
    %269 = arith.extui %268 : vector<8x128xi1> to vector<8x128xi32>
    %270 = arith.sitofp %269 : vector<8x128xi32> to vector<8x128xf32>
    %271 = arith.addf %261, %270 : vector<8x128xf32>
    %272 = arith.mulf %270, %266 : vector<8x128xf32>
    %273 = arith.addf %263, %272 : vector<8x128xf32>
    %c0_153 = arith.constant 0 : index
    %c10 = arith.constant 10 : index
    %c0_154 = arith.constant 0 : index
    %c0_155 = arith.constant 0 : index
    %274 = vector.load %arg7[%c0_153, %c10, %c0_154, %c0_155] : memref<1x73x8x128xf32, #tpu.memory_space<vmem>>, vector<1x1x8x128xf32>
    %275 = vector.shape_cast %274 : vector<1x1x8x128xf32> to vector<8x128xf32>
    %276 = arith.addf %275, %271 : vector<8x128xf32>
    %c0_156 = arith.constant 0 : index
    %c10_157 = arith.constant 10 : index
    %c0_158 = arith.constant 0 : index
    %c0_159 = arith.constant 0 : index
    %277 = vector.load %arg7[%c0_156, %c10_157, %c0_158, %c0_159] : memref<1x73x8x128xf32, #tpu.memory_space<vmem>>, vector<1x1x8x128xf32>
    %278 = vector.shape_cast %277 : vector<1x1x8x128xf32> to vector<8x128xf32>
    %279 = vector.shape_cast %276 : vector<8x128xf32> to vector<1x1x8x128xf32>
    tpu.vector_store %arg7[%c0_156, %c10_157, %c0_158, %c0_159], %279 {strides = array<i32>} : memref<1x73x8x128xf32, #tpu.memory_space<vmem>>, vector<1x1x8x128xf32>,
    %c0_160 = arith.constant 0 : index
    %c42 = arith.constant 42 : index
    %c0_161 = arith.constant 0 : index
    %c0_162 = arith.constant 0 : index
    %280 = vector.load %arg7[%c0_160, %c42, %c0_161, %c0_162] : memref<1x73x8x128xf32, #tpu.memory_space<vmem>>, vector<1x1x8x128xf32>
    %281 = vector.shape_cast %280 : vector<1x1x8x128xf32> to vector<8x128xf32>
    %282 = arith.addf %281, %273 : vector<8x128xf32>
    %c0_163 = arith.constant 0 : index
    %c42_164 = arith.constant 42 : index
    %c0_165 = arith.constant 0 : index
    %c0_166 = arith.constant 0 : index
    %283 = vector.load %arg7[%c0_163, %c42_164, %c0_165, %c0_166] : memref<1x73x8x128xf32, #tpu.memory_space<vmem>>, vector<1x1x8x128xf32>
    %284 = vector.shape_cast %283 : vector<1x1x8x128xf32> to vector<8x128xf32>
    %285 = vector.shape_cast %282 : vector<8x128xf32> to vector<1x1x8x128xf32>
    tpu.vector_store %arg7[%c0_163, %c42_164, %c0_165, %c0_166], %285 {strides = array<i32>} : memref<1x73x8x128xf32, #tpu.memory_space<vmem>>, vector<1x1x8x128xf32>,
    %cst_167 = arith.constant 0.000000e+00 : f32
    %286 = vector.broadcast %cst_167 : f32 to vector<8x128xf32>
    %cst_168 = arith.constant 0.000000e+00 : f32
    %287 = vector.broadcast %cst_168 : f32 to vector<8x128xf32>
    %288 = vector.extract_strided_slice %59 {offsets = [0, 0], sizes = [8, 128], strides = [1, 1]} : vector<16x128xf32> to vector<8x128xf32>
    %cst_169 = arith.constant 0.00210174802 : f32
    %289 = vector.broadcast %cst_169 : f32 to vector<8x128xf32>
    %290 = arith.subf %288, %289 : vector<8x128xf32>
    %cst_170 = arith.constant 0.000000e+00 : f32
    %291 = vector.broadcast %cst_170 : f32 to vector<8x128xf32>
    %292 = arith.cmpf ogt, %290, %291 : vector<8x128xf32>
    %293 = arith.extui %292 : vector<8x128xi1> to vector<8x128xi32>
    %294 = arith.sitofp %293 : vector<8x128xi32> to vector<8x128xf32>
    %295 = arith.addf %286, %294 : vector<8x128xf32>
    %296 = arith.mulf %294, %290 : vector<8x128xf32>
    %297 = arith.addf %287, %296 : vector<8x128xf32>
    %298 = vector.extract_strided_slice %59 {offsets = [8, 0], sizes = [8, 128], strides = [1, 1]} : vector<16x128xf32> to vector<8x128xf32>
    %cst_171 = arith.constant 0.00210174802 : f32
    %299 = vector.broadcast %cst_171 : f32 to vector<8x128xf32>
    %300 = arith.subf %298, %299 : vector<8x128xf32>
    %cst_172 = arith.constant 0.000000e+00 : f32
    %301 = vector.broadcast %cst_172 : f32 to vector<8x128xf32>
    %302 = arith.cmpf ogt, %300, %301 : vector<8x128xf32>
    %303 = arith.extui %302 : vector<8x128xi1> to vector<8x128xi32>
    %304 = arith.sitofp %303 : vector<8x128xi32> to vector<8x128xf32>
    %305 = arith.addf %295, %304 : vector<8x128xf32>
    %306 = arith.mulf %304, %300 : vector<8x128xf32>
    %307 = arith.addf %297, %306 : vector<8x128xf32>
    %c0_173 = arith.constant 0 : index
    %c11 = arith.constant 11 : index
    %c0_174 = arith.constant 0 : index
    %c0_175 = arith.constant 0 : index
    %308 = vector.load %arg7[%c0_173, %c11, %c0_174, %c0_175] : memref<1x73x8x128xf32, #tpu.memory_space<vmem>>, vector<1x1x8x128xf32>
    %309 = vector.shape_cast %308 : vector<1x1x8x128xf32> to vector<8x128xf32>
    %310 = arith.addf %309, %305 : vector<8x128xf32>
    %c0_176 = arith.constant 0 : index
    %c11_177 = arith.constant 11 : index
    %c0_178 = arith.constant 0 : index
    %c0_179 = arith.constant 0 : index
    %311 = vector.load %arg7[%c0_176, %c11_177, %c0_178, %c0_179] : memref<1x73x8x128xf32, #tpu.memory_space<vmem>>, vector<1x1x8x128xf32>
    %312 = vector.shape_cast %311 : vector<1x1x8x128xf32> to vector<8x128xf32>
    %313 = vector.shape_cast %310 : vector<8x128xf32> to vector<1x1x8x128xf32>
    tpu.vector_store %arg7[%c0_176, %c11_177, %c0_178, %c0_179], %313 {strides = array<i32>} : memref<1x73x8x128xf32, #tpu.memory_space<vmem>>, vector<1x1x8x128xf32>,
    %c0_180 = arith.constant 0 : index
    %c43 = arith.constant 43 : index
    %c0_181 = arith.constant 0 : index
    %c0_182 = arith.constant 0 : index
    %314 = vector.load %arg7[%c0_180, %c43, %c0_181, %c0_182] : memref<1x73x8x128xf32, #tpu.memory_space<vmem>>, vector<1x1x8x128xf32>
    %315 = vector.shape_cast %314 : vector<1x1x8x128xf32> to vector<8x128xf32>
    %316 = arith.addf %315, %307 : vector<8x128xf32>
    %c0_183 = arith.constant 0 : index
    %c43_184 = arith.constant 43 : index
    %c0_185 = arith.constant 0 : index
    %c0_186 = arith.constant 0 : index
    %317 = vector.load %arg7[%c0_183, %c43_184, %c0_185, %c0_186] : memref<1x73x8x128xf32, #tpu.memory_space<vmem>>, vector<1x1x8x128xf32>
    %318 = vector.shape_cast %317 : vector<1x1x8x128xf32> to vector<8x128xf32>
    %319 = vector.shape_cast %316 : vector<8x128xf32> to vector<1x1x8x128xf32>
    tpu.vector_store %arg7[%c0_183, %c43_184, %c0_185, %c0_186], %319 {strides = array<i32>} : memref<1x73x8x128xf32, #tpu.memory_space<vmem>>, vector<1x1x8x128xf32>,
    %cst_187 = arith.constant 0.000000e+00 : f32
    %320 = vector.broadcast %cst_187 : f32 to vector<8x128xf32>
    %cst_188 = arith.constant 0.000000e+00 : f32
    %321 = vector.broadcast %cst_188 : f32 to vector<8x128xf32>
    %322 = vector.extract_strided_slice %59 {offsets = [0, 0], sizes = [8, 128], strides = [1, 1]} : vector<16x128xf32> to vector<8x128xf32>
    %cst_189 = arith.constant 0.00304698967 : f32
    %323 = vector.broadcast %cst_189 : f32 to vector<8x128xf32>
    %324 = arith.subf %322, %323 : vector<8x128xf32>
    %cst_190 = arith.constant 0.000000e+00 : f32
    %325 = vector.broadcast %cst_190 : f32 to vector<8x128xf32>
    %326 = arith.cmpf ogt, %324, %325 : vector<8x128xf32>
    %327 = arith.extui %326 : vector<8x128xi1> to vector<8x128xi32>
    %328 = arith.sitofp %327 : vector<8x128xi32> to vector<8x128xf32>
    %329 = arith.addf %320, %328 : vector<8x128xf32>
    %330 = arith.mulf %328, %324 : vector<8x128xf32>
    %331 = arith.addf %321, %330 : vector<8x128xf32>
    %332 = vector.extract_strided_slice %59 {offsets = [8, 0], sizes = [8, 128], strides = [1, 1]} : vector<16x128xf32> to vector<8x128xf32>
    %cst_191 = arith.constant 0.00304698967 : f32
    %333 = vector.broadcast %cst_191 : f32 to vector<8x128xf32>
    %334 = arith.subf %332, %333 : vector<8x128xf32>
    %cst_192 = arith.constant 0.000000e+00 : f32
    %335 = vector.broadcast %cst_192 : f32 to vector<8x128xf32>
    %336 = arith.cmpf ogt, %334, %335 : vector<8x128xf32>
    %337 = arith.extui %336 : vector<8x128xi1> to vector<8x128xi32>
    %338 = arith.sitofp %337 : vector<8x128xi32> to vector<8x128xf32>
    %339 = arith.addf %329, %338 : vector<8x128xf32>
    %340 = arith.mulf %338, %334 : vector<8x128xf32>
    %341 = arith.addf %331, %340 : vector<8x128xf32>
    %c0_193 = arith.constant 0 : index
    %c12 = arith.constant 12 : index
    %c0_194 = arith.constant 0 : index
    %c0_195 = arith.constant 0 : index
    %342 = vector.load %arg7[%c0_193, %c12, %c0_194, %c0_195] : memref<1x73x8x128xf32, #tpu.memory_space<vmem>>, vector<1x1x8x128xf32>
    %343 = vector.shape_cast %342 : vector<1x1x8x128xf32> to vector<8x128xf32>
    %344 = arith.addf %343, %339 : vector<8x128xf32>
    %c0_196 = arith.constant 0 : index
    %c12_197 = arith.constant 12 : index
    %c0_198 = arith.constant 0 : index
    %c0_199 = arith.constant 0 : index
    %345 = vector.load %arg7[%c0_196, %c12_197, %c0_198, %c0_199] : memref<1x73x8x128xf32, #tpu.memory_space<vmem>>, vector<1x1x8x128xf32>
    %346 = vector.shape_cast %345 : vector<1x1x8x128xf32> to vector<8x128xf32>
    %347 = vector.shape_cast %344 : vector<8x128xf32> to vector<1x1x8x128xf32>
    tpu.vector_store %arg7[%c0_196, %c12_197, %c0_198, %c0_199], %347 {strides = array<i32>} : memref<1x73x8x128xf32, #tpu.memory_space<vmem>>, vector<1x1x8x128xf32>,
    %c0_200 = arith.constant 0 : index
    %c44 = arith.constant 44 : index
    %c0_201 = arith.constant 0 : index
    %c0_202 = arith.constant 0 : index
    %348 = vector.load %arg7[%c0_200, %c44, %c0_201, %c0_202] : memref<1x73x8x128xf32, #tpu.memory_space<vmem>>, vector<1x1x8x128xf32>
    %349 = vector.shape_cast %348 : vector<1x1x8x128xf32> to vector<8x128xf32>
    %350 = arith.addf %349, %341 : vector<8x128xf32>
    %c0_203 = arith.constant 0 : index
    %c44_204 = arith.constant 44 : index
    %c0_205 = arith.constant 0 : index
    %c0_206 = arith.constant 0 : index
    %351 = vector.load %arg7[%c0_203, %c44_204, %c0_205, %c0_206] : memref<1x73x8x128xf32, #tpu.memory_space<vmem>>, vector<1x1x8x128xf32>
    %352 = vector.shape_cast %351 : vector<1x1x8x128xf32> to vector<8x128xf32>
    %353 = vector.shape_cast %350 : vector<8x128xf32> to vector<1x1x8x128xf32>
    tpu.vector_store %arg7[%c0_203, %c44_204, %c0_205, %c0_206], %353 {strides = array<i32>} : memref<1x73x8x128xf32, #tpu.memory_space<vmem>>, vector<1x1x8x128xf32>,
    %cst_207 = arith.constant 0.000000e+00 : f32
    %354 = vector.broadcast %cst_207 : f32 to vector<8x128xf32>
    %cst_208 = arith.constant 0.000000e+00 : f32
    %355 = vector.broadcast %cst_208 : f32 to vector<8x128xf32>
    %356 = vector.extract_strided_slice %59 {offsets = [0, 0], sizes = [8, 128], strides = [1, 1]} : vector<16x128xf32> to vector<8x128xf32>
    %cst_209 = arith.constant 0.00441734493 : f32
    %357 = vector.broadcast %cst_209 : f32 to vector<8x128xf32>
    %358 = arith.subf %356, %357 : vector<8x128xf32>
    %cst_210 = arith.constant 0.000000e+00 : f32
    %359 = vector.broadcast %cst_210 : f32 to vector<8x128xf32>
    %360 = arith.cmpf ogt, %358, %359 : vector<8x128xf32>
    %361 = arith.extui %360 : vector<8x128xi1> to vector<8x128xi32>
    %362 = arith.sitofp %361 : vector<8x128xi32> to vector<8x128xf32>
    %363 = arith.addf %354, %362 : vector<8x128xf32>
    %364 = arith.mulf %362, %358 : vector<8x128xf32>
    %365 = arith.addf %355, %364 : vector<8x128xf32>
    %366 = vector.extract_strided_slice %59 {offsets = [8, 0], sizes = [8, 128], strides = [1, 1]} : vector<16x128xf32> to vector<8x128xf32>
    %cst_211 = arith.constant 0.00441734493 : f32
    %367 = vector.broadcast %cst_211 : f32 to vector<8x128xf32>
    %368 = arith.subf %366, %367 : vector<8x128xf32>
    %cst_212 = arith.constant 0.000000e+00 : f32
    %369 = vector.broadcast %cst_212 : f32 to vector<8x128xf32>
    %370 = arith.cmpf ogt, %368, %369 : vector<8x128xf32>
    %371 = arith.extui %370 : vector<8x128xi1> to vector<8x128xi32>
    %372 = arith.sitofp %371 : vector<8x128xi32> to vector<8x128xf32>
    %373 = arith.addf %363, %372 : vector<8x128xf32>
    %374 = arith.mulf %372, %368 : vector<8x128xf32>
    %375 = arith.addf %365, %374 : vector<8x128xf32>
    %c0_213 = arith.constant 0 : index
    %c13 = arith.constant 13 : index
    %c0_214 = arith.constant 0 : index
    %c0_215 = arith.constant 0 : index
    %376 = vector.load %arg7[%c0_213, %c13, %c0_214, %c0_215] : memref<1x73x8x128xf32, #tpu.memory_space<vmem>>, vector<1x1x8x128xf32>
    %377 = vector.shape_cast %376 : vector<1x1x8x128xf32> to vector<8x128xf32>
    %378 = arith.addf %377, %373 : vector<8x128xf32>
    %c0_216 = arith.constant 0 : index
    %c13_217 = arith.constant 13 : index
    %c0_218 = arith.constant 0 : index
    %c0_219 = arith.constant 0 : index
    %379 = vector.load %arg7[%c0_216, %c13_217, %c0_218, %c0_219] : memref<1x73x8x128xf32, #tpu.memory_space<vmem>>, vector<1x1x8x128xf32>
    %380 = vector.shape_cast %379 : vector<1x1x8x128xf32> to vector<8x128xf32>
    %381 = vector.shape_cast %378 : vector<8x128xf32> to vector<1x1x8x128xf32>
    tpu.vector_store %arg7[%c0_216, %c13_217, %c0_218, %c0_219], %381 {strides = array<i32>} : memref<1x73x8x128xf32, #tpu.memory_space<vmem>>, vector<1x1x8x128xf32>,
    %c0_220 = arith.constant 0 : index
    %c45 = arith.constant 45 : index
    %c0_221 = arith.constant 0 : index
    %c0_222 = arith.constant 0 : index
    %382 = vector.load %arg7[%c0_220, %c45, %c0_221, %c0_222] : memref<1x73x8x128xf32, #tpu.memory_space<vmem>>, vector<1x1x8x128xf32>
    %383 = vector.shape_cast %382 : vector<1x1x8x128xf32> to vector<8x128xf32>
    %384 = arith.addf %383, %375 : vector<8x128xf32>
    %c0_223 = arith.constant 0 : index
    %c45_224 = arith.constant 45 : index
    %c0_225 = arith.constant 0 : index
    %c0_226 = arith.constant 0 : index
    %385 = vector.load %arg7[%c0_223, %c45_224, %c0_225, %c0_226] : memref<1x73x8x128xf32, #tpu.memory_space<vmem>>, vector<1x1x8x128xf32>
    %386 = vector.shape_cast %385 : vector<1x1x8x128xf32> to vector<8x128xf32>
    %387 = vector.shape_cast %384 : vector<8x128xf32> to vector<1x1x8x128xf32>
    tpu.vector_store %arg7[%c0_223, %c45_224, %c0_225, %c0_226], %387 {strides = array<i32>} : memref<1x73x8x128xf32, #tpu.memory_space<vmem>>, vector<1x1x8x128xf32>,
    %cst_227 = arith.constant 0.000000e+00 : f32
    %388 = vector.broadcast %cst_227 : f32 to vector<8x128xf32>
    %cst_228 = arith.constant 0.000000e+00 : f32
    %389 = vector.broadcast %cst_228 : f32 to vector<8x128xf32>
    %390 = vector.extract_strided_slice %59 {offsets = [0, 0], sizes = [8, 128], strides = [1, 1]} : vector<16x128xf32> to vector<8x128xf32>
    %cst_229 = arith.constant 0.00640400406 : f32
    %391 = vector.broadcast %cst_229 : f32 to vector<8x128xf32>
    %392 = arith.subf %390, %391 : vector<8x128xf32>
    %cst_230 = arith.constant 0.000000e+00 : f32
    %393 = vector.broadcast %cst_230 : f32 to vector<8x128xf32>
    %394 = arith.cmpf ogt, %392, %393 : vector<8x128xf32>
    %395 = arith.extui %394 : vector<8x128xi1> to vector<8x128xi32>
    %396 = arith.sitofp %395 : vector<8x128xi32> to vector<8x128xf32>
    %397 = arith.addf %388, %396 : vector<8x128xf32>
    %398 = arith.mulf %396, %392 : vector<8x128xf32>
    %399 = arith.addf %389, %398 : vector<8x128xf32>
    %400 = vector.extract_strided_slice %59 {offsets = [8, 0], sizes = [8, 128], strides = [1, 1]} : vector<16x128xf32> to vector<8x128xf32>
    %cst_231 = arith.constant 0.00640400406 : f32
    %401 = vector.broadcast %cst_231 : f32 to vector<8x128xf32>
    %402 = arith.subf %400, %401 : vector<8x128xf32>
    %cst_232 = arith.constant 0.000000e+00 : f32
    %403 = vector.broadcast %cst_232 : f32 to vector<8x128xf32>
    %404 = arith.cmpf ogt, %402, %403 : vector<8x128xf32>
    %405 = arith.extui %404 : vector<8x128xi1> to vector<8x128xi32>
    %406 = arith.sitofp %405 : vector<8x128xi32> to vector<8x128xf32>
    %407 = arith.addf %397, %406 : vector<8x128xf32>
    %408 = arith.mulf %406, %402 : vector<8x128xf32>
    %409 = arith.addf %399, %408 : vector<8x128xf32>
    %c0_233 = arith.constant 0 : index
    %c14 = arith.constant 14 : index
    %c0_234 = arith.constant 0 : index
    %c0_235 = arith.constant 0 : index
    %410 = vector.load %arg7[%c0_233, %c14, %c0_234, %c0_235] : memref<1x73x8x128xf32, #tpu.memory_space<vmem>>, vector<1x1x8x128xf32>
    %411 = vector.shape_cast %410 : vector<1x1x8x128xf32> to vector<8x128xf32>
    %412 = arith.addf %411, %407 : vector<8x128xf32>
    %c0_236 = arith.constant 0 : index
    %c14_237 = arith.constant 14 : index
    %c0_238 = arith.constant 0 : index
    %c0_239 = arith.constant 0 : index
    %413 = vector.load %arg7[%c0_236, %c14_237, %c0_238, %c0_239] : memref<1x73x8x128xf32, #tpu.memory_space<vmem>>, vector<1x1x8x128xf32>
    %414 = vector.shape_cast %413 : vector<1x1x8x128xf32> to vector<8x128xf32>
    %415 = vector.shape_cast %412 : vector<8x128xf32> to vector<1x1x8x128xf32>
    tpu.vector_store %arg7[%c0_236, %c14_237, %c0_238, %c0_239], %415 {strides = array<i32>} : memref<1x73x8x128xf32, #tpu.memory_space<vmem>>, vector<1x1x8x128xf32>,
    %c0_240 = arith.constant 0 : index
    %c46 = arith.constant 46 : index
    %c0_241 = arith.constant 0 : index
    %c0_242 = arith.constant 0 : index
    %416 = vector.load %arg7[%c0_240, %c46, %c0_241, %c0_242] : memref<1x73x8x128xf32, #tpu.memory_space<vmem>>, vector<1x1x8x128xf32>
    %417 = vector.shape_cast %416 : vector<1x1x8x128xf32> to vector<8x128xf32>
    %418 = arith.addf %417, %409 : vector<8x128xf32>
    %c0_243 = arith.constant 0 : index
    %c46_244 = arith.constant 46 : index
    %c0_245 = arith.constant 0 : index
    %c0_246 = arith.constant 0 : index
    %419 = vector.load %arg7[%c0_243, %c46_244, %c0_245, %c0_246] : memref<1x73x8x128xf32, #tpu.memory_space<vmem>>, vector<1x1x8x128xf32>
    %420 = vector.shape_cast %419 : vector<1x1x8x128xf32> to vector<8x128xf32>
    %421 = vector.shape_cast %418 : vector<8x128xf32> to vector<1x1x8x128xf32>
    tpu.vector_store %arg7[%c0_243, %c46_244, %c0_245, %c0_246], %421 {strides = array<i32>} : memref<1x73x8x128xf32, #tpu.memory_space<vmem>>, vector<1x1x8x128xf32>,
    %cst_247 = arith.constant 0.000000e+00 : f32
    %422 = vector.broadcast %cst_247 : f32 to vector<8x128xf32>
    %cst_248 = arith.constant 0.000000e+00 : f32
    %423 = vector.broadcast %cst_248 : f32 to vector<8x128xf32>
    %424 = vector.extract_strided_slice %59 {offsets = [0, 0], sizes = [8, 128], strides = [1, 1]} : vector<16x128xf32> to vector<8x128xf32>
    %cst_249 = arith.constant 0.0092841452 : f32
    %425 = vector.broadcast %cst_249 : f32 to vector<8x128xf32>
    %426 = arith.subf %424, %425 : vector<8x128xf32>
    %cst_250 = arith.constant 0.000000e+00 : f32
    %427 = vector.broadcast %cst_250 : f32 to vector<8x128xf32>
    %428 = arith.cmpf ogt, %426, %427 : vector<8x128xf32>
    %429 = arith.extui %428 : vector<8x128xi1> to vector<8x128xi32>
    %430 = arith.sitofp %429 : vector<8x128xi32> to vector<8x128xf32>
    %431 = arith.addf %422, %430 : vector<8x128xf32>
    %432 = arith.mulf %430, %426 : vector<8x128xf32>
    %433 = arith.addf %423, %432 : vector<8x128xf32>
    %434 = vector.extract_strided_slice %59 {offsets = [8, 0], sizes = [8, 128], strides = [1, 1]} : vector<16x128xf32> to vector<8x128xf32>
    %cst_251 = arith.constant 0.0092841452 : f32
    %435 = vector.broadcast %cst_251 : f32 to vector<8x128xf32>
    %436 = arith.subf %434, %435 : vector<8x128xf32>
    %cst_252 = arith.constant 0.000000e+00 : f32
    %437 = vector.broadcast %cst_252 : f32 to vector<8x128xf32>
    %438 = arith.cmpf ogt, %436, %437 : vector<8x128xf32>
    %439 = arith.extui %438 : vector<8x128xi1> to vector<8x128xi32>
    %440 = arith.sitofp %439 : vector<8x128xi32> to vector<8x128xf32>
    %441 = arith.addf %431, %440 : vector<8x128xf32>
    %442 = arith.mulf %440, %436 : vector<8x128xf32>
    %443 = arith.addf %433, %442 : vector<8x128xf32>
    %c0_253 = arith.constant 0 : index
    %c15 = arith.constant 15 : index
    %c0_254 = arith.constant 0 : index
    %c0_255 = arith.constant 0 : index
    %444 = vector.load %arg7[%c0_253, %c15, %c0_254, %c0_255] : memref<1x73x8x128xf32, #tpu.memory_space<vmem>>, vector<1x1x8x128xf32>
    %445 = vector.shape_cast %444 : vector<1x1x8x128xf32> to vector<8x128xf32>
    %446 = arith.addf %445, %441 : vector<8x128xf32>
    %c0_256 = arith.constant 0 : index
    %c15_257 = arith.constant 15 : index
    %c0_258 = arith.constant 0 : index
    %c0_259 = arith.constant 0 : index
    %447 = vector.load %arg7[%c0_256, %c15_257, %c0_258, %c0_259] : memref<1x73x8x128xf32, #tpu.memory_space<vmem>>, vector<1x1x8x128xf32>
    %448 = vector.shape_cast %447 : vector<1x1x8x128xf32> to vector<8x128xf32>
    %449 = vector.shape_cast %446 : vector<8x128xf32> to vector<1x1x8x128xf32>
    tpu.vector_store %arg7[%c0_256, %c15_257, %c0_258, %c0_259], %449 {strides = array<i32>} : memref<1x73x8x128xf32, #tpu.memory_space<vmem>>, vector<1x1x8x128xf32>,
    %c0_260 = arith.constant 0 : index
    %c47 = arith.constant 47 : index
    %c0_261 = arith.constant 0 : index
    %c0_262 = arith.constant 0 : index
    %450 = vector.load %arg7[%c0_260, %c47, %c0_261, %c0_262] : memref<1x73x8x128xf32, #tpu.memory_space<vmem>>, vector<1x1x8x128xf32>
    %451 = vector.shape_cast %450 : vector<1x1x8x128xf32> to vector<8x128xf32>
    %452 = arith.addf %451, %443 : vector<8x128xf32>
    %c0_263 = arith.constant 0 : index
    %c47_264 = arith.constant 47 : index
    %c0_265 = arith.constant 0 : index
    %c0_266 = arith.constant 0 : index
    %453 = vector.load %arg7[%c0_263, %c47_264, %c0_265, %c0_266] : memref<1x73x8x128xf32, #tpu.memory_space<vmem>>, vector<1x1x8x128xf32>
    %454 = vector.shape_cast %453 : vector<1x1x8x128xf32> to vector<8x128xf32>
    %455 = vector.shape_cast %452 : vector<8x128xf32> to vector<1x1x8x128xf32>
    tpu.vector_store %arg7[%c0_263, %c47_264, %c0_265, %c0_266], %455 {strides = array<i32>} : memref<1x73x8x128xf32, #tpu.memory_space<vmem>>, vector<1x1x8x128xf32>,
    %cst_267 = arith.constant 0.000000e+00 : f32
    %456 = vector.broadcast %cst_267 : f32 to vector<8x128xf32>
    %cst_268 = arith.constant 0.000000e+00 : f32
    %457 = vector.broadcast %cst_268 : f32 to vector<8x128xf32>
    %458 = vector.extract_strided_slice %59 {offsets = [0, 0], sizes = [8, 128], strides = [1, 1]} : vector<16x128xf32> to vector<8x128xf32>
    %cst_269 = arith.constant 0.0134596033 : f32
    %459 = vector.broadcast %cst_269 : f32 to vector<8x128xf32>
    %460 = arith.subf %458, %459 : vector<8x128xf32>
    %cst_270 = arith.constant 0.000000e+00 : f32
    %461 = vector.broadcast %cst_270 : f32 to vector<8x128xf32>
    %462 = arith.cmpf ogt, %460, %461 : vector<8x128xf32>
    %463 = arith.extui %462 : vector<8x128xi1> to vector<8x128xi32>
    %464 = arith.sitofp %463 : vector<8x128xi32> to vector<8x128xf32>
    %465 = arith.addf %456, %464 : vector<8x128xf32>
    %466 = arith.mulf %464, %460 : vector<8x128xf32>
    %467 = arith.addf %457, %466 : vector<8x128xf32>
    %468 = vector.extract_strided_slice %59 {offsets = [8, 0], sizes = [8, 128], strides = [1, 1]} : vector<16x128xf32> to vector<8x128xf32>
    %cst_271 = arith.constant 0.0134596033 : f32
    %469 = vector.broadcast %cst_271 : f32 to vector<8x128xf32>
    %470 = arith.subf %468, %469 : vector<8x128xf32>
    %cst_272 = arith.constant 0.000000e+00 : f32
    %471 = vector.broadcast %cst_272 : f32 to vector<8x128xf32>
    %472 = arith.cmpf ogt, %470, %471 : vector<8x128xf32>
    %473 = arith.extui %472 : vector<8x128xi1> to vector<8x128xi32>
    %474 = arith.sitofp %473 : vector<8x128xi32> to vector<8x128xf32>
    %475 = arith.addf %465, %474 : vector<8x128xf32>
    %476 = arith.mulf %474, %470 : vector<8x128xf32>
    %477 = arith.addf %467, %476 : vector<8x128xf32>
    %c0_273 = arith.constant 0 : index
    %c16 = arith.constant 16 : index
    %c0_274 = arith.constant 0 : index
    %c0_275 = arith.constant 0 : index
    %478 = vector.load %arg7[%c0_273, %c16, %c0_274, %c0_275] : memref<1x73x8x128xf32, #tpu.memory_space<vmem>>, vector<1x1x8x128xf32>
    %479 = vector.shape_cast %478 : vector<1x1x8x128xf32> to vector<8x128xf32>
    %480 = arith.addf %479, %475 : vector<8x128xf32>
    %c0_276 = arith.constant 0 : index
    %c16_277 = arith.constant 16 : index
    %c0_278 = arith.constant 0 : index
    %c0_279 = arith.constant 0 : index
    %481 = vector.load %arg7[%c0_276, %c16_277, %c0_278, %c0_279] : memref<1x73x8x128xf32, #tpu.memory_space<vmem>>, vector<1x1x8x128xf32>
    %482 = vector.shape_cast %481 : vector<1x1x8x128xf32> to vector<8x128xf32>
    %483 = vector.shape_cast %480 : vector<8x128xf32> to vector<1x1x8x128xf32>
    tpu.vector_store %arg7[%c0_276, %c16_277, %c0_278, %c0_279], %483 {strides = array<i32>} : memref<1x73x8x128xf32, #tpu.memory_space<vmem>>, vector<1x1x8x128xf32>,
    %c0_280 = arith.constant 0 : index
    %c48 = arith.constant 48 : index
    %c0_281 = arith.constant 0 : index
    %c0_282 = arith.constant 0 : index
    %484 = vector.load %arg7[%c0_280, %c48, %c0_281, %c0_282] : memref<1x73x8x128xf32, #tpu.memory_space<vmem>>, vector<1x1x8x128xf32>
    %485 = vector.shape_cast %484 : vector<1x1x8x128xf32> to vector<8x128xf32>
    %486 = arith.addf %485, %477 : vector<8x128xf32>
    %c0_283 = arith.constant 0 : index
    %c48_284 = arith.constant 48 : index
    %c0_285 = arith.constant 0 : index
    %c0_286 = arith.constant 0 : index
    %487 = vector.load %arg7[%c0_283, %c48_284, %c0_285, %c0_286] : memref<1x73x8x128xf32, #tpu.memory_space<vmem>>, vector<1x1x8x128xf32>
    %488 = vector.shape_cast %487 : vector<1x1x8x128xf32> to vector<8x128xf32>
    %489 = vector.shape_cast %486 : vector<8x128xf32> to vector<1x1x8x128xf32>
    tpu.vector_store %arg7[%c0_283, %c48_284, %c0_285, %c0_286], %489 {strides = array<i32>} : memref<1x73x8x128xf32, #tpu.memory_space<vmem>>, vector<1x1x8x128xf32>,
    %cst_287 = arith.constant 0.000000e+00 : f32
    %490 = vector.broadcast %cst_287 : f32 to vector<8x128xf32>
    %cst_288 = arith.constant 0.000000e+00 : f32
    %491 = vector.broadcast %cst_288 : f32 to vector<8x128xf32>
    %492 = vector.extract_strided_slice %59 {offsets = [0, 0], sizes = [8, 128], strides = [1, 1]} : vector<16x128xf32> to vector<8x128xf32>
    %cst_289 = arith.constant 0.0195129346 : f32
    %493 = vector.broadcast %cst_289 : f32 to vector<8x128xf32>
    %494 = arith.subf %492, %493 : vector<8x128xf32>
    %cst_290 = arith.constant 0.000000e+00 : f32
    %495 = vector.broadcast %cst_290 : f32 to vector<8x128xf32>
    %496 = arith.cmpf ogt, %494, %495 : vector<8x128xf32>
    %497 = arith.extui %496 : vector<8x128xi1> to vector<8x128xi32>
    %498 = arith.sitofp %497 : vector<8x128xi32> to vector<8x128xf32>
    %499 = arith.addf %490, %498 : vector<8x128xf32>
    %500 = arith.mulf %498, %494 : vector<8x128xf32>
    %501 = arith.addf %491, %500 : vector<8x128xf32>
    %502 = vector.extract_strided_slice %59 {offsets = [8, 0], sizes = [8, 128], strides = [1, 1]} : vector<16x128xf32> to vector<8x128xf32>
    %cst_291 = arith.constant 0.0195129346 : f32
    %503 = vector.broadcast %cst_291 : f32 to vector<8x128xf32>
    %504 = arith.subf %502, %503 : vector<8x128xf32>
    %cst_292 = arith.constant 0.000000e+00 : f32
    %505 = vector.broadcast %cst_292 : f32 to vector<8x128xf32>
    %506 = arith.cmpf ogt, %504, %505 : vector<8x128xf32>
    %507 = arith.extui %506 : vector<8x128xi1> to vector<8x128xi32>
    %508 = arith.sitofp %507 : vector<8x128xi32> to vector<8x128xf32>
    %509 = arith.addf %499, %508 : vector<8x128xf32>
    %510 = arith.mulf %508, %504 : vector<8x128xf32>
    %511 = arith.addf %501, %510 : vector<8x128xf32>
    %c0_293 = arith.constant 0 : index
    %c17 = arith.constant 17 : index
    %c0_294 = arith.constant 0 : index
    %c0_295 = arith.constant 0 : index
    %512 = vector.load %arg7[%c0_293, %c17, %c0_294, %c0_295] : memref<1x73x8x128xf32, #tpu.memory_space<vmem>>, vector<1x1x8x128xf32>
    %513 = vector.shape_cast %512 : vector<1x1x8x128xf32> to vector<8x128xf32>
    %514 = arith.addf %513, %509 : vector<8x128xf32>
    %c0_296 = arith.constant 0 : index
    %c17_297 = arith.constant 17 : index
    %c0_298 = arith.constant 0 : index
    %c0_299 = arith.constant 0 : index
    %515 = vector.load %arg7[%c0_296, %c17_297, %c0_298, %c0_299] : memref<1x73x8x128xf32, #tpu.memory_space<vmem>>, vector<1x1x8x128xf32>
    %516 = vector.shape_cast %515 : vector<1x1x8x128xf32> to vector<8x128xf32>
    %517 = vector.shape_cast %514 : vector<8x128xf32> to vector<1x1x8x128xf32>
    tpu.vector_store %arg7[%c0_296, %c17_297, %c0_298, %c0_299], %517 {strides = array<i32>} : memref<1x73x8x128xf32, #tpu.memory_space<vmem>>, vector<1x1x8x128xf32>,
    %c0_300 = arith.constant 0 : index
    %c49 = arith.constant 49 : index
    %c0_301 = arith.constant 0 : index
    %c0_302 = arith.constant 0 : index
    %518 = vector.load %arg7[%c0_300, %c49, %c0_301, %c0_302] : memref<1x73x8x128xf32, #tpu.memory_space<vmem>>, vector<1x1x8x128xf32>
    %519 = vector.shape_cast %518 : vector<1x1x8x128xf32> to vector<8x128xf32>
    %520 = arith.addf %519, %511 : vector<8x128xf32>
    %c0_303 = arith.constant 0 : index
    %c49_304 = arith.constant 49 : index
    %c0_305 = arith.constant 0 : index
    %c0_306 = arith.constant 0 : index
    %521 = vector.load %arg7[%c0_303, %c49_304, %c0_305, %c0_306] : memref<1x73x8x128xf32, #tpu.memory_space<vmem>>, vector<1x1x8x128xf32>
    %522 = vector.shape_cast %521 : vector<1x1x8x128xf32> to vector<8x128xf32>
    %523 = vector.shape_cast %520 : vector<8x128xf32> to vector<1x1x8x128xf32>
    tpu.vector_store %arg7[%c0_303, %c49_304, %c0_305, %c0_306], %523 {strides = array<i32>} : memref<1x73x8x128xf32, #tpu.memory_space<vmem>>, vector<1x1x8x128xf32>,
    %cst_307 = arith.constant 0.000000e+00 : f32
    %524 = vector.broadcast %cst_307 : f32 to vector<8x128xf32>
    %cst_308 = arith.constant 0.000000e+00 : f32
    %525 = vector.broadcast %cst_308 : f32 to vector<8x128xf32>
    %526 = vector.extract_strided_slice %59 {offsets = [0, 0], sizes = [8, 128], strides = [1, 1]} : vector<16x128xf32> to vector<8x128xf32>
    %cst_309 = arith.constant 0.0282886941 : f32
    %527 = vector.broadcast %cst_309 : f32 to vector<8x128xf32>
    %528 = arith.subf %526, %527 : vector<8x128xf32>
    %cst_310 = arith.constant 0.000000e+00 : f32
    %529 = vector.broadcast %cst_310 : f32 to vector<8x128xf32>
    %530 = arith.cmpf ogt, %528, %529 : vector<8x128xf32>
    %531 = arith.extui %530 : vector<8x128xi1> to vector<8x128xi32>
    %532 = arith.sitofp %531 : vector<8x128xi32> to vector<8x128xf32>
    %533 = arith.addf %524, %532 : vector<8x128xf32>
    %534 = arith.mulf %532, %528 : vector<8x128xf32>
    %535 = arith.addf %525, %534 : vector<8x128xf32>
    %536 = vector.extract_strided_slice %59 {offsets = [8, 0], sizes = [8, 128], strides = [1, 1]} : vector<16x128xf32> to vector<8x128xf32>
    %cst_311 = arith.constant 0.0282886941 : f32
    %537 = vector.broadcast %cst_311 : f32 to vector<8x128xf32>
    %538 = arith.subf %536, %537 : vector<8x128xf32>
    %cst_312 = arith.constant 0.000000e+00 : f32
    %539 = vector.broadcast %cst_312 : f32 to vector<8x128xf32>
    %540 = arith.cmpf ogt, %538, %539 : vector<8x128xf32>
    %541 = arith.extui %540 : vector<8x128xi1> to vector<8x128xi32>
    %542 = arith.sitofp %541 : vector<8x128xi32> to vector<8x128xf32>
    %543 = arith.addf %533, %542 : vector<8x128xf32>
    %544 = arith.mulf %542, %538 : vector<8x128xf32>
    %545 = arith.addf %535, %544 : vector<8x128xf32>
    %c0_313 = arith.constant 0 : index
    %c18 = arith.constant 18 : index
    %c0_314 = arith.constant 0 : index
    %c0_315 = arith.constant 0 : index
    %546 = vector.load %arg7[%c0_313, %c18, %c0_314, %c0_315] : memref<1x73x8x128xf32, #tpu.memory_space<vmem>>, vector<1x1x8x128xf32>
    %547 = vector.shape_cast %546 : vector<1x1x8x128xf32> to vector<8x128xf32>
    %548 = arith.addf %547, %543 : vector<8x128xf32>
    %c0_316 = arith.constant 0 : index
    %c18_317 = arith.constant 18 : index
    %c0_318 = arith.constant 0 : index
    %c0_319 = arith.constant 0 : index
    %549 = vector.load %arg7[%c0_316, %c18_317, %c0_318, %c0_319] : memref<1x73x8x128xf32, #tpu.memory_space<vmem>>, vector<1x1x8x128xf32>
    %550 = vector.shape_cast %549 : vector<1x1x8x128xf32> to vector<8x128xf32>
    %551 = vector.shape_cast %548 : vector<8x128xf32> to vector<1x1x8x128xf32>
    tpu.vector_store %arg7[%c0_316, %c18_317, %c0_318, %c0_319], %551 {strides = array<i32>} : memref<1x73x8x128xf32, #tpu.memory_space<vmem>>, vector<1x1x8x128xf32>,
    %c0_320 = arith.constant 0 : index
    %c50 = arith.constant 50 : index
    %c0_321 = arith.constant 0 : index
    %c0_322 = arith.constant 0 : index
    %552 = vector.load %arg7[%c0_320, %c50, %c0_321, %c0_322] : memref<1x73x8x128xf32, #tpu.memory_space<vmem>>, vector<1x1x8x128xf32>
    %553 = vector.shape_cast %552 : vector<1x1x8x128xf32> to vector<8x128xf32>
    %554 = arith.addf %553, %545 : vector<8x128xf32>
    %c0_323 = arith.constant 0 : index
    %c50_324 = arith.constant 50 : index
    %c0_325 = arith.constant 0 : index
    %c0_326 = arith.constant 0 : index
    %555 = vector.load %arg7[%c0_323, %c50_324, %c0_325, %c0_326] : memref<1x73x8x128xf32, #tpu.memory_space<vmem>>, vector<1x1x8x128xf32>
    %556 = vector.shape_cast %555 : vector<1x1x8x128xf32> to vector<8x128xf32>
    %557 = vector.shape_cast %554 : vector<8x128xf32> to vector<1x1x8x128xf32>
    tpu.vector_store %arg7[%c0_323, %c50_324, %c0_325, %c0_326], %557 {strides = array<i32>} : memref<1x73x8x128xf32, #tpu.memory_space<vmem>>, vector<1x1x8x128xf32>,
    %cst_327 = arith.constant 0.000000e+00 : f32
    %558 = vector.broadcast %cst_327 : f32 to vector<8x128xf32>
    %cst_328 = arith.constant 0.000000e+00 : f32
    %559 = vector.broadcast %cst_328 : f32 to vector<8x128xf32>
    %560 = vector.extract_strided_slice %59 {offsets = [0, 0], sizes = [8, 128], strides = [1, 1]} : vector<16x128xf32> to vector<8x128xf32>
    %cst_329 = arith.constant 0.0410112701 : f32
    %561 = vector.broadcast %cst_329 : f32 to vector<8x128xf32>
    %562 = arith.subf %560, %561 : vector<8x128xf32>
    %cst_330 = arith.constant 0.000000e+00 : f32
    %563 = vector.broadcast %cst_330 : f32 to vector<8x128xf32>
    %564 = arith.cmpf ogt, %562, %563 : vector<8x128xf32>
    %565 = arith.extui %564 : vector<8x128xi1> to vector<8x128xi32>
    %566 = arith.sitofp %565 : vector<8x128xi32> to vector<8x128xf32>
    %567 = arith.addf %558, %566 : vector<8x128xf32>
    %568 = arith.mulf %566, %562 : vector<8x128xf32>
    %569 = arith.addf %559, %568 : vector<8x128xf32>
    %570 = vector.extract_strided_slice %59 {offsets = [8, 0], sizes = [8, 128], strides = [1, 1]} : vector<16x128xf32> to vector<8x128xf32>
    %cst_331 = arith.constant 0.0410112701 : f32
    %571 = vector.broadcast %cst_331 : f32 to vector<8x128xf32>
    %572 = arith.subf %570, %571 : vector<8x128xf32>
    %cst_332 = arith.constant 0.000000e+00 : f32
    %573 = vector.broadcast %cst_332 : f32 to vector<8x128xf32>
    %574 = arith.cmpf ogt, %572, %573 : vector<8x128xf32>
    %575 = arith.extui %574 : vector<8x128xi1> to vector<8x128xi32>
    %576 = arith.sitofp %575 : vector<8x128xi32> to vector<8x128xf32>
    %577 = arith.addf %567, %576 : vector<8x128xf32>
    %578 = arith.mulf %576, %572 : vector<8x128xf32>
    %579 = arith.addf %569, %578 : vector<8x128xf32>
    %c0_333 = arith.constant 0 : index
    %c19 = arith.constant 19 : index
    %c0_334 = arith.constant 0 : index
    %c0_335 = arith.constant 0 : index
    %580 = vector.load %arg7[%c0_333, %c19, %c0_334, %c0_335] : memref<1x73x8x128xf32, #tpu.memory_space<vmem>>, vector<1x1x8x128xf32>
    %581 = vector.shape_cast %580 : vector<1x1x8x128xf32> to vector<8x128xf32>
    %582 = arith.addf %581, %577 : vector<8x128xf32>
    %c0_336 = arith.constant 0 : index
    %c19_337 = arith.constant 19 : index
    %c0_338 = arith.constant 0 : index
    %c0_339 = arith.constant 0 : index
    %583 = vector.load %arg7[%c0_336, %c19_337, %c0_338, %c0_339] : memref<1x73x8x128xf32, #tpu.memory_space<vmem>>, vector<1x1x8x128xf32>
    %584 = vector.shape_cast %583 : vector<1x1x8x128xf32> to vector<8x128xf32>
    %585 = vector.shape_cast %582 : vector<8x128xf32> to vector<1x1x8x128xf32>
    tpu.vector_store %arg7[%c0_336, %c19_337, %c0_338, %c0_339], %585 {strides = array<i32>} : memref<1x73x8x128xf32, #tpu.memory_space<vmem>>, vector<1x1x8x128xf32>,
    %c0_340 = arith.constant 0 : index
    %c51 = arith.constant 51 : index
    %c0_341 = arith.constant 0 : index
    %c0_342 = arith.constant 0 : index
    %586 = vector.load %arg7[%c0_340, %c51, %c0_341, %c0_342] : memref<1x73x8x128xf32, #tpu.memory_space<vmem>>, vector<1x1x8x128xf32>
    %587 = vector.shape_cast %586 : vector<1x1x8x128xf32> to vector<8x128xf32>
    %588 = arith.addf %587, %579 : vector<8x128xf32>
    %c0_343 = arith.constant 0 : index
    %c51_344 = arith.constant 51 : index
    %c0_345 = arith.constant 0 : index
    %c0_346 = arith.constant 0 : index
    %589 = vector.load %arg7[%c0_343, %c51_344, %c0_345, %c0_346] : memref<1x73x8x128xf32, #tpu.memory_space<vmem>>, vector<1x1x8x128xf32>
    %590 = vector.shape_cast %589 : vector<1x1x8x128xf32> to vector<8x128xf32>
    %591 = vector.shape_cast %588 : vector<8x128xf32> to vector<1x1x8x128xf32>
    tpu.vector_store %arg7[%c0_343, %c51_344, %c0_345, %c0_346], %591 {strides = array<i32>} : memref<1x73x8x128xf32, #tpu.memory_space<vmem>>, vector<1x1x8x128xf32>,
    %cst_347 = arith.constant 0.000000e+00 : f32
    %592 = vector.broadcast %cst_347 : f32 to vector<8x128xf32>
    %cst_348 = arith.constant 0.000000e+00 : f32
    %593 = vector.broadcast %cst_348 : f32 to vector<8x128xf32>
    %594 = vector.extract_strided_slice %59 {offsets = [0, 0], sizes = [8, 128], strides = [1, 1]} : vector<16x128xf32> to vector<8x128xf32>
    %cst_349 = arith.constant 0.0594557077 : f32
    %595 = vector.broadcast %cst_349 : f32 to vector<8x128xf32>
    %596 = arith.subf %594, %595 : vector<8x128xf32>
    %cst_350 = arith.constant 0.000000e+00 : f32
    %597 = vector.broadcast %cst_350 : f32 to vector<8x128xf32>
    %598 = arith.cmpf ogt, %596, %597 : vector<8x128xf32>
    %599 = arith.extui %598 : vector<8x128xi1> to vector<8x128xi32>
    %600 = arith.sitofp %599 : vector<8x128xi32> to vector<8x128xf32>
    %601 = arith.addf %592, %600 : vector<8x128xf32>
    %602 = arith.mulf %600, %596 : vector<8x128xf32>
    %603 = arith.addf %593, %602 : vector<8x128xf32>
    %604 = vector.extract_strided_slice %59 {offsets = [8, 0], sizes = [8, 128], strides = [1, 1]} : vector<16x128xf32> to vector<8x128xf32>
    %cst_351 = arith.constant 0.0594557077 : f32
    %605 = vector.broadcast %cst_351 : f32 to vector<8x128xf32>
    %606 = arith.subf %604, %605 : vector<8x128xf32>
    %cst_352 = arith.constant 0.000000e+00 : f32
    %607 = vector.broadcast %cst_352 : f32 to vector<8x128xf32>
    %608 = arith.cmpf ogt, %606, %607 : vector<8x128xf32>
    %609 = arith.extui %608 : vector<8x128xi1> to vector<8x128xi32>
    %610 = arith.sitofp %609 : vector<8x128xi32> to vector<8x128xf32>
    %611 = arith.addf %601, %610 : vector<8x128xf32>
    %612 = arith.mulf %610, %606 : vector<8x128xf32>
    %613 = arith.addf %603, %612 : vector<8x128xf32>
    %c0_353 = arith.constant 0 : index
    %c20 = arith.constant 20 : index
    %c0_354 = arith.constant 0 : index
    %c0_355 = arith.constant 0 : index
    %614 = vector.load %arg7[%c0_353, %c20, %c0_354, %c0_355] : memref<1x73x8x128xf32, #tpu.memory_space<vmem>>, vector<1x1x8x128xf32>
    %615 = vector.shape_cast %614 : vector<1x1x8x128xf32> to vector<8x128xf32>
    %616 = arith.addf %615, %611 : vector<8x128xf32>
    %c0_356 = arith.constant 0 : index
    %c20_357 = arith.constant 20 : index
    %c0_358 = arith.constant 0 : index
    %c0_359 = arith.constant 0 : index
    %617 = vector.load %arg7[%c0_356, %c20_357, %c0_358, %c0_359] : memref<1x73x8x128xf32, #tpu.memory_space<vmem>>, vector<1x1x8x128xf32>
    %618 = vector.shape_cast %617 : vector<1x1x8x128xf32> to vector<8x128xf32>
    %619 = vector.shape_cast %616 : vector<8x128xf32> to vector<1x1x8x128xf32>
    tpu.vector_store %arg7[%c0_356, %c20_357, %c0_358, %c0_359], %619 {strides = array<i32>} : memref<1x73x8x128xf32, #tpu.memory_space<vmem>>, vector<1x1x8x128xf32>,
    %c0_360 = arith.constant 0 : index
    %c52 = arith.constant 52 : index
    %c0_361 = arith.constant 0 : index
    %c0_362 = arith.constant 0 : index
    %620 = vector.load %arg7[%c0_360, %c52, %c0_361, %c0_362] : memref<1x73x8x128xf32, #tpu.memory_space<vmem>>, vector<1x1x8x128xf32>
    %621 = vector.shape_cast %620 : vector<1x1x8x128xf32> to vector<8x128xf32>
    %622 = arith.addf %621, %613 : vector<8x128xf32>
    %c0_363 = arith.constant 0 : index
    %c52_364 = arith.constant 52 : index
    %c0_365 = arith.constant 0 : index
    %c0_366 = arith.constant 0 : index
    %623 = vector.load %arg7[%c0_363, %c52_364, %c0_365, %c0_366] : memref<1x73x8x128xf32, #tpu.memory_space<vmem>>, vector<1x1x8x128xf32>
    %624 = vector.shape_cast %623 : vector<1x1x8x128xf32> to vector<8x128xf32>
    %625 = vector.shape_cast %622 : vector<8x128xf32> to vector<1x1x8x128xf32>
    tpu.vector_store %arg7[%c0_363, %c52_364, %c0_365, %c0_366], %625 {strides = array<i32>} : memref<1x73x8x128xf32, #tpu.memory_space<vmem>>, vector<1x1x8x128xf32>,
    %cst_367 = arith.constant 0.000000e+00 : f32
    %626 = vector.broadcast %cst_367 : f32 to vector<8x128xf32>
    %cst_368 = arith.constant 0.000000e+00 : f32
    %627 = vector.broadcast %cst_368 : f32 to vector<8x128xf32>
    %628 = vector.extract_strided_slice %59 {offsets = [0, 0], sizes = [8, 128], strides = [1, 1]} : vector<16x128xf32> to vector<8x128xf32>
    %cst_369 = arith.constant 0.0861953571 : f32
    %629 = vector.broadcast %cst_369 : f32 to vector<8x128xf32>
    %630 = arith.subf %628, %629 : vector<8x128xf32>
    %cst_370 = arith.constant 0.000000e+00 : f32
    %631 = vector.broadcast %cst_370 : f32 to vector<8x128xf32>
    %632 = arith.cmpf ogt, %630, %631 : vector<8x128xf32>
    %633 = arith.extui %632 : vector<8x128xi1> to vector<8x128xi32>
    %634 = arith.sitofp %633 : vector<8x128xi32> to vector<8x128xf32>
    %635 = arith.addf %626, %634 : vector<8x128xf32>
    %636 = arith.mulf %634, %630 : vector<8x128xf32>
    %637 = arith.addf %627, %636 : vector<8x128xf32>
    %638 = vector.extract_strided_slice %59 {offsets = [8, 0], sizes = [8, 128], strides = [1, 1]} : vector<16x128xf32> to vector<8x128xf32>
    %cst_371 = arith.constant 0.0861953571 : f32
    %639 = vector.broadcast %cst_371 : f32 to vector<8x128xf32>
    %640 = arith.subf %638, %639 : vector<8x128xf32>
    %cst_372 = arith.constant 0.000000e+00 : f32
    %641 = vector.broadcast %cst_372 : f32 to vector<8x128xf32>
    %642 = arith.cmpf ogt, %640, %641 : vector<8x128xf32>
    %643 = arith.extui %642 : vector<8x128xi1> to vector<8x128xi32>
    %644 = arith.sitofp %643 : vector<8x128xi32> to vector<8x128xf32>
    %645 = arith.addf %635, %644 : vector<8x128xf32>
    %646 = arith.mulf %644, %640 : vector<8x128xf32>
    %647 = arith.addf %637, %646 : vector<8x128xf32>
    %c0_373 = arith.constant 0 : index
    %c21 = arith.constant 21 : index
    %c0_374 = arith.constant 0 : index
    %c0_375 = arith.constant 0 : index
    %648 = vector.load %arg7[%c0_373, %c21, %c0_374, %c0_375] : memref<1x73x8x128xf32, #tpu.memory_space<vmem>>, vector<1x1x8x128xf32>
    %649 = vector.shape_cast %648 : vector<1x1x8x128xf32> to vector<8x128xf32>
    %650 = arith.addf %649, %645 : vector<8x128xf32>
    %c0_376 = arith.constant 0 : index
    %c21_377 = arith.constant 21 : index
    %c0_378 = arith.constant 0 : index
    %c0_379 = arith.constant 0 : index
    %651 = vector.load %arg7[%c0_376, %c21_377, %c0_378, %c0_379] : memref<1x73x8x128xf32, #tpu.memory_space<vmem>>, vector<1x1x8x128xf32>
    %652 = vector.shape_cast %651 : vector<1x1x8x128xf32> to vector<8x128xf32>
    %653 = vector.shape_cast %650 : vector<8x128xf32> to vector<1x1x8x128xf32>
    tpu.vector_store %arg7[%c0_376, %c21_377, %c0_378, %c0_379], %653 {strides = array<i32>} : memref<1x73x8x128xf32, #tpu.memory_space<vmem>>, vector<1x1x8x128xf32>,
    %c0_380 = arith.constant 0 : index
    %c53 = arith.constant 53 : index
    %c0_381 = arith.constant 0 : index
    %c0_382 = arith.constant 0 : index
    %654 = vector.load %arg7[%c0_380, %c53, %c0_381, %c0_382] : memref<1x73x8x128xf32, #tpu.memory_space<vmem>>, vector<1x1x8x128xf32>
    %655 = vector.shape_cast %654 : vector<1x1x8x128xf32> to vector<8x128xf32>
    %656 = arith.addf %655, %647 : vector<8x128xf32>
    %c0_383 = arith.constant 0 : index
    %c53_384 = arith.constant 53 : index
    %c0_385 = arith.constant 0 : index
    %c0_386 = arith.constant 0 : index
    %657 = vector.load %arg7[%c0_383, %c53_384, %c0_385, %c0_386] : memref<1x73x8x128xf32, #tpu.memory_space<vmem>>, vector<1x1x8x128xf32>
    %658 = vector.shape_cast %657 : vector<1x1x8x128xf32> to vector<8x128xf32>
    %659 = vector.shape_cast %656 : vector<8x128xf32> to vector<1x1x8x128xf32>
    tpu.vector_store %arg7[%c0_383, %c53_384, %c0_385, %c0_386], %659 {strides = array<i32>} : memref<1x73x8x128xf32, #tpu.memory_space<vmem>>, vector<1x1x8x128xf32>,
    %cst_387 = arith.constant 0.000000e+00 : f32
    %660 = vector.broadcast %cst_387 : f32 to vector<8x128xf32>
    %cst_388 = arith.constant 0.000000e+00 : f32
    %661 = vector.broadcast %cst_388 : f32 to vector<8x128xf32>
    %662 = vector.extract_strided_slice %59 {offsets = [0, 0], sizes = [8, 128], strides = [1, 1]} : vector<16x128xf32> to vector<8x128xf32>
    %cst_389 = arith.constant 0.124960914 : f32
    %663 = vector.broadcast %cst_389 : f32 to vector<8x128xf32>
    %664 = arith.subf %662, %663 : vector<8x128xf32>
    %cst_390 = arith.constant 0.000000e+00 : f32
    %665 = vector.broadcast %cst_390 : f32 to vector<8x128xf32>
    %666 = arith.cmpf ogt, %664, %665 : vector<8x128xf32>
    %667 = arith.extui %666 : vector<8x128xi1> to vector<8x128xi32>
    %668 = arith.sitofp %667 : vector<8x128xi32> to vector<8x128xf32>
    %669 = arith.addf %660, %668 : vector<8x128xf32>
    %670 = arith.mulf %668, %664 : vector<8x128xf32>
    %671 = arith.addf %661, %670 : vector<8x128xf32>
    %672 = vector.extract_strided_slice %59 {offsets = [8, 0], sizes = [8, 128], strides = [1, 1]} : vector<16x128xf32> to vector<8x128xf32>
    %cst_391 = arith.constant 0.124960914 : f32
    %673 = vector.broadcast %cst_391 : f32 to vector<8x128xf32>
    %674 = arith.subf %672, %673 : vector<8x128xf32>
    %cst_392 = arith.constant 0.000000e+00 : f32
    %675 = vector.broadcast %cst_392 : f32 to vector<8x128xf32>
    %676 = arith.cmpf ogt, %674, %675 : vector<8x128xf32>
    %677 = arith.extui %676 : vector<8x128xi1> to vector<8x128xi32>
    %678 = arith.sitofp %677 : vector<8x128xi32> to vector<8x128xf32>
    %679 = arith.addf %669, %678 : vector<8x128xf32>
    %680 = arith.mulf %678, %674 : vector<8x128xf32>
    %681 = arith.addf %671, %680 : vector<8x128xf32>
    %c0_393 = arith.constant 0 : index
    %c22 = arith.constant 22 : index
    %c0_394 = arith.constant 0 : index
    %c0_395 = arith.constant 0 : index
    %682 = vector.load %arg7[%c0_393, %c22, %c0_394, %c0_395] : memref<1x73x8x128xf32, #tpu.memory_space<vmem>>, vector<1x1x8x128xf32>
    %683 = vector.shape_cast %682 : vector<1x1x8x128xf32> to vector<8x128xf32>
    %684 = arith.addf %683, %679 : vector<8x128xf32>
    %c0_396 = arith.constant 0 : index
    %c22_397 = arith.constant 22 : index
    %c0_398 = arith.constant 0 : index
    %c0_399 = arith.constant 0 : index
    %685 = vector.load %arg7[%c0_396, %c22_397, %c0_398, %c0_399] : memref<1x73x8x128xf32, #tpu.memory_space<vmem>>, vector<1x1x8x128xf32>
    %686 = vector.shape_cast %685 : vector<1x1x8x128xf32> to vector<8x128xf32>
    %687 = vector.shape_cast %684 : vector<8x128xf32> to vector<1x1x8x128xf32>
    tpu.vector_store %arg7[%c0_396, %c22_397, %c0_398, %c0_399], %687 {strides = array<i32>} : memref<1x73x8x128xf32, #tpu.memory_space<vmem>>, vector<1x1x8x128xf32>,
    %c0_400 = arith.constant 0 : index
    %c54 = arith.constant 54 : index
    %c0_401 = arith.constant 0 : index
    %c0_402 = arith.constant 0 : index
    %688 = vector.load %arg7[%c0_400, %c54, %c0_401, %c0_402] : memref<1x73x8x128xf32, #tpu.memory_space<vmem>>, vector<1x1x8x128xf32>
    %689 = vector.shape_cast %688 : vector<1x1x8x128xf32> to vector<8x128xf32>
    %690 = arith.addf %689, %681 : vector<8x128xf32>
    %c0_403 = arith.constant 0 : index
    %c54_404 = arith.constant 54 : index
    %c0_405 = arith.constant 0 : index
    %c0_406 = arith.constant 0 : index
    %691 = vector.load %arg7[%c0_403, %c54_404, %c0_405, %c0_406] : memref<1x73x8x128xf32, #tpu.memory_space<vmem>>, vector<1x1x8x128xf32>
    %692 = vector.shape_cast %691 : vector<1x1x8x128xf32> to vector<8x128xf32>
    %693 = vector.shape_cast %690 : vector<8x128xf32> to vector<1x1x8x128xf32>
    tpu.vector_store %arg7[%c0_403, %c54_404, %c0_405, %c0_406], %693 {strides = array<i32>} : memref<1x73x8x128xf32, #tpu.memory_space<vmem>>, vector<1x1x8x128xf32>,
    %cst_407 = arith.constant 0.000000e+00 : f32
    %694 = vector.broadcast %cst_407 : f32 to vector<8x128xf32>
    %cst_408 = arith.constant 0.000000e+00 : f32
    %695 = vector.broadcast %cst_408 : f32 to vector<8x128xf32>
    %696 = vector.extract_strided_slice %59 {offsets = [0, 0], sizes = [8, 128], strides = [1, 1]} : vector<16x128xf32> to vector<8x128xf32>
    %cst_409 = arith.constant 0.181160927 : f32
    %697 = vector.broadcast %cst_409 : f32 to vector<8x128xf32>
    %698 = arith.subf %696, %697 : vector<8x128xf32>
    %cst_410 = arith.constant 0.000000e+00 : f32
    %699 = vector.broadcast %cst_410 : f32 to vector<8x128xf32>
    %700 = arith.cmpf ogt, %698, %699 : vector<8x128xf32>
    %701 = arith.extui %700 : vector<8x128xi1> to vector<8x128xi32>
    %702 = arith.sitofp %701 : vector<8x128xi32> to vector<8x128xf32>
    %703 = arith.addf %694, %702 : vector<8x128xf32>
    %704 = arith.mulf %702, %698 : vector<8x128xf32>
    %705 = arith.addf %695, %704 : vector<8x128xf32>
    %706 = vector.extract_strided_slice %59 {offsets = [8, 0], sizes = [8, 128], strides = [1, 1]} : vector<16x128xf32> to vector<8x128xf32>
    %cst_411 = arith.constant 0.181160927 : f32
    %707 = vector.broadcast %cst_411 : f32 to vector<8x128xf32>
    %708 = arith.subf %706, %707 : vector<8x128xf32>
    %cst_412 = arith.constant 0.000000e+00 : f32
    %709 = vector.broadcast %cst_412 : f32 to vector<8x128xf32>
    %710 = arith.cmpf ogt, %708, %709 : vector<8x128xf32>
    %711 = arith.extui %710 : vector<8x128xi1> to vector<8x128xi32>
    %712 = arith.sitofp %711 : vector<8x128xi32> to vector<8x128xf32>
    %713 = arith.addf %703, %712 : vector<8x128xf32>
    %714 = arith.mulf %712, %708 : vector<8x128xf32>
    %715 = arith.addf %705, %714 : vector<8x128xf32>
    %c0_413 = arith.constant 0 : index
    %c23 = arith.constant 23 : index
    %c0_414 = arith.constant 0 : index
    %c0_415 = arith.constant 0 : index
    %716 = vector.load %arg7[%c0_413, %c23, %c0_414, %c0_415] : memref<1x73x8x128xf32, #tpu.memory_space<vmem>>, vector<1x1x8x128xf32>
    %717 = vector.shape_cast %716 : vector<1x1x8x128xf32> to vector<8x128xf32>
    %718 = arith.addf %717, %713 : vector<8x128xf32>
    %c0_416 = arith.constant 0 : index
    %c23_417 = arith.constant 23 : index
    %c0_418 = arith.constant 0 : index
    %c0_419 = arith.constant 0 : index
    %719 = vector.load %arg7[%c0_416, %c23_417, %c0_418, %c0_419] : memref<1x73x8x128xf32, #tpu.memory_space<vmem>>, vector<1x1x8x128xf32>
    %720 = vector.shape_cast %719 : vector<1x1x8x128xf32> to vector<8x128xf32>
    %721 = vector.shape_cast %718 : vector<8x128xf32> to vector<1x1x8x128xf32>
    tpu.vector_store %arg7[%c0_416, %c23_417, %c0_418, %c0_419], %721 {strides = array<i32>} : memref<1x73x8x128xf32, #tpu.memory_space<vmem>>, vector<1x1x8x128xf32>,
    %c0_420 = arith.constant 0 : index
    %c55 = arith.constant 55 : index
    %c0_421 = arith.constant 0 : index
    %c0_422 = arith.constant 0 : index
    %722 = vector.load %arg7[%c0_420, %c55, %c0_421, %c0_422] : memref<1x73x8x128xf32, #tpu.memory_space<vmem>>, vector<1x1x8x128xf32>
    %723 = vector.shape_cast %722 : vector<1x1x8x128xf32> to vector<8x128xf32>
    %724 = arith.addf %723, %715 : vector<8x128xf32>
    %c0_423 = arith.constant 0 : index
    %c55_424 = arith.constant 55 : index
    %c0_425 = arith.constant 0 : index
    %c0_426 = arith.constant 0 : index
    %725 = vector.load %arg7[%c0_423, %c55_424, %c0_425, %c0_426] : memref<1x73x8x128xf32, #tpu.memory_space<vmem>>, vector<1x1x8x128xf32>
    %726 = vector.shape_cast %725 : vector<1x1x8x128xf32> to vector<8x128xf32>
    %727 = vector.shape_cast %724 : vector<8x128xf32> to vector<1x1x8x128xf32>
    tpu.vector_store %arg7[%c0_423, %c55_424, %c0_425, %c0_426], %727 {strides = array<i32>} : memref<1x73x8x128xf32, #tpu.memory_space<vmem>>, vector<1x1x8x128xf32>,
    %cst_427 = arith.constant 0.000000e+00 : f32
    %728 = vector.broadcast %cst_427 : f32 to vector<8x128xf32>
    %cst_428 = arith.constant 0.000000e+00 : f32
    %729 = vector.broadcast %cst_428 : f32 to vector<8x128xf32>
    %730 = vector.extract_strided_slice %59 {offsets = [0, 0], sizes = [8, 128], strides = [1, 1]} : vector<16x128xf32> to vector<8x128xf32>
    %cst_429 = arith.constant 0.262636364 : f32
    %731 = vector.broadcast %cst_429 : f32 to vector<8x128xf32>
    %732 = arith.subf %730, %731 : vector<8x128xf32>
    %cst_430 = arith.constant 0.000000e+00 : f32
    %733 = vector.broadcast %cst_430 : f32 to vector<8x128xf32>
    %734 = arith.cmpf ogt, %732, %733 : vector<8x128xf32>
    %735 = arith.extui %734 : vector<8x128xi1> to vector<8x128xi32>
    %736 = arith.sitofp %735 : vector<8x128xi32> to vector<8x128xf32>
    %737 = arith.addf %728, %736 : vector<8x128xf32>
    %738 = arith.mulf %736, %732 : vector<8x128xf32>
    %739 = arith.addf %729, %738 : vector<8x128xf32>
    %740 = vector.extract_strided_slice %59 {offsets = [8, 0], sizes = [8, 128], strides = [1, 1]} : vector<16x128xf32> to vector<8x128xf32>
    %cst_431 = arith.constant 0.262636364 : f32
    %741 = vector.broadcast %cst_431 : f32 to vector<8x128xf32>
    %742 = arith.subf %740, %741 : vector<8x128xf32>
    %cst_432 = arith.constant 0.000000e+00 : f32
    %743 = vector.broadcast %cst_432 : f32 to vector<8x128xf32>
    %744 = arith.cmpf ogt, %742, %743 : vector<8x128xf32>
    %745 = arith.extui %744 : vector<8x128xi1> to vector<8x128xi32>
    %746 = arith.sitofp %745 : vector<8x128xi32> to vector<8x128xf32>
    %747 = arith.addf %737, %746 : vector<8x128xf32>
    %748 = arith.mulf %746, %742 : vector<8x128xf32>
    %749 = arith.addf %739, %748 : vector<8x128xf32>
    %c0_433 = arith.constant 0 : index
    %c24 = arith.constant 24 : index
    %c0_434 = arith.constant 0 : index
    %c0_435 = arith.constant 0 : index
    %750 = vector.load %arg7[%c0_433, %c24, %c0_434, %c0_435] : memref<1x73x8x128xf32, #tpu.memory_space<vmem>>, vector<1x1x8x128xf32>
    %751 = vector.shape_cast %750 : vector<1x1x8x128xf32> to vector<8x128xf32>
    %752 = arith.addf %751, %747 : vector<8x128xf32>
    %c0_436 = arith.constant 0 : index
    %c24_437 = arith.constant 24 : index
    %c0_438 = arith.constant 0 : index
    %c0_439 = arith.constant 0 : index
    %753 = vector.load %arg7[%c0_436, %c24_437, %c0_438, %c0_439] : memref<1x73x8x128xf32, #tpu.memory_space<vmem>>, vector<1x1x8x128xf32>
    %754 = vector.shape_cast %753 : vector<1x1x8x128xf32> to vector<8x128xf32>
    %755 = vector.shape_cast %752 : vector<8x128xf32> to vector<1x1x8x128xf32>
    tpu.vector_store %arg7[%c0_436, %c24_437, %c0_438, %c0_439], %755 {strides = array<i32>} : memref<1x73x8x128xf32, #tpu.memory_space<vmem>>, vector<1x1x8x128xf32>,
    %c0_440 = arith.constant 0 : index
    %c56 = arith.constant 56 : index
    %c0_441 = arith.constant 0 : index
    %c0_442 = arith.constant 0 : index
    %756 = vector.load %arg7[%c0_440, %c56, %c0_441, %c0_442] : memref<1x73x8x128xf32, #tpu.memory_space<vmem>>, vector<1x1x8x128xf32>
    %757 = vector.shape_cast %756 : vector<1x1x8x128xf32> to vector<8x128xf32>
    %758 = arith.addf %757, %749 : vector<8x128xf32>
    %c0_443 = arith.constant 0 : index
    %c56_444 = arith.constant 56 : index
    %c0_445 = arith.constant 0 : index
    %c0_446 = arith.constant 0 : index
    %759 = vector.load %arg7[%c0_443, %c56_444, %c0_445, %c0_446] : memref<1x73x8x128xf32, #tpu.memory_space<vmem>>, vector<1x1x8x128xf32>
    %760 = vector.shape_cast %759 : vector<1x1x8x128xf32> to vector<8x128xf32>
    %761 = vector.shape_cast %758 : vector<8x128xf32> to vector<1x1x8x128xf32>
    tpu.vector_store %arg7[%c0_443, %c56_444, %c0_445, %c0_446], %761 {strides = array<i32>} : memref<1x73x8x128xf32, #tpu.memory_space<vmem>>, vector<1x1x8x128xf32>,
    %cst_447 = arith.constant 0.000000e+00 : f32
    %762 = vector.broadcast %cst_447 : f32 to vector<8x128xf32>
    %cst_448 = arith.constant 0.000000e+00 : f32
    %763 = vector.broadcast %cst_448 : f32 to vector<8x128xf32>
    %764 = vector.extract_strided_slice %59 {offsets = [0, 0], sizes = [8, 128], strides = [1, 1]} : vector<16x128xf32> to vector<8x128xf32>
    %cst_449 = arith.constant 0.38075459 : f32
    %765 = vector.broadcast %cst_449 : f32 to vector<8x128xf32>
    %766 = arith.subf %764, %765 : vector<8x128xf32>
    %cst_450 = arith.constant 0.000000e+00 : f32
    %767 = vector.broadcast %cst_450 : f32 to vector<8x128xf32>
    %768 = arith.cmpf ogt, %766, %767 : vector<8x128xf32>
    %769 = arith.extui %768 : vector<8x128xi1> to vector<8x128xi32>
    %770 = arith.sitofp %769 : vector<8x128xi32> to vector<8x128xf32>
    %771 = arith.addf %762, %770 : vector<8x128xf32>
    %772 = arith.mulf %770, %766 : vector<8x128xf32>
    %773 = arith.addf %763, %772 : vector<8x128xf32>
    %774 = vector.extract_strided_slice %59 {offsets = [8, 0], sizes = [8, 128], strides = [1, 1]} : vector<16x128xf32> to vector<8x128xf32>
    %cst_451 = arith.constant 0.38075459 : f32
    %775 = vector.broadcast %cst_451 : f32 to vector<8x128xf32>
    %776 = arith.subf %774, %775 : vector<8x128xf32>
    %cst_452 = arith.constant 0.000000e+00 : f32
    %777 = vector.broadcast %cst_452 : f32 to vector<8x128xf32>
    %778 = arith.cmpf ogt, %776, %777 : vector<8x128xf32>
    %779 = arith.extui %778 : vector<8x128xi1> to vector<8x128xi32>
    %780 = arith.sitofp %779 : vector<8x128xi32> to vector<8x128xf32>
    %781 = arith.addf %771, %780 : vector<8x128xf32>
    %782 = arith.mulf %780, %776 : vector<8x128xf32>
    %783 = arith.addf %773, %782 : vector<8x128xf32>
    %c0_453 = arith.constant 0 : index
    %c25 = arith.constant 25 : index
    %c0_454 = arith.constant 0 : index
    %c0_455 = arith.constant 0 : index
    %784 = vector.load %arg7[%c0_453, %c25, %c0_454, %c0_455] : memref<1x73x8x128xf32, #tpu.memory_space<vmem>>, vector<1x1x8x128xf32>
    %785 = vector.shape_cast %784 : vector<1x1x8x128xf32> to vector<8x128xf32>
    %786 = arith.addf %785, %781 : vector<8x128xf32>
    %c0_456 = arith.constant 0 : index
    %c25_457 = arith.constant 25 : index
    %c0_458 = arith.constant 0 : index
    %c0_459 = arith.constant 0 : index
    %787 = vector.load %arg7[%c0_456, %c25_457, %c0_458, %c0_459] : memref<1x73x8x128xf32, #tpu.memory_space<vmem>>, vector<1x1x8x128xf32>
    %788 = vector.shape_cast %787 : vector<1x1x8x128xf32> to vector<8x128xf32>
    %789 = vector.shape_cast %786 : vector<8x128xf32> to vector<1x1x8x128xf32>
    tpu.vector_store %arg7[%c0_456, %c25_457, %c0_458, %c0_459], %789 {strides = array<i32>} : memref<1x73x8x128xf32, #tpu.memory_space<vmem>>, vector<1x1x8x128xf32>,
    %c0_460 = arith.constant 0 : index
    %c57 = arith.constant 57 : index
    %c0_461 = arith.constant 0 : index
    %c0_462 = arith.constant 0 : index
    %790 = vector.load %arg7[%c0_460, %c57, %c0_461, %c0_462] : memref<1x73x8x128xf32, #tpu.memory_space<vmem>>, vector<1x1x8x128xf32>
    %791 = vector.shape_cast %790 : vector<1x1x8x128xf32> to vector<8x128xf32>
    %792 = arith.addf %791, %783 : vector<8x128xf32>
    %c0_463 = arith.constant 0 : index
    %c57_464 = arith.constant 57 : index
    %c0_465 = arith.constant 0 : index
    %c0_466 = arith.constant 0 : index
    %793 = vector.load %arg7[%c0_463, %c57_464, %c0_465, %c0_466] : memref<1x73x8x128xf32, #tpu.memory_space<vmem>>, vector<1x1x8x128xf32>
    %794 = vector.shape_cast %793 : vector<1x1x8x128xf32> to vector<8x128xf32>
    %795 = vector.shape_cast %792 : vector<8x128xf32> to vector<1x1x8x128xf32>
    tpu.vector_store %arg7[%c0_463, %c57_464, %c0_465, %c0_466], %795 {strides = array<i32>} : memref<1x73x8x128xf32, #tpu.memory_space<vmem>>, vector<1x1x8x128xf32>,
    %cst_467 = arith.constant 0.000000e+00 : f32
    %796 = vector.broadcast %cst_467 : f32 to vector<8x128xf32>
    %cst_468 = arith.constant 0.000000e+00 : f32
    %797 = vector.broadcast %cst_468 : f32 to vector<8x128xf32>
    %798 = vector.extract_strided_slice %59 {offsets = [0, 0], sizes = [8, 128], strides = [1, 1]} : vector<16x128xf32> to vector<8x128xf32>
    %cst_469 = arith.constant 0.551995456 : f32
    %799 = vector.broadcast %cst_469 : f32 to vector<8x128xf32>
    %800 = arith.subf %798, %799 : vector<8x128xf32>
    %cst_470 = arith.constant 0.000000e+00 : f32
    %801 = vector.broadcast %cst_470 : f32 to vector<8x128xf32>
    %802 = arith.cmpf ogt, %800, %801 : vector<8x128xf32>
    %803 = arith.extui %802 : vector<8x128xi1> to vector<8x128xi32>
    %804 = arith.sitofp %803 : vector<8x128xi32> to vector<8x128xf32>
    %805 = arith.addf %796, %804 : vector<8x128xf32>
    %806 = arith.mulf %804, %800 : vector<8x128xf32>
    %807 = arith.addf %797, %806 : vector<8x128xf32>
    %808 = vector.extract_strided_slice %59 {offsets = [8, 0], sizes = [8, 128], strides = [1, 1]} : vector<16x128xf32> to vector<8x128xf32>
    %cst_471 = arith.constant 0.551995456 : f32
    %809 = vector.broadcast %cst_471 : f32 to vector<8x128xf32>
    %810 = arith.subf %808, %809 : vector<8x128xf32>
    %cst_472 = arith.constant 0.000000e+00 : f32
    %811 = vector.broadcast %cst_472 : f32 to vector<8x128xf32>
    %812 = arith.cmpf ogt, %810, %811 : vector<8x128xf32>
    %813 = arith.extui %812 : vector<8x128xi1> to vector<8x128xi32>
    %814 = arith.sitofp %813 : vector<8x128xi32> to vector<8x128xf32>
    %815 = arith.addf %805, %814 : vector<8x128xf32>
    %816 = arith.mulf %814, %810 : vector<8x128xf32>
    %817 = arith.addf %807, %816 : vector<8x128xf32>
    %c0_473 = arith.constant 0 : index
    %c26 = arith.constant 26 : index
    %c0_474 = arith.constant 0 : index
    %c0_475 = arith.constant 0 : index
    %818 = vector.load %arg7[%c0_473, %c26, %c0_474, %c0_475] : memref<1x73x8x128xf32, #tpu.memory_space<vmem>>, vector<1x1x8x128xf32>
    %819 = vector.shape_cast %818 : vector<1x1x8x128xf32> to vector<8x128xf32>
    %820 = arith.addf %819, %815 : vector<8x128xf32>
    %c0_476 = arith.constant 0 : index
    %c26_477 = arith.constant 26 : index
    %c0_478 = arith.constant 0 : index
    %c0_479 = arith.constant 0 : index
    %821 = vector.load %arg7[%c0_476, %c26_477, %c0_478, %c0_479] : memref<1x73x8x128xf32, #tpu.memory_space<vmem>>, vector<1x1x8x128xf32>
    %822 = vector.shape_cast %821 : vector<1x1x8x128xf32> to vector<8x128xf32>
    %823 = vector.shape_cast %820 : vector<8x128xf32> to vector<1x1x8x128xf32>
    tpu.vector_store %arg7[%c0_476, %c26_477, %c0_478, %c0_479], %823 {strides = array<i32>} : memref<1x73x8x128xf32, #tpu.memory_space<vmem>>, vector<1x1x8x128xf32>,
    %c0_480 = arith.constant 0 : index
    %c58 = arith.constant 58 : index
    %c0_481 = arith.constant 0 : index
    %c0_482 = arith.constant 0 : index
    %824 = vector.load %arg7[%c0_480, %c58, %c0_481, %c0_482] : memref<1x73x8x128xf32, #tpu.memory_space<vmem>>, vector<1x1x8x128xf32>
    %825 = vector.shape_cast %824 : vector<1x1x8x128xf32> to vector<8x128xf32>
    %826 = arith.addf %825, %817 : vector<8x128xf32>
    %c0_483 = arith.constant 0 : index
    %c58_484 = arith.constant 58 : index
    %c0_485 = arith.constant 0 : index
    %c0_486 = arith.constant 0 : index
    %827 = vector.load %arg7[%c0_483, %c58_484, %c0_485, %c0_486] : memref<1x73x8x128xf32, #tpu.memory_space<vmem>>, vector<1x1x8x128xf32>
    %828 = vector.shape_cast %827 : vector<1x1x8x128xf32> to vector<8x128xf32>
    %829 = vector.shape_cast %826 : vector<8x128xf32> to vector<1x1x8x128xf32>
    tpu.vector_store %arg7[%c0_483, %c58_484, %c0_485, %c0_486], %829 {strides = array<i32>} : memref<1x73x8x128xf32, #tpu.memory_space<vmem>>, vector<1x1x8x128xf32>,
    %cst_487 = arith.constant 0.000000e+00 : f32
    %830 = vector.broadcast %cst_487 : f32 to vector<8x128xf32>
    %cst_488 = arith.constant 0.000000e+00 : f32
    %831 = vector.broadcast %cst_488 : f32 to vector<8x128xf32>
    %832 = vector.extract_strided_slice %59 {offsets = [0, 0], sizes = [8, 128], strides = [1, 1]} : vector<16x128xf32> to vector<8x128xf32>
    %cst_489 = arith.constant 0.800250232 : f32
    %833 = vector.broadcast %cst_489 : f32 to vector<8x128xf32>
    %834 = arith.subf %832, %833 : vector<8x128xf32>
    %cst_490 = arith.constant 0.000000e+00 : f32
    %835 = vector.broadcast %cst_490 : f32 to vector<8x128xf32>
    %836 = arith.cmpf ogt, %834, %835 : vector<8x128xf32>
    %837 = arith.extui %836 : vector<8x128xi1> to vector<8x128xi32>
    %838 = arith.sitofp %837 : vector<8x128xi32> to vector<8x128xf32>
    %839 = arith.addf %830, %838 : vector<8x128xf32>
    %840 = arith.mulf %838, %834 : vector<8x128xf32>
    %841 = arith.addf %831, %840 : vector<8x128xf32>
    %842 = vector.extract_strided_slice %59 {offsets = [8, 0], sizes = [8, 128], strides = [1, 1]} : vector<16x128xf32> to vector<8x128xf32>
    %cst_491 = arith.constant 0.800250232 : f32
    %843 = vector.broadcast %cst_491 : f32 to vector<8x128xf32>
    %844 = arith.subf %842, %843 : vector<8x128xf32>
    %cst_492 = arith.constant 0.000000e+00 : f32
    %845 = vector.broadcast %cst_492 : f32 to vector<8x128xf32>
    %846 = arith.cmpf ogt, %844, %845 : vector<8x128xf32>
    %847 = arith.extui %846 : vector<8x128xi1> to vector<8x128xi32>
    %848 = arith.sitofp %847 : vector<8x128xi32> to vector<8x128xf32>
    %849 = arith.addf %839, %848 : vector<8x128xf32>
    %850 = arith.mulf %848, %844 : vector<8x128xf32>
    %851 = arith.addf %841, %850 : vector<8x128xf32>
    %c0_493 = arith.constant 0 : index
    %c27 = arith.constant 27 : index
    %c0_494 = arith.constant 0 : index
    %c0_495 = arith.constant 0 : index
    %852 = vector.load %arg7[%c0_493, %c27, %c0_494, %c0_495] : memref<1x73x8x128xf32, #tpu.memory_space<vmem>>, vector<1x1x8x128xf32>
    %853 = vector.shape_cast %852 : vector<1x1x8x128xf32> to vector<8x128xf32>
    %854 = arith.addf %853, %849 : vector<8x128xf32>
    %c0_496 = arith.constant 0 : index
    %c27_497 = arith.constant 27 : index
    %c0_498 = arith.constant 0 : index
    %c0_499 = arith.constant 0 : index
    %855 = vector.load %arg7[%c0_496, %c27_497, %c0_498, %c0_499] : memref<1x73x8x128xf32, #tpu.memory_space<vmem>>, vector<1x1x8x128xf32>
    %856 = vector.shape_cast %855 : vector<1x1x8x128xf32> to vector<8x128xf32>
    %857 = vector.shape_cast %854 : vector<8x128xf32> to vector<1x1x8x128xf32>
    tpu.vector_store %arg7[%c0_496, %c27_497, %c0_498, %c0_499], %857 {strides = array<i32>} : memref<1x73x8x128xf32, #tpu.memory_space<vmem>>, vector<1x1x8x128xf32>,
    %c0_500 = arith.constant 0 : index
    %c59 = arith.constant 59 : index
    %c0_501 = arith.constant 0 : index
    %c0_502 = arith.constant 0 : index
    %858 = vector.load %arg7[%c0_500, %c59, %c0_501, %c0_502] : memref<1x73x8x128xf32, #tpu.memory_space<vmem>>, vector<1x1x8x128xf32>
    %859 = vector.shape_cast %858 : vector<1x1x8x128xf32> to vector<8x128xf32>
    %860 = arith.addf %859, %851 : vector<8x128xf32>
    %c0_503 = arith.constant 0 : index
    %c59_504 = arith.constant 59 : index
    %c0_505 = arith.constant 0 : index
    %c0_506 = arith.constant 0 : index
    %861 = vector.load %arg7[%c0_503, %c59_504, %c0_505, %c0_506] : memref<1x73x8x128xf32, #tpu.memory_space<vmem>>, vector<1x1x8x128xf32>
    %862 = vector.shape_cast %861 : vector<1x1x8x128xf32> to vector<8x128xf32>
    %863 = vector.shape_cast %860 : vector<8x128xf32> to vector<1x1x8x128xf32>
    tpu.vector_store %arg7[%c0_503, %c59_504, %c0_505, %c0_506], %863 {strides = array<i32>} : memref<1x73x8x128xf32, #tpu.memory_space<vmem>>, vector<1x1x8x128xf32>,
    %cst_507 = arith.constant 0.000000e+00 : f32
    %864 = vector.broadcast %cst_507 : f32 to vector<8x128xf32>
    %cst_508 = arith.constant 0.000000e+00 : f32
    %865 = vector.broadcast %cst_508 : f32 to vector<8x128xf32>
    %866 = vector.extract_strided_slice %59 {offsets = [0, 0], sizes = [8, 128], strides = [1, 1]} : vector<16x128xf32> to vector<8x128xf32>
    %cst_509 = arith.constant 1.1601553 : f32
    %867 = vector.broadcast %cst_509 : f32 to vector<8x128xf32>
    %868 = arith.subf %866, %867 : vector<8x128xf32>
    %cst_510 = arith.constant 0.000000e+00 : f32
    %869 = vector.broadcast %cst_510 : f32 to vector<8x128xf32>
    %870 = arith.cmpf ogt, %868, %869 : vector<8x128xf32>
    %871 = arith.extui %870 : vector<8x128xi1> to vector<8x128xi32>
    %872 = arith.sitofp %871 : vector<8x128xi32> to vector<8x128xf32>
    %873 = arith.addf %864, %872 : vector<8x128xf32>
    %874 = arith.mulf %872, %868 : vector<8x128xf32>
    %875 = arith.addf %865, %874 : vector<8x128xf32>
    %876 = vector.extract_strided_slice %59 {offsets = [8, 0], sizes = [8, 128], strides = [1, 1]} : vector<16x128xf32> to vector<8x128xf32>
    %cst_511 = arith.constant 1.1601553 : f32
    %877 = vector.broadcast %cst_511 : f32 to vector<8x128xf32>
    %878 = arith.subf %876, %877 : vector<8x128xf32>
    %cst_512 = arith.constant 0.000000e+00 : f32
    %879 = vector.broadcast %cst_512 : f32 to vector<8x128xf32>
    %880 = arith.cmpf ogt, %878, %879 : vector<8x128xf32>
    %881 = arith.extui %880 : vector<8x128xi1> to vector<8x128xi32>
    %882 = arith.sitofp %881 : vector<8x128xi32> to vector<8x128xf32>
    %883 = arith.addf %873, %882 : vector<8x128xf32>
    %884 = arith.mulf %882, %878 : vector<8x128xf32>
    %885 = arith.addf %875, %884 : vector<8x128xf32>
    %c0_513 = arith.constant 0 : index
    %c28 = arith.constant 28 : index
    %c0_514 = arith.constant 0 : index
    %c0_515 = arith.constant 0 : index
    %886 = vector.load %arg7[%c0_513, %c28, %c0_514, %c0_515] : memref<1x73x8x128xf32, #tpu.memory_space<vmem>>, vector<1x1x8x128xf32>
    %887 = vector.shape_cast %886 : vector<1x1x8x128xf32> to vector<8x128xf32>
    %888 = arith.addf %887, %883 : vector<8x128xf32>
    %c0_516 = arith.constant 0 : index
    %c28_517 = arith.constant 28 : index
    %c0_518 = arith.constant 0 : index
    %c0_519 = arith.constant 0 : index
    %889 = vector.load %arg7[%c0_516, %c28_517, %c0_518, %c0_519] : memref<1x73x8x128xf32, #tpu.memory_space<vmem>>, vector<1x1x8x128xf32>
    %890 = vector.shape_cast %889 : vector<1x1x8x128xf32> to vector<8x128xf32>
    %891 = vector.shape_cast %888 : vector<8x128xf32> to vector<1x1x8x128xf32>
    tpu.vector_store %arg7[%c0_516, %c28_517, %c0_518, %c0_519], %891 {strides = array<i32>} : memref<1x73x8x128xf32, #tpu.memory_space<vmem>>, vector<1x1x8x128xf32>,
    %c0_520 = arith.constant 0 : index
    %c60 = arith.constant 60 : index
    %c0_521 = arith.constant 0 : index
    %c0_522 = arith.constant 0 : index
    %892 = vector.load %arg7[%c0_520, %c60, %c0_521, %c0_522] : memref<1x73x8x128xf32, #tpu.memory_space<vmem>>, vector<1x1x8x128xf32>
    %893 = vector.shape_cast %892 : vector<1x1x8x128xf32> to vector<8x128xf32>
    %894 = arith.addf %893, %885 : vector<8x128xf32>
    %c0_523 = arith.constant 0 : index
    %c60_524 = arith.constant 60 : index
    %c0_525 = arith.constant 0 : index
    %c0_526 = arith.constant 0 : index
    %895 = vector.load %arg7[%c0_523, %c60_524, %c0_525, %c0_526] : memref<1x73x8x128xf32, #tpu.memory_space<vmem>>, vector<1x1x8x128xf32>
    %896 = vector.shape_cast %895 : vector<1x1x8x128xf32> to vector<8x128xf32>
    %897 = vector.shape_cast %894 : vector<8x128xf32> to vector<1x1x8x128xf32>
    tpu.vector_store %arg7[%c0_523, %c60_524, %c0_525, %c0_526], %897 {strides = array<i32>} : memref<1x73x8x128xf32, #tpu.memory_space<vmem>>, vector<1x1x8x128xf32>,
    %cst_527 = arith.constant 0.000000e+00 : f32
    %898 = vector.broadcast %cst_527 : f32 to vector<8x128xf32>
    %cst_528 = arith.constant 0.000000e+00 : f32
    %899 = vector.broadcast %cst_528 : f32 to vector<8x128xf32>
    %900 = vector.extract_strided_slice %59 {offsets = [0, 0], sizes = [8, 128], strides = [1, 1]} : vector<16x128xf32> to vector<8x128xf32>
    %cst_529 = arith.constant 1.68192434 : f32
    %901 = vector.broadcast %cst_529 : f32 to vector<8x128xf32>
    %902 = arith.subf %900, %901 : vector<8x128xf32>
    %cst_530 = arith.constant 0.000000e+00 : f32
    %903 = vector.broadcast %cst_530 : f32 to vector<8x128xf32>
    %904 = arith.cmpf ogt, %902, %903 : vector<8x128xf32>
    %905 = arith.extui %904 : vector<8x128xi1> to vector<8x128xi32>
    %906 = arith.sitofp %905 : vector<8x128xi32> to vector<8x128xf32>
    %907 = arith.addf %898, %906 : vector<8x128xf32>
    %908 = arith.mulf %906, %902 : vector<8x128xf32>
    %909 = arith.addf %899, %908 : vector<8x128xf32>
    %910 = vector.extract_strided_slice %59 {offsets = [8, 0], sizes = [8, 128], strides = [1, 1]} : vector<16x128xf32> to vector<8x128xf32>
    %cst_531 = arith.constant 1.68192434 : f32
    %911 = vector.broadcast %cst_531 : f32 to vector<8x128xf32>
    %912 = arith.subf %910, %911 : vector<8x128xf32>
    %cst_532 = arith.constant 0.000000e+00 : f32
    %913 = vector.broadcast %cst_532 : f32 to vector<8x128xf32>
    %914 = arith.cmpf ogt, %912, %913 : vector<8x128xf32>
    %915 = arith.extui %914 : vector<8x128xi1> to vector<8x128xi32>
    %916 = arith.sitofp %915 : vector<8x128xi32> to vector<8x128xf32>
    %917 = arith.addf %907, %916 : vector<8x128xf32>
    %918 = arith.mulf %916, %912 : vector<8x128xf32>
    %919 = arith.addf %909, %918 : vector<8x128xf32>
    %c0_533 = arith.constant 0 : index
    %c29 = arith.constant 29 : index
    %c0_534 = arith.constant 0 : index
    %c0_535 = arith.constant 0 : index
    %920 = vector.load %arg7[%c0_533, %c29, %c0_534, %c0_535] : memref<1x73x8x128xf32, #tpu.memory_space<vmem>>, vector<1x1x8x128xf32>
    %921 = vector.shape_cast %920 : vector<1x1x8x128xf32> to vector<8x128xf32>
    %922 = arith.addf %921, %917 : vector<8x128xf32>
    %c0_536 = arith.constant 0 : index
    %c29_537 = arith.constant 29 : index
    %c0_538 = arith.constant 0 : index
    %c0_539 = arith.constant 0 : index
    %923 = vector.load %arg7[%c0_536, %c29_537, %c0_538, %c0_539] : memref<1x73x8x128xf32, #tpu.memory_space<vmem>>, vector<1x1x8x128xf32>
    %924 = vector.shape_cast %923 : vector<1x1x8x128xf32> to vector<8x128xf32>
    %925 = vector.shape_cast %922 : vector<8x128xf32> to vector<1x1x8x128xf32>
    tpu.vector_store %arg7[%c0_536, %c29_537, %c0_538, %c0_539], %925 {strides = array<i32>} : memref<1x73x8x128xf32, #tpu.memory_space<vmem>>, vector<1x1x8x128xf32>,
    %c0_540 = arith.constant 0 : index
    %c61 = arith.constant 61 : index
    %c0_541 = arith.constant 0 : index
    %c0_542 = arith.constant 0 : index
    %926 = vector.load %arg7[%c0_540, %c61, %c0_541, %c0_542] : memref<1x73x8x128xf32, #tpu.memory_space<vmem>>, vector<1x1x8x128xf32>
    %927 = vector.shape_cast %926 : vector<1x1x8x128xf32> to vector<8x128xf32>
    %928 = arith.addf %927, %919 : vector<8x128xf32>
    %c0_543 = arith.constant 0 : index
    %c61_544 = arith.constant 61 : index
    %c0_545 = arith.constant 0 : index
    %c0_546 = arith.constant 0 : index
    %929 = vector.load %arg7[%c0_543, %c61_544, %c0_545, %c0_546] : memref<1x73x8x128xf32, #tpu.memory_space<vmem>>, vector<1x1x8x128xf32>
    %930 = vector.shape_cast %929 : vector<1x1x8x128xf32> to vector<8x128xf32>
    %931 = vector.shape_cast %928 : vector<8x128xf32> to vector<1x1x8x128xf32>
    tpu.vector_store %arg7[%c0_543, %c61_544, %c0_545, %c0_546], %931 {strides = array<i32>} : memref<1x73x8x128xf32, #tpu.memory_space<vmem>>, vector<1x1x8x128xf32>,
    %cst_547 = arith.constant 0.000000e+00 : f32
    %932 = vector.broadcast %cst_547 : f32 to vector<8x128xf32>
    %cst_548 = arith.constant 0.000000e+00 : f32
    %933 = vector.broadcast %cst_548 : f32 to vector<8x128xf32>
    %934 = vector.extract_strided_slice %59 {offsets = [0, 0], sizes = [8, 128], strides = [1, 1]} : vector<16x128xf32> to vector<8x128xf32>
    %cst_549 = arith.constant 2.43835402 : f32
    %935 = vector.broadcast %cst_549 : f32 to vector<8x128xf32>
    %936 = arith.subf %934, %935 : vector<8x128xf32>
    %cst_550 = arith.constant 0.000000e+00 : f32
    %937 = vector.broadcast %cst_550 : f32 to vector<8x128xf32>
    %938 = arith.cmpf ogt, %936, %937 : vector<8x128xf32>
    %939 = arith.extui %938 : vector<8x128xi1> to vector<8x128xi32>
    %940 = arith.sitofp %939 : vector<8x128xi32> to vector<8x128xf32>
    %941 = arith.addf %932, %940 : vector<8x128xf32>
    %942 = arith.mulf %940, %936 : vector<8x128xf32>
    %943 = arith.addf %933, %942 : vector<8x128xf32>
    %944 = vector.extract_strided_slice %59 {offsets = [8, 0], sizes = [8, 128], strides = [1, 1]} : vector<16x128xf32> to vector<8x128xf32>
    %cst_551 = arith.constant 2.43835402 : f32
    %945 = vector.broadcast %cst_551 : f32 to vector<8x128xf32>
    %946 = arith.subf %944, %945 : vector<8x128xf32>
    %cst_552 = arith.constant 0.000000e+00 : f32
    %947 = vector.broadcast %cst_552 : f32 to vector<8x128xf32>
    %948 = arith.cmpf ogt, %946, %947 : vector<8x128xf32>
    %949 = arith.extui %948 : vector<8x128xi1> to vector<8x128xi32>
    %950 = arith.sitofp %949 : vector<8x128xi32> to vector<8x128xf32>
    %951 = arith.addf %941, %950 : vector<8x128xf32>
    %952 = arith.mulf %950, %946 : vector<8x128xf32>
    %953 = arith.addf %943, %952 : vector<8x128xf32>
    %c0_553 = arith.constant 0 : index
    %c30 = arith.constant 30 : index
    %c0_554 = arith.constant 0 : index
    %c0_555 = arith.constant 0 : index
    %954 = vector.load %arg7[%c0_553, %c30, %c0_554, %c0_555] : memref<1x73x8x128xf32, #tpu.memory_space<vmem>>, vector<1x1x8x128xf32>
    %955 = vector.shape_cast %954 : vector<1x1x8x128xf32> to vector<8x128xf32>
    %956 = arith.addf %955, %951 : vector<8x128xf32>
    %c0_556 = arith.constant 0 : index
    %c30_557 = arith.constant 30 : index
    %c0_558 = arith.constant 0 : index
    %c0_559 = arith.constant 0 : index
    %957 = vector.load %arg7[%c0_556, %c30_557, %c0_558, %c0_559] : memref<1x73x8x128xf32, #tpu.memory_space<vmem>>, vector<1x1x8x128xf32>
    %958 = vector.shape_cast %957 : vector<1x1x8x128xf32> to vector<8x128xf32>
    %959 = vector.shape_cast %956 : vector<8x128xf32> to vector<1x1x8x128xf32>
    tpu.vector_store %arg7[%c0_556, %c30_557, %c0_558, %c0_559], %959 {strides = array<i32>} : memref<1x73x8x128xf32, #tpu.memory_space<vmem>>, vector<1x1x8x128xf32>,
    %c0_560 = arith.constant 0 : index
    %c62 = arith.constant 62 : index
    %c0_561 = arith.constant 0 : index
    %c0_562 = arith.constant 0 : index
    %960 = vector.load %arg7[%c0_560, %c62, %c0_561, %c0_562] : memref<1x73x8x128xf32, #tpu.memory_space<vmem>>, vector<1x1x8x128xf32>
    %961 = vector.shape_cast %960 : vector<1x1x8x128xf32> to vector<8x128xf32>
    %962 = arith.addf %961, %953 : vector<8x128xf32>
    %c0_563 = arith.constant 0 : index
    %c62_564 = arith.constant 62 : index
    %c0_565 = arith.constant 0 : index
    %c0_566 = arith.constant 0 : index
    %963 = vector.load %arg7[%c0_563, %c62_564, %c0_565, %c0_566] : memref<1x73x8x128xf32, #tpu.memory_space<vmem>>, vector<1x1x8x128xf32>
    %964 = vector.shape_cast %963 : vector<1x1x8x128xf32> to vector<8x128xf32>
    %965 = vector.shape_cast %962 : vector<8x128xf32> to vector<1x1x8x128xf32>
    tpu.vector_store %arg7[%c0_563, %c62_564, %c0_565, %c0_566], %965 {strides = array<i32>} : memref<1x73x8x128xf32, #tpu.memory_space<vmem>>, vector<1x1x8x128xf32>,
    %cst_567 = arith.constant 0.000000e+00 : f32
    %966 = vector.broadcast %cst_567 : f32 to vector<8x128xf32>
    %cst_568 = arith.constant 0.000000e+00 : f32
    %967 = vector.broadcast %cst_568 : f32 to vector<8x128xf32>
    %968 = vector.extract_strided_slice %59 {offsets = [0, 0], sizes = [8, 128], strides = [1, 1]} : vector<16x128xf32> to vector<8x128xf32>
    %cst_569 = arith.constant 3.53498101 : f32
    %969 = vector.broadcast %cst_569 : f32 to vector<8x128xf32>
    %970 = arith.subf %968, %969 : vector<8x128xf32>
    %cst_570 = arith.constant 0.000000e+00 : f32
    %971 = vector.broadcast %cst_570 : f32 to vector<8x128xf32>
    %972 = arith.cmpf ogt, %970, %971 : vector<8x128xf32>
    %973 = arith.extui %972 : vector<8x128xi1> to vector<8x128xi32>
    %974 = arith.sitofp %973 : vector<8x128xi32> to vector<8x128xf32>
    %975 = arith.addf %966, %974 : vector<8x128xf32>
    %976 = arith.mulf %974, %970 : vector<8x128xf32>
    %977 = arith.addf %967, %976 : vector<8x128xf32>
    %978 = vector.extract_strided_slice %59 {offsets = [8, 0], sizes = [8, 128], strides = [1, 1]} : vector<16x128xf32> to vector<8x128xf32>
    %cst_571 = arith.constant 3.53498101 : f32
    %979 = vector.broadcast %cst_571 : f32 to vector<8x128xf32>
    %980 = arith.subf %978, %979 : vector<8x128xf32>
    %cst_572 = arith.constant 0.000000e+00 : f32
    %981 = vector.broadcast %cst_572 : f32 to vector<8x128xf32>
    %982 = arith.cmpf ogt, %980, %981 : vector<8x128xf32>
    %983 = arith.extui %982 : vector<8x128xi1> to vector<8x128xi32>
    %984 = arith.sitofp %983 : vector<8x128xi32> to vector<8x128xf32>
    %985 = arith.addf %975, %984 : vector<8x128xf32>
    %986 = arith.mulf %984, %980 : vector<8x128xf32>
    %987 = arith.addf %977, %986 : vector<8x128xf32>
    %c0_573 = arith.constant 0 : index
    %c31 = arith.constant 31 : index
    %c0_574 = arith.constant 0 : index
    %c0_575 = arith.constant 0 : index
    %988 = vector.load %arg7[%c0_573, %c31, %c0_574, %c0_575] : memref<1x73x8x128xf32, #tpu.memory_space<vmem>>, vector<1x1x8x128xf32>
    %989 = vector.shape_cast %988 : vector<1x1x8x128xf32> to vector<8x128xf32>
    %990 = arith.addf %989, %985 : vector<8x128xf32>
    %c0_576 = arith.constant 0 : index
    %c31_577 = arith.constant 31 : index
    %c0_578 = arith.constant 0 : index
    %c0_579 = arith.constant 0 : index
    %991 = vector.load %arg7[%c0_576, %c31_577, %c0_578, %c0_579] : memref<1x73x8x128xf32, #tpu.memory_space<vmem>>, vector<1x1x8x128xf32>
    %992 = vector.shape_cast %991 : vector<1x1x8x128xf32> to vector<8x128xf32>
    %993 = vector.shape_cast %990 : vector<8x128xf32> to vector<1x1x8x128xf32>
    tpu.vector_store %arg7[%c0_576, %c31_577, %c0_578, %c0_579], %993 {strides = array<i32>} : memref<1x73x8x128xf32, #tpu.memory_space<vmem>>, vector<1x1x8x128xf32>,
    %c0_580 = arith.constant 0 : index
    %c63 = arith.constant 63 : index
    %c0_581 = arith.constant 0 : index
    %c0_582 = arith.constant 0 : index
    %994 = vector.load %arg7[%c0_580, %c63, %c0_581, %c0_582] : memref<1x73x8x128xf32, #tpu.memory_space<vmem>>, vector<1x1x8x128xf32>
    %995 = vector.shape_cast %994 : vector<1x1x8x128xf32> to vector<8x128xf32>
    %996 = arith.addf %995, %987 : vector<8x128xf32>
    %c0_583 = arith.constant 0 : index
    %c63_584 = arith.constant 63 : index
    %c0_585 = arith.constant 0 : index
    %c0_586 = arith.constant 0 : index
    %997 = vector.load %arg7[%c0_583, %c63_584, %c0_585, %c0_586] : memref<1x73x8x128xf32, #tpu.memory_space<vmem>>, vector<1x1x8x128xf32>
    %998 = vector.shape_cast %997 : vector<1x1x8x128xf32> to vector<8x128xf32>
    %999 = vector.shape_cast %996 : vector<8x128xf32> to vector<1x1x8x128xf32>
    tpu.vector_store %arg7[%c0_583, %c63_584, %c0_585, %c0_586], %999 {strides = array<i32>} : memref<1x73x8x128xf32, #tpu.memory_space<vmem>>, vector<1x1x8x128xf32>,
    %cst_587 = arith.constant 0.000000e+00 : f32
    %1000 = vector.broadcast %cst_587 : f32 to vector<8x128xf32>
    %cst_588 = arith.constant 0.000000e+00 : f32
    %1001 = vector.broadcast %cst_588 : f32 to vector<8x128xf32>
    %1002 = vector.extract_strided_slice %59 {offsets = [0, 0], sizes = [8, 128], strides = [1, 1]} : vector<16x128xf32> to vector<8x128xf32>
    %cst_589 = arith.constant 5.12480593 : f32
    %1003 = vector.broadcast %cst_589 : f32 to vector<8x128xf32>
    %1004 = arith.subf %1002, %1003 : vector<8x128xf32>
    %cst_590 = arith.constant 0.000000e+00 : f32
    %1005 = vector.broadcast %cst_590 : f32 to vector<8x128xf32>
    %1006 = arith.cmpf ogt, %1004, %1005 : vector<8x128xf32>
    %1007 = arith.extui %1006 : vector<8x128xi1> to vector<8x128xi32>
    %1008 = arith.sitofp %1007 : vector<8x128xi32> to vector<8x128xf32>
    %1009 = arith.addf %1000, %1008 : vector<8x128xf32>
    %1010 = arith.mulf %1008, %1004 : vector<8x128xf32>
    %1011 = arith.addf %1001, %1010 : vector<8x128xf32>
    %1012 = vector.extract_strided_slice %59 {offsets = [8, 0], sizes = [8, 128], strides = [1, 1]} : vector<16x128xf32> to vector<8x128xf32>
    %cst_591 = arith.constant 5.12480593 : f32
    %1013 = vector.broadcast %cst_591 : f32 to vector<8x128xf32>
    %1014 = arith.subf %1012, %1013 : vector<8x128xf32>
    %cst_592 = arith.constant 0.000000e+00 : f32
    %1015 = vector.broadcast %cst_592 : f32 to vector<8x128xf32>
    %1016 = arith.cmpf ogt, %1014, %1015 : vector<8x128xf32>
    %1017 = arith.extui %1016 : vector<8x128xi1> to vector<8x128xi32>
    %1018 = arith.sitofp %1017 : vector<8x128xi32> to vector<8x128xf32>
    %1019 = arith.addf %1009, %1018 : vector<8x128xf32>
    %1020 = arith.mulf %1018, %1014 : vector<8x128xf32>
    %1021 = arith.addf %1011, %1020 : vector<8x128xf32>
    %c0_593 = arith.constant 0 : index
    %c32 = arith.constant 32 : index
    %c0_594 = arith.constant 0 : index
    %c0_595 = arith.constant 0 : index
    %1022 = vector.load %arg7[%c0_593, %c32, %c0_594, %c0_595] : memref<1x73x8x128xf32, #tpu.memory_space<vmem>>, vector<1x1x8x128xf32>
    %1023 = vector.shape_cast %1022 : vector<1x1x8x128xf32> to vector<8x128xf32>
    %1024 = arith.addf %1023, %1019 : vector<8x128xf32>
    %c0_596 = arith.constant 0 : index
    %c32_597 = arith.constant 32 : index
    %c0_598 = arith.constant 0 : index
    %c0_599 = arith.constant 0 : index
    %1025 = vector.load %arg7[%c0_596, %c32_597, %c0_598, %c0_599] : memref<1x73x8x128xf32, #tpu.memory_space<vmem>>, vector<1x1x8x128xf32>
    %1026 = vector.shape_cast %1025 : vector<1x1x8x128xf32> to vector<8x128xf32>
    %1027 = vector.shape_cast %1024 : vector<8x128xf32> to vector<1x1x8x128xf32>
    tpu.vector_store %arg7[%c0_596, %c32_597, %c0_598, %c0_599], %1027 {strides = array<i32>} : memref<1x73x8x128xf32, #tpu.memory_space<vmem>>, vector<1x1x8x128xf32>,
    %c0_600 = arith.constant 0 : index
    %c64 = arith.constant 64 : index
    %c0_601 = arith.constant 0 : index
    %c0_602 = arith.constant 0 : index
    %1028 = vector.load %arg7[%c0_600, %c64, %c0_601, %c0_602] : memref<1x73x8x128xf32, #tpu.memory_space<vmem>>, vector<1x1x8x128xf32>
    %1029 = vector.shape_cast %1028 : vector<1x1x8x128xf32> to vector<8x128xf32>
    %1030 = arith.addf %1029, %1021 : vector<8x128xf32>
    %c0_603 = arith.constant 0 : index
    %c64_604 = arith.constant 64 : index
    %c0_605 = arith.constant 0 : index
    %c0_606 = arith.constant 0 : index
    %1031 = vector.load %arg7[%c0_603, %c64_604, %c0_605, %c0_606] : memref<1x73x8x128xf32, #tpu.memory_space<vmem>>, vector<1x1x8x128xf32>
    %1032 = vector.shape_cast %1031 : vector<1x1x8x128xf32> to vector<8x128xf32>
    %1033 = vector.shape_cast %1030 : vector<8x128xf32> to vector<1x1x8x128xf32>
    tpu.vector_store %arg7[%c0_603, %c64_604, %c0_605, %c0_606], %1033 {strides = array<i32>} : memref<1x73x8x128xf32, #tpu.memory_space<vmem>>, vector<1x1x8x128xf32>,
    %cst_607 = arith.constant 0.000000e+00 : f32
    %1034 = vector.broadcast %cst_607 : f32 to vector<8x128xf32>
    %cst_608 = arith.constant 0.000000e+00 : f32
    %1035 = vector.broadcast %cst_608 : f32 to vector<8x128xf32>
    %1036 = vector.extract_strided_slice %59 {offsets = [0, 0], sizes = [8, 128], strides = [1, 1]} : vector<16x128xf32> to vector<8x128xf32>
    %cst_609 = arith.constant 7.42963934 : f32
    %1037 = vector.broadcast %cst_609 : f32 to vector<8x128xf32>
    %1038 = arith.subf %1036, %1037 : vector<8x128xf32>
    %cst_610 = arith.constant 0.000000e+00 : f32
    %1039 = vector.broadcast %cst_610 : f32 to vector<8x128xf32>
    %1040 = arith.cmpf ogt, %1038, %1039 : vector<8x128xf32>
    %1041 = arith.extui %1040 : vector<8x128xi1> to vector<8x128xi32>
    %1042 = arith.sitofp %1041 : vector<8x128xi32> to vector<8x128xf32>
    %1043 = arith.addf %1034, %1042 : vector<8x128xf32>
    %1044 = arith.mulf %1042, %1038 : vector<8x128xf32>
    %1045 = arith.addf %1035, %1044 : vector<8x128xf32>
    %1046 = vector.extract_strided_slice %59 {offsets = [8, 0], sizes = [8, 128], strides = [1, 1]} : vector<16x128xf32> to vector<8x128xf32>
    %cst_611 = arith.constant 7.42963934 : f32
    %1047 = vector.broadcast %cst_611 : f32 to vector<8x128xf32>
    %1048 = arith.subf %1046, %1047 : vector<8x128xf32>
    %cst_612 = arith.constant 0.000000e+00 : f32
    %1049 = vector.broadcast %cst_612 : f32 to vector<8x128xf32>
    %1050 = arith.cmpf ogt, %1048, %1049 : vector<8x128xf32>
    %1051 = arith.extui %1050 : vector<8x128xi1> to vector<8x128xi32>
    %1052 = arith.sitofp %1051 : vector<8x128xi32> to vector<8x128xf32>
    %1053 = arith.addf %1043, %1052 : vector<8x128xf32>
    %1054 = arith.mulf %1052, %1048 : vector<8x128xf32>
    %1055 = arith.addf %1045, %1054 : vector<8x128xf32>
    %c0_613 = arith.constant 0 : index
    %c33 = arith.constant 33 : index
    %c0_614 = arith.constant 0 : index
    %c0_615 = arith.constant 0 : index
    %1056 = vector.load %arg7[%c0_613, %c33, %c0_614, %c0_615] : memref<1x73x8x128xf32, #tpu.memory_space<vmem>>, vector<1x1x8x128xf32>
    %1057 = vector.shape_cast %1056 : vector<1x1x8x128xf32> to vector<8x128xf32>
    %1058 = arith.addf %1057, %1053 : vector<8x128xf32>
    %c0_616 = arith.constant 0 : index
    %c33_617 = arith.constant 33 : index
    %c0_618 = arith.constant 0 : index
    %c0_619 = arith.constant 0 : index
    %1059 = vector.load %arg7[%c0_616, %c33_617, %c0_618, %c0_619] : memref<1x73x8x128xf32, #tpu.memory_space<vmem>>, vector<1x1x8x128xf32>
    %1060 = vector.shape_cast %1059 : vector<1x1x8x128xf32> to vector<8x128xf32>
    %1061 = vector.shape_cast %1058 : vector<8x128xf32> to vector<1x1x8x128xf32>
    tpu.vector_store %arg7[%c0_616, %c33_617, %c0_618, %c0_619], %1061 {strides = array<i32>} : memref<1x73x8x128xf32, #tpu.memory_space<vmem>>, vector<1x1x8x128xf32>,
    %c0_620 = arith.constant 0 : index
    %c65 = arith.constant 65 : index
    %c0_621 = arith.constant 0 : index
    %c0_622 = arith.constant 0 : index
    %1062 = vector.load %arg7[%c0_620, %c65, %c0_621, %c0_622] : memref<1x73x8x128xf32, #tpu.memory_space<vmem>>, vector<1x1x8x128xf32>
    %1063 = vector.shape_cast %1062 : vector<1x1x8x128xf32> to vector<8x128xf32>
    %1064 = arith.addf %1063, %1055 : vector<8x128xf32>
    %c0_623 = arith.constant 0 : index
    %c65_624 = arith.constant 65 : index
    %c0_625 = arith.constant 0 : index
    %c0_626 = arith.constant 0 : index
    %1065 = vector.load %arg7[%c0_623, %c65_624, %c0_625, %c0_626] : memref<1x73x8x128xf32, #tpu.memory_space<vmem>>, vector<1x1x8x128xf32>
    %1066 = vector.shape_cast %1065 : vector<1x1x8x128xf32> to vector<8x128xf32>
    %1067 = vector.shape_cast %1064 : vector<8x128xf32> to vector<1x1x8x128xf32>
    tpu.vector_store %arg7[%c0_623, %c65_624, %c0_625, %c0_626], %1067 {strides = array<i32>} : memref<1x73x8x128xf32, #tpu.memory_space<vmem>>, vector<1x1x8x128xf32>,
    %cst_627 = arith.constant 0.000000e+00 : f32
    %1068 = vector.broadcast %cst_627 : f32 to vector<8x128xf32>
    %cst_628 = arith.constant 0.000000e+00 : f32
    %1069 = vector.broadcast %cst_628 : f32 to vector<8x128xf32>
    %1070 = vector.extract_strided_slice %59 {offsets = [0, 0], sizes = [8, 128], strides = [1, 1]} : vector<16x128xf32> to vector<8x128xf32>
    %cst_629 = arith.constant 10.7710505 : f32
    %1071 = vector.broadcast %cst_629 : f32 to vector<8x128xf32>
    %1072 = arith.subf %1070, %1071 : vector<8x128xf32>
    %cst_630 = arith.constant 0.000000e+00 : f32
    %1073 = vector.broadcast %cst_630 : f32 to vector<8x128xf32>
    %1074 = arith.cmpf ogt, %1072, %1073 : vector<8x128xf32>
    %1075 = arith.extui %1074 : vector<8x128xi1> to vector<8x128xi32>
    %1076 = arith.sitofp %1075 : vector<8x128xi32> to vector<8x128xf32>
    %1077 = arith.addf %1068, %1076 : vector<8x128xf32>
    %1078 = arith.mulf %1076, %1072 : vector<8x128xf32>
    %1079 = arith.addf %1069, %1078 : vector<8x128xf32>
    %1080 = vector.extract_strided_slice %59 {offsets = [8, 0], sizes = [8, 128], strides = [1, 1]} : vector<16x128xf32> to vector<8x128xf32>
    %cst_631 = arith.constant 10.7710505 : f32
    %1081 = vector.broadcast %cst_631 : f32 to vector<8x128xf32>
    %1082 = arith.subf %1080, %1081 : vector<8x128xf32>
    %cst_632 = arith.constant 0.000000e+00 : f32
    %1083 = vector.broadcast %cst_632 : f32 to vector<8x128xf32>
    %1084 = arith.cmpf ogt, %1082, %1083 : vector<8x128xf32>
    %1085 = arith.extui %1084 : vector<8x128xi1> to vector<8x128xi32>
    %1086 = arith.sitofp %1085 : vector<8x128xi32> to vector<8x128xf32>
    %1087 = arith.addf %1077, %1086 : vector<8x128xf32>
    %1088 = arith.mulf %1086, %1082 : vector<8x128xf32>
    %1089 = arith.addf %1079, %1088 : vector<8x128xf32>
    %c0_633 = arith.constant 0 : index
    %c34 = arith.constant 34 : index
    %c0_634 = arith.constant 0 : index
    %c0_635 = arith.constant 0 : index
    %1090 = vector.load %arg7[%c0_633, %c34, %c0_634, %c0_635] : memref<1x73x8x128xf32, #tpu.memory_space<vmem>>, vector<1x1x8x128xf32>
    %1091 = vector.shape_cast %1090 : vector<1x1x8x128xf32> to vector<8x128xf32>
    %1092 = arith.addf %1091, %1087 : vector<8x128xf32>
    %c0_636 = arith.constant 0 : index
    %c34_637 = arith.constant 34 : index
    %c0_638 = arith.constant 0 : index
    %c0_639 = arith.constant 0 : index
    %1093 = vector.load %arg7[%c0_636, %c34_637, %c0_638, %c0_639] : memref<1x73x8x128xf32, #tpu.memory_space<vmem>>, vector<1x1x8x128xf32>
    %1094 = vector.shape_cast %1093 : vector<1x1x8x128xf32> to vector<8x128xf32>
    %1095 = vector.shape_cast %1092 : vector<8x128xf32> to vector<1x1x8x128xf32>
    tpu.vector_store %arg7[%c0_636, %c34_637, %c0_638, %c0_639], %1095 {strides = array<i32>} : memref<1x73x8x128xf32, #tpu.memory_space<vmem>>, vector<1x1x8x128xf32>,
    %c0_640 = arith.constant 0 : index
    %c66 = arith.constant 66 : index
    %c0_641 = arith.constant 0 : index
    %c0_642 = arith.constant 0 : index
    %1096 = vector.load %arg7[%c0_640, %c66, %c0_641, %c0_642] : memref<1x73x8x128xf32, #tpu.memory_space<vmem>>, vector<1x1x8x128xf32>
    %1097 = vector.shape_cast %1096 : vector<1x1x8x128xf32> to vector<8x128xf32>
    %1098 = arith.addf %1097, %1089 : vector<8x128xf32>
    %c0_643 = arith.constant 0 : index
    %c66_644 = arith.constant 66 : index
    %c0_645 = arith.constant 0 : index
    %c0_646 = arith.constant 0 : index
    %1099 = vector.load %arg7[%c0_643, %c66_644, %c0_645, %c0_646] : memref<1x73x8x128xf32, #tpu.memory_space<vmem>>, vector<1x1x8x128xf32>
    %1100 = vector.shape_cast %1099 : vector<1x1x8x128xf32> to vector<8x128xf32>
    %1101 = vector.shape_cast %1098 : vector<8x128xf32> to vector<1x1x8x128xf32>
    tpu.vector_store %arg7[%c0_643, %c66_644, %c0_645, %c0_646], %1101 {strides = array<i32>} : memref<1x73x8x128xf32, #tpu.memory_space<vmem>>, vector<1x1x8x128xf32>,
    %cst_647 = arith.constant 0.000000e+00 : f32
    %1102 = vector.broadcast %cst_647 : f32 to vector<8x128xf32>
    %cst_648 = arith.constant 0.000000e+00 : f32
    %1103 = vector.broadcast %cst_648 : f32 to vector<8x128xf32>
    %1104 = vector.extract_strided_slice %59 {offsets = [0, 0], sizes = [8, 128], strides = [1, 1]} : vector<16x128xf32> to vector<8x128xf32>
    %cst_649 = arith.constant 15.6152296 : f32
    %1105 = vector.broadcast %cst_649 : f32 to vector<8x128xf32>
    %1106 = arith.subf %1104, %1105 : vector<8x128xf32>
    %cst_650 = arith.constant 0.000000e+00 : f32
    %1107 = vector.broadcast %cst_650 : f32 to vector<8x128xf32>
    %1108 = arith.cmpf ogt, %1106, %1107 : vector<8x128xf32>
    %1109 = arith.extui %1108 : vector<8x128xi1> to vector<8x128xi32>
    %1110 = arith.sitofp %1109 : vector<8x128xi32> to vector<8x128xf32>
    %1111 = arith.addf %1102, %1110 : vector<8x128xf32>
    %1112 = arith.mulf %1110, %1106 : vector<8x128xf32>
    %1113 = arith.addf %1103, %1112 : vector<8x128xf32>
    %1114 = vector.extract_strided_slice %59 {offsets = [8, 0], sizes = [8, 128], strides = [1, 1]} : vector<16x128xf32> to vector<8x128xf32>
    %cst_651 = arith.constant 15.6152296 : f32
    %1115 = vector.broadcast %cst_651 : f32 to vector<8x128xf32>
    %1116 = arith.subf %1114, %1115 : vector<8x128xf32>
    %cst_652 = arith.constant 0.000000e+00 : f32
    %1117 = vector.broadcast %cst_652 : f32 to vector<8x128xf32>
    %1118 = arith.cmpf ogt, %1116, %1117 : vector<8x128xf32>
    %1119 = arith.extui %1118 : vector<8x128xi1> to vector<8x128xi32>
    %1120 = arith.sitofp %1119 : vector<8x128xi32> to vector<8x128xf32>
    %1121 = arith.addf %1111, %1120 : vector<8x128xf32>
    %1122 = arith.mulf %1120, %1116 : vector<8x128xf32>
    %1123 = arith.addf %1113, %1122 : vector<8x128xf32>
    %c0_653 = arith.constant 0 : index
    %c35 = arith.constant 35 : index
    %c0_654 = arith.constant 0 : index
    %c0_655 = arith.constant 0 : index
    %1124 = vector.load %arg7[%c0_653, %c35, %c0_654, %c0_655] : memref<1x73x8x128xf32, #tpu.memory_space<vmem>>, vector<1x1x8x128xf32>
    %1125 = vector.shape_cast %1124 : vector<1x1x8x128xf32> to vector<8x128xf32>
    %1126 = arith.addf %1125, %1121 : vector<8x128xf32>
    %c0_656 = arith.constant 0 : index
    %c35_657 = arith.constant 35 : index
    %c0_658 = arith.constant 0 : index
    %c0_659 = arith.constant 0 : index
    %1127 = vector.load %arg7[%c0_656, %c35_657, %c0_658, %c0_659] : memref<1x73x8x128xf32, #tpu.memory_space<vmem>>, vector<1x1x8x128xf32>
    %1128 = vector.shape_cast %1127 : vector<1x1x8x128xf32> to vector<8x128xf32>
    %1129 = vector.shape_cast %1126 : vector<8x128xf32> to vector<1x1x8x128xf32>
    tpu.vector_store %arg7[%c0_656, %c35_657, %c0_658, %c0_659], %1129 {strides = array<i32>} : memref<1x73x8x128xf32, #tpu.memory_space<vmem>>, vector<1x1x8x128xf32>,
    %c0_660 = arith.constant 0 : index
    %c67 = arith.constant 67 : index
    %c0_661 = arith.constant 0 : index
    %c0_662 = arith.constant 0 : index
    %1130 = vector.load %arg7[%c0_660, %c67, %c0_661, %c0_662] : memref<1x73x8x128xf32, #tpu.memory_space<vmem>>, vector<1x1x8x128xf32>
    %1131 = vector.shape_cast %1130 : vector<1x1x8x128xf32> to vector<8x128xf32>
    %1132 = arith.addf %1131, %1123 : vector<8x128xf32>
    %c0_663 = arith.constant 0 : index
    %c67_664 = arith.constant 67 : index
    %c0_665 = arith.constant 0 : index
    %c0_666 = arith.constant 0 : index
    %1133 = vector.load %arg7[%c0_663, %c67_664, %c0_665, %c0_666] : memref<1x73x8x128xf32, #tpu.memory_space<vmem>>, vector<1x1x8x128xf32>
    %1134 = vector.shape_cast %1133 : vector<1x1x8x128xf32> to vector<8x128xf32>
    %1135 = vector.shape_cast %1132 : vector<8x128xf32> to vector<1x1x8x128xf32>
    tpu.vector_store %arg7[%c0_663, %c67_664, %c0_665, %c0_666], %1135 {strides = array<i32>} : memref<1x73x8x128xf32, #tpu.memory_space<vmem>>, vector<1x1x8x128xf32>,
    %cst_667 = arith.constant 0.000000e+00 : f32
    %1136 = vector.broadcast %cst_667 : f32 to vector<8x128xf32>
    %cst_668 = arith.constant 0.000000e+00 : f32
    %1137 = vector.broadcast %cst_668 : f32 to vector<8x128xf32>
    %1138 = vector.extract_strided_slice %59 {offsets = [0, 0], sizes = [8, 128], strides = [1, 1]} : vector<16x128xf32> to vector<8x128xf32>
    %cst_669 = arith.constant 22.6380348 : f32
    %1139 = vector.broadcast %cst_669 : f32 to vector<8x128xf32>
    %1140 = arith.subf %1138, %1139 : vector<8x128xf32>
    %cst_670 = arith.constant 0.000000e+00 : f32
    %1141 = vector.broadcast %cst_670 : f32 to vector<8x128xf32>
    %1142 = arith.cmpf ogt, %1140, %1141 : vector<8x128xf32>
    %1143 = arith.extui %1142 : vector<8x128xi1> to vector<8x128xi32>
    %1144 = arith.sitofp %1143 : vector<8x128xi32> to vector<8x128xf32>
    %1145 = arith.addf %1136, %1144 : vector<8x128xf32>
    %1146 = arith.mulf %1144, %1140 : vector<8x128xf32>
    %1147 = arith.addf %1137, %1146 : vector<8x128xf32>
    %1148 = vector.extract_strided_slice %59 {offsets = [8, 0], sizes = [8, 128], strides = [1, 1]} : vector<16x128xf32> to vector<8x128xf32>
    %cst_671 = arith.constant 22.6380348 : f32
    %1149 = vector.broadcast %cst_671 : f32 to vector<8x128xf32>
    %1150 = arith.subf %1148, %1149 : vector<8x128xf32>
    %cst_672 = arith.constant 0.000000e+00 : f32
    %1151 = vector.broadcast %cst_672 : f32 to vector<8x128xf32>
    %1152 = arith.cmpf ogt, %1150, %1151 : vector<8x128xf32>
    %1153 = arith.extui %1152 : vector<8x128xi1> to vector<8x128xi32>
    %1154 = arith.sitofp %1153 : vector<8x128xi32> to vector<8x128xf32>
    %1155 = arith.addf %1145, %1154 : vector<8x128xf32>
    %1156 = arith.mulf %1154, %1150 : vector<8x128xf32>
    %1157 = arith.addf %1147, %1156 : vector<8x128xf32>
    %c0_673 = arith.constant 0 : index
    %c36 = arith.constant 36 : index
    %c0_674 = arith.constant 0 : index
    %c0_675 = arith.constant 0 : index
    %1158 = vector.load %arg7[%c0_673, %c36, %c0_674, %c0_675] : memref<1x73x8x128xf32, #tpu.memory_space<vmem>>, vector<1x1x8x128xf32>
    %1159 = vector.shape_cast %1158 : vector<1x1x8x128xf32> to vector<8x128xf32>
    %1160 = arith.addf %1159, %1155 : vector<8x128xf32>
    %c0_676 = arith.constant 0 : index
    %c36_677 = arith.constant 36 : index
    %c0_678 = arith.constant 0 : index
    %c0_679 = arith.constant 0 : index
    %1161 = vector.load %arg7[%c0_676, %c36_677, %c0_678, %c0_679] : memref<1x73x8x128xf32, #tpu.memory_space<vmem>>, vector<1x1x8x128xf32>
    %1162 = vector.shape_cast %1161 : vector<1x1x8x128xf32> to vector<8x128xf32>
    %1163 = vector.shape_cast %1160 : vector<8x128xf32> to vector<1x1x8x128xf32>
    tpu.vector_store %arg7[%c0_676, %c36_677, %c0_678, %c0_679], %1163 {strides = array<i32>} : memref<1x73x8x128xf32, #tpu.memory_space<vmem>>, vector<1x1x8x128xf32>,
    %c0_680 = arith.constant 0 : index
    %c68 = arith.constant 68 : index
    %c0_681 = arith.constant 0 : index
    %c0_682 = arith.constant 0 : index
    %1164 = vector.load %arg7[%c0_680, %c68, %c0_681, %c0_682] : memref<1x73x8x128xf32, #tpu.memory_space<vmem>>, vector<1x1x8x128xf32>
    %1165 = vector.shape_cast %1164 : vector<1x1x8x128xf32> to vector<8x128xf32>
    %1166 = arith.addf %1165, %1157 : vector<8x128xf32>
    %c0_683 = arith.constant 0 : index
    %c68_684 = arith.constant 68 : index
    %c0_685 = arith.constant 0 : index
    %c0_686 = arith.constant 0 : index
    %1167 = vector.load %arg7[%c0_683, %c68_684, %c0_685, %c0_686] : memref<1x73x8x128xf32, #tpu.memory_space<vmem>>, vector<1x1x8x128xf32>
    %1168 = vector.shape_cast %1167 : vector<1x1x8x128xf32> to vector<8x128xf32>
    %1169 = vector.shape_cast %1166 : vector<8x128xf32> to vector<1x1x8x128xf32>
    tpu.vector_store %arg7[%c0_683, %c68_684, %c0_685, %c0_686], %1169 {strides = array<i32>} : memref<1x73x8x128xf32, #tpu.memory_space<vmem>>, vector<1x1x8x128xf32>,
    %cst_687 = arith.constant 0.000000e+00 : f32
    %1170 = vector.broadcast %cst_687 : f32 to vector<8x128xf32>
    %cst_688 = arith.constant 0.000000e+00 : f32
    %1171 = vector.broadcast %cst_688 : f32 to vector<8x128xf32>
    %1172 = vector.extract_strided_slice %59 {offsets = [0, 0], sizes = [8, 128], strides = [1, 1]} : vector<16x128xf32> to vector<8x128xf32>
    %cst_689 = arith.constant 32.8192787 : f32
    %1173 = vector.broadcast %cst_689 : f32 to vector<8x128xf32>
    %1174 = arith.subf %1172, %1173 : vector<8x128xf32>
    %cst_690 = arith.constant 0.000000e+00 : f32
    %1175 = vector.broadcast %cst_690 : f32 to vector<8x128xf32>
    %1176 = arith.cmpf ogt, %1174, %1175 : vector<8x128xf32>
    %1177 = arith.extui %1176 : vector<8x128xi1> to vector<8x128xi32>
    %1178 = arith.sitofp %1177 : vector<8x128xi32> to vector<8x128xf32>
    %1179 = arith.addf %1170, %1178 : vector<8x128xf32>
    %1180 = arith.mulf %1178, %1174 : vector<8x128xf32>
    %1181 = arith.addf %1171, %1180 : vector<8x128xf32>
    %1182 = vector.extract_strided_slice %59 {offsets = [8, 0], sizes = [8, 128], strides = [1, 1]} : vector<16x128xf32> to vector<8x128xf32>
    %cst_691 = arith.constant 32.8192787 : f32
    %1183 = vector.broadcast %cst_691 : f32 to vector<8x128xf32>
    %1184 = arith.subf %1182, %1183 : vector<8x128xf32>
    %cst_692 = arith.constant 0.000000e+00 : f32
    %1185 = vector.broadcast %cst_692 : f32 to vector<8x128xf32>
    %1186 = arith.cmpf ogt, %1184, %1185 : vector<8x128xf32>
    %1187 = arith.extui %1186 : vector<8x128xi1> to vector<8x128xi32>
    %1188 = arith.sitofp %1187 : vector<8x128xi32> to vector<8x128xf32>
    %1189 = arith.addf %1179, %1188 : vector<8x128xf32>
    %1190 = arith.mulf %1188, %1184 : vector<8x128xf32>
    %1191 = arith.addf %1181, %1190 : vector<8x128xf32>
    %c0_693 = arith.constant 0 : index
    %c37 = arith.constant 37 : index
    %c0_694 = arith.constant 0 : index
    %c0_695 = arith.constant 0 : index
    %1192 = vector.load %arg7[%c0_693, %c37, %c0_694, %c0_695] : memref<1x73x8x128xf32, #tpu.memory_space<vmem>>, vector<1x1x8x128xf32>
    %1193 = vector.shape_cast %1192 : vector<1x1x8x128xf32> to vector<8x128xf32>
    %1194 = arith.addf %1193, %1189 : vector<8x128xf32>
    %c0_696 = arith.constant 0 : index
    %c37_697 = arith.constant 37 : index
    %c0_698 = arith.constant 0 : index
    %c0_699 = arith.constant 0 : index
    %1195 = vector.load %arg7[%c0_696, %c37_697, %c0_698, %c0_699] : memref<1x73x8x128xf32, #tpu.memory_space<vmem>>, vector<1x1x8x128xf32>
    %1196 = vector.shape_cast %1195 : vector<1x1x8x128xf32> to vector<8x128xf32>
    %1197 = vector.shape_cast %1194 : vector<8x128xf32> to vector<1x1x8x128xf32>
    tpu.vector_store %arg7[%c0_696, %c37_697, %c0_698, %c0_699], %1197 {strides = array<i32>} : memref<1x73x8x128xf32, #tpu.memory_space<vmem>>, vector<1x1x8x128xf32>,
    %c0_700 = arith.constant 0 : index
    %c69 = arith.constant 69 : index
    %c0_701 = arith.constant 0 : index
    %c0_702 = arith.constant 0 : index
    %1198 = vector.load %arg7[%c0_700, %c69, %c0_701, %c0_702] : memref<1x73x8x128xf32, #tpu.memory_space<vmem>>, vector<1x1x8x128xf32>
    %1199 = vector.shape_cast %1198 : vector<1x1x8x128xf32> to vector<8x128xf32>
    %1200 = arith.addf %1199, %1191 : vector<8x128xf32>
    %c0_703 = arith.constant 0 : index
    %c69_704 = arith.constant 69 : index
    %c0_705 = arith.constant 0 : index
    %c0_706 = arith.constant 0 : index
    %1201 = vector.load %arg7[%c0_703, %c69_704, %c0_705, %c0_706] : memref<1x73x8x128xf32, #tpu.memory_space<vmem>>, vector<1x1x8x128xf32>
    %1202 = vector.shape_cast %1201 : vector<1x1x8x128xf32> to vector<8x128xf32>
    %1203 = vector.shape_cast %1200 : vector<8x128xf32> to vector<1x1x8x128xf32>
    tpu.vector_store %arg7[%c0_703, %c69_704, %c0_705, %c0_706], %1203 {strides = array<i32>} : memref<1x73x8x128xf32, #tpu.memory_space<vmem>>, vector<1x1x8x128xf32>,
    %cst_707 = arith.constant 0.000000e+00 : f32
    %1204 = vector.broadcast %cst_707 : f32 to vector<8x128xf32>
    %cst_708 = arith.constant 0.000000e+00 : f32
    %1205 = vector.broadcast %cst_708 : f32 to vector<8x128xf32>
    %1206 = vector.extract_strided_slice %59 {offsets = [0, 0], sizes = [8, 128], strides = [1, 1]} : vector<16x128xf32> to vector<8x128xf32>
    %cst_709 = arith.constant 47.5794449 : f32
    %1207 = vector.broadcast %cst_709 : f32 to vector<8x128xf32>
    %1208 = arith.subf %1206, %1207 : vector<8x128xf32>
    %cst_710 = arith.constant 0.000000e+00 : f32
    %1209 = vector.broadcast %cst_710 : f32 to vector<8x128xf32>
    %1210 = arith.cmpf ogt, %1208, %1209 : vector<8x128xf32>
    %1211 = arith.extui %1210 : vector<8x128xi1> to vector<8x128xi32>
    %1212 = arith.sitofp %1211 : vector<8x128xi32> to vector<8x128xf32>
    %1213 = arith.addf %1204, %1212 : vector<8x128xf32>
    %1214 = arith.mulf %1212, %1208 : vector<8x128xf32>
    %1215 = arith.addf %1205, %1214 : vector<8x128xf32>
    %1216 = vector.extract_strided_slice %59 {offsets = [8, 0], sizes = [8, 128], strides = [1, 1]} : vector<16x128xf32> to vector<8x128xf32>
    %cst_711 = arith.constant 47.5794449 : f32
    %1217 = vector.broadcast %cst_711 : f32 to vector<8x128xf32>
    %1218 = arith.subf %1216, %1217 : vector<8x128xf32>
    %cst_712 = arith.constant 0.000000e+00 : f32
    %1219 = vector.broadcast %cst_712 : f32 to vector<8x128xf32>
    %1220 = arith.cmpf ogt, %1218, %1219 : vector<8x128xf32>
    %1221 = arith.extui %1220 : vector<8x128xi1> to vector<8x128xi32>
    %1222 = arith.sitofp %1221 : vector<8x128xi32> to vector<8x128xf32>
    %1223 = arith.addf %1213, %1222 : vector<8x128xf32>
    %1224 = arith.mulf %1222, %1218 : vector<8x128xf32>
    %1225 = arith.addf %1215, %1224 : vector<8x128xf32>
    %c0_713 = arith.constant 0 : index
    %c38 = arith.constant 38 : index
    %c0_714 = arith.constant 0 : index
    %c0_715 = arith.constant 0 : index
    %1226 = vector.load %arg7[%c0_713, %c38, %c0_714, %c0_715] : memref<1x73x8x128xf32, #tpu.memory_space<vmem>>, vector<1x1x8x128xf32>
    %1227 = vector.shape_cast %1226 : vector<1x1x8x128xf32> to vector<8x128xf32>
    %1228 = arith.addf %1227, %1223 : vector<8x128xf32>
    %c0_716 = arith.constant 0 : index
    %c38_717 = arith.constant 38 : index
    %c0_718 = arith.constant 0 : index
    %c0_719 = arith.constant 0 : index
    %1229 = vector.load %arg7[%c0_716, %c38_717, %c0_718, %c0_719] : memref<1x73x8x128xf32, #tpu.memory_space<vmem>>, vector<1x1x8x128xf32>
    %1230 = vector.shape_cast %1229 : vector<1x1x8x128xf32> to vector<8x128xf32>
    %1231 = vector.shape_cast %1228 : vector<8x128xf32> to vector<1x1x8x128xf32>
    tpu.vector_store %arg7[%c0_716, %c38_717, %c0_718, %c0_719], %1231 {strides = array<i32>} : memref<1x73x8x128xf32, #tpu.memory_space<vmem>>, vector<1x1x8x128xf32>,
    %c0_720 = arith.constant 0 : index
    %c70 = arith.constant 70 : index
    %c0_721 = arith.constant 0 : index
    %c0_722 = arith.constant 0 : index
    %1232 = vector.load %arg7[%c0_720, %c70, %c0_721, %c0_722] : memref<1x73x8x128xf32, #tpu.memory_space<vmem>>, vector<1x1x8x128xf32>
    %1233 = vector.shape_cast %1232 : vector<1x1x8x128xf32> to vector<8x128xf32>
    %1234 = arith.addf %1233, %1225 : vector<8x128xf32>
    %c0_723 = arith.constant 0 : index
    %c70_724 = arith.constant 70 : index
    %c0_725 = arith.constant 0 : index
    %c0_726 = arith.constant 0 : index
    %1235 = vector.load %arg7[%c0_723, %c70_724, %c0_725, %c0_726] : memref<1x73x8x128xf32, #tpu.memory_space<vmem>>, vector<1x1x8x128xf32>
    %1236 = vector.shape_cast %1235 : vector<1x1x8x128xf32> to vector<8x128xf32>
    %1237 = vector.shape_cast %1234 : vector<8x128xf32> to vector<1x1x8x128xf32>
    tpu.vector_store %arg7[%c0_723, %c70_724, %c0_725, %c0_726], %1237 {strides = array<i32>} : memref<1x73x8x128xf32, #tpu.memory_space<vmem>>, vector<1x1x8x128xf32>,
    %cst_727 = arith.constant 0.000000e+00 : f32
    %1238 = vector.broadcast %cst_727 : f32 to vector<8x128xf32>
    %cst_728 = arith.constant 0.000000e+00 : f32
    %1239 = vector.broadcast %cst_728 : f32 to vector<8x128xf32>
    %1240 = vector.extract_strided_slice %59 {offsets = [0, 0], sizes = [8, 128], strides = [1, 1]} : vector<16x128xf32> to vector<8x128xf32>
    %cst_729 = arith.constant 68.9778519 : f32
    %1241 = vector.broadcast %cst_729 : f32 to vector<8x128xf32>
    %1242 = arith.subf %1240, %1241 : vector<8x128xf32>
    %cst_730 = arith.constant 0.000000e+00 : f32
    %1243 = vector.broadcast %cst_730 : f32 to vector<8x128xf32>
    %1244 = arith.cmpf ogt, %1242, %1243 : vector<8x128xf32>
    %1245 = arith.extui %1244 : vector<8x128xi1> to vector<8x128xi32>
    %1246 = arith.sitofp %1245 : vector<8x128xi32> to vector<8x128xf32>
    %1247 = arith.addf %1238, %1246 : vector<8x128xf32>
    %1248 = arith.mulf %1246, %1242 : vector<8x128xf32>
    %1249 = arith.addf %1239, %1248 : vector<8x128xf32>
    %1250 = vector.extract_strided_slice %59 {offsets = [8, 0], sizes = [8, 128], strides = [1, 1]} : vector<16x128xf32> to vector<8x128xf32>
    %cst_731 = arith.constant 68.9778519 : f32
    %1251 = vector.broadcast %cst_731 : f32 to vector<8x128xf32>
    %1252 = arith.subf %1250, %1251 : vector<8x128xf32>
    %cst_732 = arith.constant 0.000000e+00 : f32
    %1253 = vector.broadcast %cst_732 : f32 to vector<8x128xf32>
    %1254 = arith.cmpf ogt, %1252, %1253 : vector<8x128xf32>
    %1255 = arith.extui %1254 : vector<8x128xi1> to vector<8x128xi32>
    %1256 = arith.sitofp %1255 : vector<8x128xi32> to vector<8x128xf32>
    %1257 = arith.addf %1247, %1256 : vector<8x128xf32>
    %1258 = arith.mulf %1256, %1252 : vector<8x128xf32>
    %1259 = arith.addf %1249, %1258 : vector<8x128xf32>
    %c0_733 = arith.constant 0 : index
    %c39 = arith.constant 39 : index
    %c0_734 = arith.constant 0 : index
    %c0_735 = arith.constant 0 : index
    %1260 = vector.load %arg7[%c0_733, %c39, %c0_734, %c0_735] : memref<1x73x8x128xf32, #tpu.memory_space<vmem>>, vector<1x1x8x128xf32>
    %1261 = vector.shape_cast %1260 : vector<1x1x8x128xf32> to vector<8x128xf32>
    %1262 = arith.addf %1261, %1257 : vector<8x128xf32>
    %c0_736 = arith.constant 0 : index
    %c39_737 = arith.constant 39 : index
    %c0_738 = arith.constant 0 : index
    %c0_739 = arith.constant 0 : index
    %1263 = vector.load %arg7[%c0_736, %c39_737, %c0_738, %c0_739] : memref<1x73x8x128xf32, #tpu.memory_space<vmem>>, vector<1x1x8x128xf32>
    %1264 = vector.shape_cast %1263 : vector<1x1x8x128xf32> to vector<8x128xf32>
    %1265 = vector.shape_cast %1262 : vector<8x128xf32> to vector<1x1x8x128xf32>
    tpu.vector_store %arg7[%c0_736, %c39_737, %c0_738, %c0_739], %1265 {strides = array<i32>} : memref<1x73x8x128xf32, #tpu.memory_space<vmem>>, vector<1x1x8x128xf32>,
    %c0_740 = arith.constant 0 : index
    %c71 = arith.constant 71 : index
    %c0_741 = arith.constant 0 : index
    %c0_742 = arith.constant 0 : index
    %1266 = vector.load %arg7[%c0_740, %c71, %c0_741, %c0_742] : memref<1x73x8x128xf32, #tpu.memory_space<vmem>>, vector<1x1x8x128xf32>
    %1267 = vector.shape_cast %1266 : vector<1x1x8x128xf32> to vector<8x128xf32>
    %1268 = arith.addf %1267, %1259 : vector<8x128xf32>
    %c0_743 = arith.constant 0 : index
    %c71_744 = arith.constant 71 : index
    %c0_745 = arith.constant 0 : index
    %c0_746 = arith.constant 0 : index
    %1269 = vector.load %arg7[%c0_743, %c71_744, %c0_745, %c0_746] : memref<1x73x8x128xf32, #tpu.memory_space<vmem>>, vector<1x1x8x128xf32>
    %1270 = vector.shape_cast %1269 : vector<1x1x8x128xf32> to vector<8x128xf32>
    %1271 = vector.shape_cast %1268 : vector<8x128xf32> to vector<1x1x8x128xf32>
    tpu.vector_store %arg7[%c0_743, %c71_744, %c0_745, %c0_746], %1271 {strides = array<i32>} : memref<1x73x8x128xf32, #tpu.memory_space<vmem>>, vector<1x1x8x128xf32>,
    %cst_747 = arith.constant 0.000000e+00 : f32
    %1272 = vector.broadcast %cst_747 : f32 to vector<8x128xf32>
    %cst_748 = arith.constant 0.000000e+00 : f32
    %1273 = vector.broadcast %cst_748 : f32 to vector<8x128xf32>
    %1274 = vector.extract_strided_slice %59 {offsets = [0, 0], sizes = [8, 128], strides = [1, 1]} : vector<16x128xf32> to vector<8x128xf32>
    %cst_749 = arith.constant 1.000000e+02 : f32
    %1275 = vector.broadcast %cst_749 : f32 to vector<8x128xf32>
    %1276 = arith.subf %1274, %1275 : vector<8x128xf32>
    %cst_750 = arith.constant 0.000000e+00 : f32
    %1277 = vector.broadcast %cst_750 : f32 to vector<8x128xf32>
    %1278 = arith.cmpf ogt, %1276, %1277 : vector<8x128xf32>
    %1279 = arith.extui %1278 : vector<8x128xi1> to vector<8x128xi32>
    %1280 = arith.sitofp %1279 : vector<8x128xi32> to vector<8x128xf32>
    %1281 = arith.addf %1272, %1280 : vector<8x128xf32>
    %1282 = arith.mulf %1280, %1276 : vector<8x128xf32>
    %1283 = arith.addf %1273, %1282 : vector<8x128xf32>
    %1284 = vector.extract_strided_slice %59 {offsets = [8, 0], sizes = [8, 128], strides = [1, 1]} : vector<16x128xf32> to vector<8x128xf32>
    %cst_751 = arith.constant 1.000000e+02 : f32
    %1285 = vector.broadcast %cst_751 : f32 to vector<8x128xf32>
    %1286 = arith.subf %1284, %1285 : vector<8x128xf32>
    %cst_752 = arith.constant 0.000000e+00 : f32
    %1287 = vector.broadcast %cst_752 : f32 to vector<8x128xf32>
    %1288 = arith.cmpf ogt, %1286, %1287 : vector<8x128xf32>
    %1289 = arith.extui %1288 : vector<8x128xi1> to vector<8x128xi32>
    %1290 = arith.sitofp %1289 : vector<8x128xi32> to vector<8x128xf32>
    %1291 = arith.addf %1281, %1290 : vector<8x128xf32>
    %1292 = arith.mulf %1290, %1286 : vector<8x128xf32>
    %1293 = arith.addf %1283, %1292 : vector<8x128xf32>
    %c0_753 = arith.constant 0 : index
    %c40 = arith.constant 40 : index
    %c0_754 = arith.constant 0 : index
    %c0_755 = arith.constant 0 : index
    %1294 = vector.load %arg7[%c0_753, %c40, %c0_754, %c0_755] : memref<1x73x8x128xf32, #tpu.memory_space<vmem>>, vector<1x1x8x128xf32>
    %1295 = vector.shape_cast %1294 : vector<1x1x8x128xf32> to vector<8x128xf32>
    %1296 = arith.addf %1295, %1291 : vector<8x128xf32>
    %c0_756 = arith.constant 0 : index
    %c40_757 = arith.constant 40 : index
    %c0_758 = arith.constant 0 : index
    %c0_759 = arith.constant 0 : index
    %1297 = vector.load %arg7[%c0_756, %c40_757, %c0_758, %c0_759] : memref<1x73x8x128xf32, #tpu.memory_space<vmem>>, vector<1x1x8x128xf32>
    %1298 = vector.shape_cast %1297 : vector<1x1x8x128xf32> to vector<8x128xf32>
    %1299 = vector.shape_cast %1296 : vector<8x128xf32> to vector<1x1x8x128xf32>
    tpu.vector_store %arg7[%c0_756, %c40_757, %c0_758, %c0_759], %1299 {strides = array<i32>} : memref<1x73x8x128xf32, #tpu.memory_space<vmem>>, vector<1x1x8x128xf32>,
    %c0_760 = arith.constant 0 : index
    %c72 = arith.constant 72 : index
    %c0_761 = arith.constant 0 : index
    %c0_762 = arith.constant 0 : index
    %1300 = vector.load %arg7[%c0_760, %c72, %c0_761, %c0_762] : memref<1x73x8x128xf32, #tpu.memory_space<vmem>>, vector<1x1x8x128xf32>
    %1301 = vector.shape_cast %1300 : vector<1x1x8x128xf32> to vector<8x128xf32>
    %1302 = arith.addf %1301, %1293 : vector<8x128xf32>
    %c0_763 = arith.constant 0 : index
    %c72_764 = arith.constant 72 : index
    %c0_765 = arith.constant 0 : index
    %c0_766 = arith.constant 0 : index
    %1303 = vector.load %arg7[%c0_763, %c72_764, %c0_765, %c0_766] : memref<1x73x8x128xf32, #tpu.memory_space<vmem>>, vector<1x1x8x128xf32>
    %1304 = vector.shape_cast %1303 : vector<1x1x8x128xf32> to vector<8x128xf32>
    %1305 = vector.shape_cast %1302 : vector<8x128xf32> to vector<1x1x8x128xf32>
    tpu.vector_store %arg7[%c0_763, %c72_764, %c0_765, %c0_766], %1305 {strides = array<i32>} : memref<1x73x8x128xf32, #tpu.memory_space<vmem>>, vector<1x1x8x128xf32>,
    return
  }
  func.func @transform_0(%arg0: i32, %arg1: i32) -> (i32, i32, i32, i32) {
    %c0_i32 = arith.constant 0 : i32
    %c0_i32_0 = arith.constant 0 : i32
    %c0_i32_1 = arith.constant 0 : i32
    return %arg0, %c0_i32, %arg1, %c0_i32_0 : i32, i32, i32, i32
  }
  func.func @transform_1(%arg0: i32, %arg1: i32) -> (i32, i32, i32) {
    %c0_i32 = arith.constant 0 : i32
    %c0_i32_0 = arith.constant 0 : i32
    return %arg0, %arg1, %c0_i32 : i32, i32, i32
  }
  func.func @transform_2(%arg0: i32, %arg1: i32) -> (i32, i32, i32) {
    %c0_i32 = arith.constant 0 : i32
    %c0_i32_0 = arith.constant 0 : i32
    return %arg0, %arg1, %c0_i32 : i32, i32, i32
  }
  func.func @transform_3(%arg0: i32, %arg1: i32) -> (i32, i32, i32) {
    %c0_i32 = arith.constant 0 : i32
    %c0_i32_0 = arith.constant 0 : i32
    return %arg0, %arg1, %c0_i32 : i32, i32, i32
  }
  func.func @transform_4(%arg0: i32, %arg1: i32) -> (i32, i32, i32) {
    %c0_i32 = arith.constant 0 : i32
    %c0_i32_0 = arith.constant 0 : i32
    return %arg0, %arg1, %c0_i32 : i32, i32, i32
  }
  func.func @transform_5(%arg0: i32, %arg1: i32) -> (i32, i32, i32, i32) {
    %c0_i32 = arith.constant 0 : i32
    %c0_i32_0 = arith.constant 0 : i32
    %c0_i32_1 = arith.constant 0 : i32
    %c0_i32_2 = arith.constant 0 : i32
    return %arg0, %c0_i32, %c0_i32_0, %c0_i32_1 : i32, i32, i32, i32
  }
}

</mosaic_0001>

<llo_original>
// kernel: db_loss_intersection.1
$region0: #{db_loss_intersection.1}
  #allocation0 [shape = 'u32[]', space=smem, size = 0x4, offset = 0x4, fixed_abs, tag = 'smem constant byte address 0x4 - core index']
  #allocation1 [shape = 'u32[144,128]{1,0:T(1,128)}', space=vmem, size = 0x12000, scoped, tag = 'internal scratch']
  %s0 = inlined_call_operand.vmem [shape: f32[2,5,16,128], index: 0, kind: input, shape index: {}]
  %s1 = inlined_call_operand.vmem [shape: bf16[2,16,128], index: 1, kind: input, shape index: {}]
  %s2 = inlined_call_operand.vmem [shape: bf16[2,16,128], index: 2, kind: input, shape index: {}]
  %s3 = inlined_call_operand.vmem [shape: f32[2,16,128], index: 3, kind: input, shape index: {}]
  %s4 = inlined_call_operand.vmem [shape: bf16[2,16,128], index: 4, kind: input, shape index: {}]
  %s5 = inlined_call_operand.vmem [shape: f32[2,73,8,128], index: 5, kind: output, shape index: {}]
  %s6 = sld [smem:[#allocation0]]
  $region57: #{db_loss_intersection.1} parent=0
    _
  %s8 = ssub.s32 1, %s6
  %s9 = scalar_select 0, %s8, %s6
  loop: start=0, step=1, limit=4
  $region2: #{db_loss_intersection.1} parent=0 // loop_pre_header
    _
  $region3: #{db_loss_intersection.1} parent=0 // loop_header
    %s11 = sphi 0, %s15
    %p12 = scmp.ge.s32.totalorder %s11, 4
    %s18 = sphi 0, %s30
    %s19 = sphi 0, %s26
    %s20 = sphi 0, %s18
    %s21 = sphi 0, %s19
    %s22 = sphi 0, %s20
    %s23 = sphi 0, %s21
    %s35 = sphi 0, %s37
    %s38 = sphi 0, %s35
    %s39 = sphi 0, %s38
    %s55 = sphi 0, %s39
    %s63 = sphi 0, %s65
    %s66 = sphi 0, %s63
    %s67 = sphi 0, %s66
    %s83 = sphi 0, %s67
    %s91 = sphi 0, %s93
    %s94 = sphi 0, %s91
    %s95 = sphi 0, %s94
    %s111 = sphi 0, %s95
    %s119 = sphi 0, %s121
    %s122 = sphi 0, %s119
    %s123 = sphi 0, %s122
    %s139 = sphi 0, %s123
    %s147 = sphi 0, %s149
    %s150 = sphi 0, %s147
    %s151 = sphi 0, %s150
    %s167 = sphi 0, %s151
    %s173 = sphi 0, %s175
    %s176 = sphi 0, %s173
    %s177 = sphi 0, %s176
    %s193 = sphi 0, %s177
  $region4: #{db_loss_intersection.1} parent=0 // loop_header_branch
    %14 = sbr.rel (%p12) target = $region8
  $region5: #{db_loss_intersection.1} parent=0 // loop_body
    %s16 = ssub.s32 %s11, 1
    %s17 = ssub.s32 %s11, 2
    %s24 = sadd.s32 1, %s19
    %p25 = scmp.ge.s32.totalorder %s24, 1
    %s26 = scalar_select %p25, 0, %s24
    %s27 = sadd.s32 1, %s18
    %s28 = scalar_select %p25, %s27, %s18
    %p29 = scmp.ge.s32.totalorder %s28, 2
    %s30 = scalar_select %p29, 0, %s28
    %s31 = ssub.s32 %s18, %s30
    %s32 = ssub.s32 %s19, %s26
    %s33 = sor.u32 %s31, %s32
    %p34 = scmp.eq.s32.totalorder %s33, 0
    %s36 = sadd.s32 %s35, 1
    %s37 = scalar_select %p34, %s35, %s36
    %p40 = pneg %p34
    %p41 = scmp.eq.s32.totalorder %s11, 1
    %p42 = por %p40, %p41
    %p43 = scmp.ne.s32.totalorder %s35, %s38
    %p44 = scmp.eq.s32.totalorder %s11, 0
    %p45 = por %p43, %p44
    %p46 = scmp.ne.s32.totalorder %s35, %s38
    %p47 = scmp.eq.s32.totalorder %s16, 1
    %p48 = por %p46, %p47
    %p49 = scmp.ne.s32.totalorder %s38, %s39
    %p50 = scmp.eq.s32.totalorder %s16, 0
    %p51 = por %p49, %p50
    %p52 = scmp.ne.s32.totalorder %s38, %s39
    %p53 = scmp.eq.s32.totalorder %s17, 1
    %p54 = por %p52, %p53
    %p56 = scmp.ne.s32.totalorder %s39, %s55
    %p57 = scmp.eq.s32.totalorder %s17, 0
    %p58 = por %p56, %p57
    %s59 = ssub.s32 %s18, %s30
    %s60 = ssub.s32 %s19, %s26
    %s61 = sor.u32 %s59, %s60
    %p62 = scmp.eq.s32.totalorder %s61, 0
    %s64 = sadd.s32 %s63, 1
    %s65 = scalar_select %p62, %s63, %s64
    %p68 = pneg %p62
    %p69 = scmp.eq.s32.totalorder %s11, 1
    %p70 = por %p68, %p69
    %p71 = scmp.ne.s32.totalorder %s63, %s66
    %p72 = scmp.eq.s32.totalorder %s11, 0
    %p73 = por %p71, %p72
    %p74 = scmp.ne.s32.totalorder %s63, %s66
    %p75 = scmp.eq.s32.totalorder %s16, 1
    %p76 = por %p74, %p75
    %p77 = scmp.ne.s32.totalorder %s66, %s67
    %p78 = scmp.eq.s32.totalorder %s16, 0
    %p79 = por %p77, %p78
    %p80 = scmp.ne.s32.totalorder %s66, %s67
    %p81 = scmp.eq.s32.totalorder %s17, 1
    %p82 = por %p80, %p81
    %p84 = scmp.ne.s32.totalorder %s67, %s83
    %p85 = scmp.eq.s32.totalorder %s17, 0
    %p86 = por %p84, %p85
    %s87 = ssub.s32 %s18, %s30
    %s88 = ssub.s32 %s19, %s26
    %s89 = sor.u32 %s87, %s88
    %p90 = scmp.eq.s32.totalorder %s89, 0
    %s92 = sadd.s32 %s91, 1
    %s93 = scalar_select %p90, %s91, %s92
    %p96 = pneg %p90
    %p97 = scmp.eq.s32.totalorder %s11, 1
    %p98 = por %p96, %p97
    %p99 = scmp.ne.s32.totalorder %s91, %s94
    %p100 = scmp.eq.s32.totalorder %s11, 0
    %p101 = por %p99, %p100
    %p102 = scmp.ne.s32.totalorder %s91, %s94
    %p103 = scmp.eq.s32.totalorder %s16, 1
    %p104 = por %p102, %p103
    %p105 = scmp.ne.s32.totalorder %s94, %s95
    %p106 = scmp.eq.s32.totalorder %s16, 0
    %p107 = por %p105, %p106
    %p108 = scmp.ne.s32.totalorder %s94, %s95
    %p109 = scmp.eq.s32.totalorder %s17, 1
    %p110 = por %p108, %p109
    %p112 = scmp.ne.s32.totalorder %s95, %s111
    %p113 = scmp.eq.s32.totalorder %s17, 0
    %p114 = por %p112, %p113
    %s115 = ssub.s32 %s18, %s30
    %s116 = ssub.s32 %s19, %s26
    %s117 = sor.u32 %s115, %s116
    %p118 = scmp.eq.s32.totalorder %s117, 0
    %s120 = sadd.s32 %s119, 1
    %s121 = scalar_select %p118, %s119, %s120
    %p124 = pneg %p118
    %p125 = scmp.eq.s32.totalorder %s11, 1
    %p126 = por %p124, %p125
    %p127 = scmp.ne.s32.totalorder %s119, %s122
    %p128 = scmp.eq.s32.totalorder %s11, 0
    %p129 = por %p127, %p128
    %p130 = scmp.ne.s32.totalorder %s119, %s122
    %p131 = scmp.eq.s32.totalorder %s16, 1
    %p132 = por %p130, %p131
    %p133 = scmp.ne.s32.totalorder %s122, %s123
    %p134 = scmp.eq.s32.totalorder %s16, 0
    %p135 = por %p133, %p134
    %p136 = scmp.ne.s32.totalorder %s122, %s123
    %p137 = scmp.eq.s32.totalorder %s17, 1
    %p138 = por %p136, %p137
    %p140 = scmp.ne.s32.totalorder %s123, %s139
    %p141 = scmp.eq.s32.totalorder %s17, 0
    %p142 = por %p140, %p141
    %s143 = ssub.s32 %s18, %s30
    %s144 = ssub.s32 %s19, %s26
    %s145 = sor.u32 %s143, %s144
    %p146 = scmp.eq.s32.totalorder %s145, 0
    %s148 = sadd.s32 %s147, 1
    %s149 = scalar_select %p146, %s147, %s148
    %p152 = pneg %p146
    %p153 = scmp.eq.s32.totalorder %s11, 1
    %p154 = por %p152, %p153
    %p155 = scmp.ne.s32.totalorder %s147, %s150
    %p156 = scmp.eq.s32.totalorder %s11, 0
    %p157 = por %p155, %p156
    %p158 = scmp.ne.s32.totalorder %s147, %s150
    %p159 = scmp.eq.s32.totalorder %s16, 1
    %p160 = por %p158, %p159
    %p161 = scmp.ne.s32.totalorder %s150, %s151
    %p162 = scmp.eq.s32.totalorder %s16, 0
    %p163 = por %p161, %p162
    %p164 = scmp.ne.s32.totalorder %s150, %s151
    %p165 = scmp.eq.s32.totalorder %s17, 1
    %p166 = por %p164, %p165
    %p168 = scmp.ne.s32.totalorder %s151, %s167
    %p169 = scmp.eq.s32.totalorder %s17, 0
    %p170 = por %p168, %p169
    %s171 = ssub.s32 %s18, %s30
    %p172 = scmp.eq.s32.totalorder %s171, 0
    %s174 = sadd.s32 %s173, 1
    %s175 = scalar_select %p172, %s173, %s174
    %p178 = pneg %p172
    %p179 = scmp.eq.s32.totalorder %s11, 1
    %p180 = por %p178, %p179
    %p181 = scmp.ne.s32.totalorder %s173, %s176
    %p182 = scmp.eq.s32.totalorder %s11, 0
    %p183 = por %p181, %p182
    %p184 = scmp.ne.s32.totalorder %s173, %s176
    %p185 = scmp.eq.s32.totalorder %s16, 1
    %p186 = por %p184, %p185
    %p187 = scmp.ne.s32.totalorder %s176, %s177
    %p188 = scmp.eq.s32.totalorder %s16, 0
    %p189 = por %p187, %p188
    %p190 = scmp.ne.s32.totalorder %s176, %s177
    %p191 = scmp.eq.s32.totalorder %s17, 1
    %p192 = por %p190, %p191
    %p194 = scmp.ne.s32.totalorder %s177, %s193
    %p195 = scmp.eq.s32.totalorder %s17, 0
    %p196 = por %p194, %p195
    %p197 = scmp.le.s32.totalorder 1, %s11
    %p198 = scmp.lt.s32.totalorder %s11, 3
    %p199 = pnand %p197, %p198
    %p200 = pneg %p199
    // Predicated region
    $region9: #{db_loss_intersection.1} parent=5 // pred_check
      _
    $region10: #{db_loss_intersection.1} parent=5 // pred_check_branch
      %202 = sbr.rel (%p199) target = $region12
    $region11: #{db_loss_intersection.1} parent=5 // pred_region
      %s203 = ssub.s32 %s11, 1
    $region12: #{db_loss_intersection.1} parent=5 // pred_fallthru
      _
    %p204 = scmp.lt.s32.totalorder %s11, 2
    // Predicated region
    $region13: #{db_loss_intersection.1} parent=5 // pred_check
      %p205 = pneg %p204
    $region14: #{db_loss_intersection.1} parent=5 // pred_check_branch
      %207 = sbr.rel (%p205) target = $region16
    $region15: #{db_loss_intersection.1} parent=5 // pred_region
      // Predicated region
      $region17: #{db_loss_intersection.1} parent=15 // pred_check
        %p208 = pneg %p45
      $region18: #{db_loss_intersection.1} parent=15 // pred_check_branch
        %210 = sbr.rel (%p208) target = $region20
      $region19: #{db_loss_intersection.1} parent=15 // pred_region
        %s211 = smul.u32 2, %s19
        %p212 = scmp.lt.s32.totalorder %s18, 1
        %s213 = scalar_select %p212, %s18, 1
        %p214 = scmp.lt.s32.totalorder %s211, 1
        %s215 = scalar_select %p214, %s211, 1
        %s216 = smul.addr %s213, 10
        %s217 = sadd.s32 %s215, %s216
        %s218 = smul.addr %s217, 8
        %s219 = scalar_lea.vmem %s0, %s218
        %s220 = smul.u32 2, %s19
      $region20: #{db_loss_intersection.1} parent=15 // pred_fallthru
        _
      // Predicated region
      $region21: #{db_loss_intersection.1} parent=15 // pred_check
        %p221 = pneg %p73
      $region22: #{db_loss_intersection.1} parent=15 // pred_check_branch
        %223 = sbr.rel (%p221) target = $region24
      $region23: #{db_loss_intersection.1} parent=15 // pred_region
        %s224 = smul.u32 2, %s19
        %p225 = scmp.lt.s32.totalorder %s18, 1
        %s226 = scalar_select %p225, %s18, 1
        %p227 = scmp.lt.s32.totalorder %s224, 1
        %s228 = scalar_select %p227, %s224, 1
        %s229 = smul.addr %s226, 2
        %s230 = sadd.s32 %s228, %s229
        %s231 = smul.addr %s230, 4
        %s232 = scalar_lea.vmem %s1, %s231
        %s233 = smul.u32 2, %s19
      $region24: #{db_loss_intersection.1} parent=15 // pred_fallthru
        _
      // Predicated region
      $region25: #{db_loss_intersection.1} parent=15 // pred_check
        %p234 = pneg %p101
      $region26: #{db_loss_intersection.1} parent=15 // pred_check_branch
        %236 = sbr.rel (%p234) target = $region28
      $region27: #{db_loss_intersection.1} parent=15 // pred_region
        %s237 = smul.u32 2, %s19
        %p238 = scmp.lt.s32.totalorder %s18, 1
        %s239 = scalar_select %p238, %s18, 1
        %p240 = scmp.lt.s32.totalorder %s237, 1
        %s241 = scalar_select %p240, %s237, 1
        %s242 = smul.addr %s239, 2
        %s243 = sadd.s32 %s241, %s242
        %s244 = smul.addr %s243, 4
        %s245 = scalar_lea.vmem %s2, %s244
        %s246 = smul.u32 2, %s19
      $region28: #{db_loss_intersection.1} parent=15 // pred_fallthru
        _
      // Predicated region
      $region29: #{db_loss_intersection.1} parent=15 // pred_check
        %p247 = pneg %p129
      $region30: #{db_loss_intersection.1} parent=15 // pred_check_branch
        %249 = sbr.rel (%p247) target = $region32
      $region31: #{db_loss_intersection.1} parent=15 // pred_region
        %s250 = smul.u32 2, %s19
        %p251 = scmp.lt.s32.totalorder %s18, 1
        %s252 = scalar_select %p251, %s18, 1
        %p253 = scmp.lt.s32.totalorder %s250, 1
        %s254 = scalar_select %p253, %s250, 1
        %s255 = smul.addr %s252, 2
        %s256 = sadd.s32 %s254, %s255
        %s257 = smul.addr %s256, 8
        %s258 = scalar_lea.vmem %s3, %s257
        %s259 = smul.u32 2, %s19
      $region32: #{db_loss_intersection.1} parent=15 // pred_fallthru
        _
      // Predicated region
      $region33: #{db_loss_intersection.1} parent=15 // pred_check
        %p260 = pneg %p157
      $region34: #{db_loss_intersection.1} parent=15 // pred_check_branch
        %262 = sbr.rel (%p260) target = $region36
      $region35: #{db_loss_intersection.1} parent=15 // pred_region
        %s263 = smul.u32 2, %s19
        %p264 = scmp.lt.s32.totalorder %s18, 1
        %s265 = scalar_select %p264, %s18, 1
        %p266 = scmp.lt.s32.totalorder %s263, 1
        %s267 = scalar_select %p266, %s263, 1
        %s268 = smul.addr %s265, 2
        %s269 = sadd.s32 %s267, %s268
        %s270 = smul.addr %s269, 4
        %s271 = scalar_lea.vmem %s4, %s270
        %s272 = smul.u32 2, %s19
      $region36: #{db_loss_intersection.1} parent=15 // pred_fallthru
        _
    $region16: #{db_loss_intersection.1} parent=5 // pred_fallthru
      _
    %p273 = scmp.le.s32.totalorder 1, %s11
    %p274 = scmp.lt.s32.totalorder %s11, 3
    %p275 = pnand %p273, %p274
    %p276 = pneg %p275
    // Predicated region
    $region37: #{db_loss_intersection.1} parent=5 // pred_check
      _
    $region38: #{db_loss_intersection.1} parent=5 // pred_check_branch
      %278 = sbr.rel (%p275) target = $region40
    $region39: #{db_loss_intersection.1} parent=5 // pred_region
      %s279 = ssub.s32 %s11, 1
      %s280 = smul.u32 2, %s21
      %p281 = scmp.lt.s32.totalorder %s20, 1
      %s282 = scalar_select %p281, %s20, 1
      %p283 = scmp.lt.s32.totalorder %s280, 1
      %s284 = scalar_select %p283, %s280, 1
      %s285 = smul.addr %s282, 10
      %s286 = sadd.s32 %s284, %s285
      %s287 = smul.addr %s286, 8
      %s288 = scalar_lea.vmem %s0, %s287
      %p289 = pneg %p51
      %p290 = pneg %p48
      %s291 = smul.u32 2, %s21
      %p292 = scmp.lt.s32.totalorder %s20, 1
      %s293 = scalar_select %p292, %s20, 1
      %p294 = scmp.lt.s32.totalorder %s291, 1
      %s295 = scalar_select %p294, %s291, 1
      %s296 = smul.addr %s293, 2
      %s297 = sadd.s32 %s295, %s296
      %s298 = smul.addr %s297, 4
      %s299 = scalar_lea.vmem %s1, %s298
      %p300 = pneg %p79
      %p301 = pneg %p76
      %s302 = smul.u32 2, %s21
      %p303 = scmp.lt.s32.totalorder %s20, 1
      %s304 = scalar_select %p303, %s20, 1
      %p305 = scmp.lt.s32.totalorder %s302, 1
      %s306 = scalar_select %p305, %s302, 1
      %s307 = smul.addr %s304, 2
      %s308 = sadd.s32 %s306, %s307
      %s309 = smul.addr %s308, 4
      %s310 = scalar_lea.vmem %s2, %s309
      %p311 = pneg %p107
      %p312 = pneg %p104
      %s313 = smul.u32 2, %s21
      %p314 = scmp.lt.s32.totalorder %s20, 1
      %s315 = scalar_select %p314, %s20, 1
      %p316 = scmp.lt.s32.totalorder %s313, 1
      %s317 = scalar_select %p316, %s313, 1
      %s318 = smul.addr %s315, 2
      %s319 = sadd.s32 %s317, %s318
      %s320 = smul.addr %s319, 8
      %s321 = scalar_lea.vmem %s3, %s320
      %p322 = pneg %p135
      %p323 = pneg %p132
      %s324 = smul.u32 2, %s21
      %p325 = scmp.lt.s32.totalorder %s20, 1
      %s326 = scalar_select %p325, %s20, 1
      %p327 = scmp.lt.s32.totalorder %s324, 1
      %s328 = scalar_select %p327, %s324, 1
      %s329 = smul.addr %s326, 2
      %s330 = sadd.s32 %s328, %s329
      %s331 = smul.addr %s330, 4
      %s332 = scalar_lea.vmem %s4, %s331
      %p333 = pneg %p163
      %p334 = pneg %p160
      %p335 = pneg %p189
      %p336 = pneg %p186
      %p337 = scmp.lt.s32.totalorder %s20, 1
      %s338 = scalar_select %p337, %s20, 1
      %s339 = smul.addr %s338, 73
      %s340 = smul.addr %s339, 8
      %s341 = scalar_lea.vmem %s5, %s340
      %s342 = smul.u32 2, %s21
      %p343 = scmp.lt.s32.totalorder %s20, 1
      %s344 = scalar_select %p343, %s20, 1
      %p345 = scmp.lt.s32.totalorder %s342, 1
      %s346 = scalar_select %p345, %s342, 1
      %s347 = smul.addr %s344, 10
      %s348 = sadd.s32 %s346, %s347
      %s349 = smul.addr %s348, 8
      %s350 = scalar_lea.vmem %s0, %s349
      %s351 = smul.u32 2, %s21
      %s352 = smul.u32 2, %s21
      %p353 = scmp.lt.s32.totalorder %s20, 1
      %s354 = scalar_select %p353, %s20, 1
      %p355 = scmp.lt.s32.totalorder %s352, 1
      %s356 = scalar_select %p355, %s352, 1
      %s357 = smul.addr %s354, 2
      %s358 = sadd.s32 %s356, %s357
      %s359 = smul.addr %s358, 4
      %s360 = scalar_lea.vmem %s1, %s359
      %s361 = smul.u32 2, %s21
      %s362 = smul.u32 2, %s21
      %p363 = scmp.lt.s32.totalorder %s20, 1
      %s364 = scalar_select %p363, %s20, 1
      %p365 = scmp.lt.s32.totalorder %s362, 1
      %s366 = scalar_select %p365, %s362, 1
      %s367 = smul.addr %s364, 2
      %s368 = sadd.s32 %s366, %s367
      %s369 = smul.addr %s368, 4
      %s370 = scalar_lea.vmem %s2, %s369
      %s371 = smul.u32 2, %s21
      %s372 = smul.u32 2, %s21
      %p373 = scmp.lt.s32.totalorder %s20, 1
      %s374 = scalar_select %p373, %s20, 1
      %p375 = scmp.lt.s32.totalorder %s372, 1
      %s376 = scalar_select %p375, %s372, 1
      %s377 = smul.addr %s374, 2
      %s378 = sadd.s32 %s376, %s377
      %s379 = smul.addr %s378, 8
      %s380 = scalar_lea.vmem %s3, %s379
      %s381 = smul.u32 2, %s21
      %s382 = smul.u32 2, %s21
      %p383 = scmp.lt.s32.totalorder %s20, 1
      %s384 = scalar_select %p383, %s20, 1
      %p385 = scmp.lt.s32.totalorder %s382, 1
      %s386 = scalar_select %p385, %s382, 1
      %s387 = smul.addr %s384, 2
      %s388 = sadd.s32 %s386, %s387
      %s389 = smul.addr %s388, 4
      %s390 = scalar_lea.vmem %s4, %s389
      %s391 = smul.u32 2, %s21
      %p392 = scmp.lt.s32.totalorder %s20, 1
      %s393 = scalar_select %p392, %s20, 1
      %s394 = smul.addr %s393, 73
      %s395 = smul.addr %s394, 8
      %s396 = scalar_lea.vmem %s5, %s395
      %p397 = scmp.eq.s32.totalorder %s21, 0
      // Predicated region
      $region41: #{db_loss_intersection.1} parent=39 // pred_check
        %p398 = pneg %p397
      $region42: #{db_loss_intersection.1} parent=39 // pred_check_branch
        %400 = sbr.rel (%p398) target = $region44
      $region43: #{db_loss_intersection.1} parent=39 // pred_region
        %401 = vst [vmem:[%s396] sm:$0xff] 0.0
        %402 = vst [vmem:[%s396 + $0x8] sm:$0xff] 0.0
        %403 = vst [vmem:[%s396 + $0x10] sm:$0xff] 0.0
        %404 = vst [vmem:[%s396 + $0x18] sm:$0xff] 0.0
        %405 = vst [vmem:[%s396 + $0x20] sm:$0xff] 0.0
        %406 = vst [vmem:[%s396 + $0x28] sm:$0xff] 0.0
        %407 = vst [vmem:[%s396 + $0x30] sm:$0xff] 0.0
        %408 = vst [vmem:[%s396 + $0x38] sm:$0xff] 0.0
        %409 = vst [vmem:[%s396 + $0x40] sm:$0xff] 0.0
        %410 = vst [vmem:[%s396 + $0x48] sm:$0xff] 0.0
        %411 = vst [vmem:[%s396 + $0x50] sm:$0xff] 0.0
        %412 = vst [vmem:[%s396 + $0x58] sm:$0xff] 0.0
        %413 = vst [vmem:[%s396 + $0x60] sm:$0xff] 0.0
        %414 = vst [vmem:[%s396 + $0x68] sm:$0xff] 0.0
        %415 = vst [vmem:[%s396 + $0x70] sm:$0xff] 0.0
        %416 = vst [vmem:[%s396 + $0x78] sm:$0xff] 0.0
        %417 = vst [vmem:[%s396 + $0x80] sm:$0xff] 0.0
        %418 = vst [vmem:[%s396 + $0x88] sm:$0xff] 0.0
        %419 = vst [vmem:[%s396 + $0x90] sm:$0xff] 0.0
        %420 = vst [vmem:[%s396 + $0x98] sm:$0xff] 0.0
        %421 = vst [vmem:[%s396 + $0xa0] sm:$0xff] 0.0
        %422 = vst [vmem:[%s396 + $0xa8] sm:$0xff] 0.0
        %423 = vst [vmem:[%s396 + $0xb0] sm:$0xff] 0.0
        %424 = vst [vmem:[%s396 + $0xb8] sm:$0xff] 0.0
        %425 = vst [vmem:[%s396 + $0xc0] sm:$0xff] 0.0
        %426 = vst [vmem:[%s396 + $0xc8] sm:$0xff] 0.0
        %427 = vst [vmem:[%s396 + $0xd0] sm:$0xff] 0.0
        %428 = vst [vmem:[%s396 + $0xd8] sm:$0xff] 0.0
        %429 = vst [vmem:[%s396 + $0xe0] sm:$0xff] 0.0
        %430 = vst [vmem:[%s396 + $0xe8] sm:$0xff] 0.0
        %431 = vst [vmem:[%s396 + $0xf0] sm:$0xff] 0.0
        %432 = vst [vmem:[%s396 + $0xf8] sm:$0xff] 0.0
        %433 = vst [vmem:[%s396 + $0x100] sm:$0xff] 0.0
        %434 = vst [vmem:[%s396 + $0x108] sm:$0xff] 0.0
        %435 = vst [vmem:[%s396 + $0x110] sm:$0xff] 0.0
        %436 = vst [vmem:[%s396 + $0x118] sm:$0xff] 0.0
        %437 = vst [vmem:[%s396 + $0x120] sm:$0xff] 0.0
        %438 = vst [vmem:[%s396 + $0x128] sm:$0xff] 0.0
        %439 = vst [vmem:[%s396 + $0x130] sm:$0xff] 0.0
        %440 = vst [vmem:[%s396 + $0x138] sm:$0xff] 0.0
        %441 = vst [vmem:[%s396 + $0x140] sm:$0xff] 0.0
        %442 = vst [vmem:[%s396 + $0x148] sm:$0xff] 0.0
        %443 = vst [vmem:[%s396 + $0x150] sm:$0xff] 0.0
        %444 = vst [vmem:[%s396 + $0x158] sm:$0xff] 0.0
        %445 = vst [vmem:[%s396 + $0x160] sm:$0xff] 0.0
        %446 = vst [vmem:[%s396 + $0x168] sm:$0xff] 0.0
        %447 = vst [vmem:[%s396 + $0x170] sm:$0xff] 0.0
        %448 = vst [vmem:[%s396 + $0x178] sm:$0xff] 0.0
        %449 = vst [vmem:[%s396 + $0x180] sm:$0xff] 0.0
        %450 = vst [vmem:[%s396 + $0x188] sm:$0xff] 0.0
        %451 = vst [vmem:[%s396 + $0x190] sm:$0xff] 0.0
        %452 = vst [vmem:[%s396 + $0x198] sm:$0xff] 0.0
        %453 = vst [vmem:[%s396 + $0x1a0] sm:$0xff] 0.0
        %454 = vst [vmem:[%s396 + $0x1a8] sm:$0xff] 0.0
        %455 = vst [vmem:[%s396 + $0x1b0] sm:$0xff] 0.0
        %456 = vst [vmem:[%s396 + $0x1b8] sm:$0xff] 0.0
        %457 = vst [vmem:[%s396 + $0x1c0] sm:$0xff] 0.0
        %458 = vst [vmem:[%s396 + $0x1c8] sm:$0xff] 0.0
        %459 = vst [vmem:[%s396 + $0x1d0] sm:$0xff] 0.0
        %460 = vst [vmem:[%s396 + $0x1d8] sm:$0xff] 0.0
        %461 = vst [vmem:[%s396 + $0x1e0] sm:$0xff] 0.0
        %462 = vst [vmem:[%s396 + $0x1e8] sm:$0xff] 0.0
        %463 = vst [vmem:[%s396 + $0x1f0] sm:$0xff] 0.0
        %464 = vst [vmem:[%s396 + $0x1f8] sm:$0xff] 0.0
        %465 = vst [vmem:[%s396 + $0x200] sm:$0xff] 0.0
        %466 = vst [vmem:[%s396 + $0x208] sm:$0xff] 0.0
        %467 = vst [vmem:[%s396 + $0x210] sm:$0xff] 0.0
        %468 = vst [vmem:[%s396 + $0x218] sm:$0xff] 0.0
        %469 = vst [vmem:[%s396 + $0x220] sm:$0xff] 0.0
        %470 = vst [vmem:[%s396 + $0x228] sm:$0xff] 0.0
        %471 = vst [vmem:[%s396 + $0x230] sm:$0xff] 0.0
        %472 = vst [vmem:[%s396 + $0x238] sm:$0xff] 0.0
        %473 = vst [vmem:[%s396 + $0x240] sm:$0xff] 0.0
      $region44: #{db_loss_intersection.1} parent=39 // pred_fallthru
        _
      %v474 = vld [vmem:[%s360] sm:$0xf]
      %v475 = vld [vmem:[%s360 + $0x4] sm:$0xf]
      %v476 = vunpack.c.l.bf16 %v474
      %v477 = vunpack.c.l.bf16 %v475
      %v478 = vld [vmem:[%s370] sm:$0xf]
      %v479 = vld [vmem:[%s370 + $0x4] sm:$0xf]
      %v480 = vunpack.c.l.bf16 %v478
      %v481 = vunpack.c.l.bf16 %v479
      %v482 = vld [vmem:[%s380] sm:$0xff]
      %v483 = vld [vmem:[%s380 + $0x8] sm:$0xff]
      %v484 = vld [vmem:[%s390] sm:$0xf]
      %v485 = vld [vmem:[%s390 + $0x4] sm:$0xf]
      %v486 = vunpack.c.l.bf16 %v484
      %v487 = vunpack.c.l.bf16 %v485
      %v488 = vld [vmem:[%s350] sm:$0xff]
      %v489 = vld [vmem:[%s350 + $0x8] sm:$0xff]
      %s490 = scalar_lea.vmem %s350, 16
      %v491 = vld [vmem:[%s490] sm:$0xff]
      %v492 = vld [vmem:[%s490 + $0x8] sm:$0xff]
      %s493 = scalar_lea.vmem %s350, 32
      %v494 = vld [vmem:[%s493] sm:$0xff]
      %v495 = vld [vmem:[%s493 + $0x8] sm:$0xff]
      %s496 = scalar_lea.vmem %s350, 48
      %v497 = vld [vmem:[%s496] sm:$0xff]
      %v498 = vld [vmem:[%s496 + $0x8] sm:$0xff]
      %s499 = scalar_lea.vmem %s350, 64
      %v500 = vld [vmem:[%s499] sm:$0xff]
      %v501 = vld [vmem:[%s499 + $0x8] sm:$0xff]
      %vm502 = vcmp.eq.f32.partialorder %v476, 2.0
      %vm503 = vcmp.eq.f32.partialorder %v477, 2.0
      %v504 = vsel %vm502, 0.0, %v476
      %v505 = vsel %vm503, 0.0, %v477
      %vm506 = vcmp.eq.f32.partialorder %v476, 1.0
      %vm507 = vcmp.eq.f32.partialorder %v477, 1.0
      %v508 = vsel %vm506, 0.0, %v476
      %v509 = vsel %vm507, 0.0, %v477
      %vm510 = vcmp.eq.f32.partialorder %v508, 2.0
      %vm511 = vcmp.eq.f32.partialorder %v509, 2.0
      %v512 = vsel %vm510, 1.0, %v508
      %v513 = vsel %vm511, 1.0, %v509
      %vm514 = vcmp.eq.f32.partialorder %v512, 0.0
      %vm515 = vcmp.eq.f32.partialorder %v513, 0.0
      %v516 = vsel %vm514, 1, 0
      %v517 = vsel %vm515, 1, 0
      %v518 = vcvt.s32.f32 %v516
      %v519 = vcvt.s32.f32 %v517
      %v520 = vmul.f32 %v504, %v480
      %v521 = vmul.f32 %v505, %v481
      %v522 = vsub.f32 1.0, %v504
      %v523 = vsub.f32 1.0, %v505
      %v524 = vmul.f32 %v522, %v480
      %v525 = vmul.f32 %v523, %v481
      %v526 = vlog2.pop %v488
      %v527 = vmul.f32 %v526, 0.6931472
      %v528 = vlog2.pop %v489
      %v529 = vmul.f32 %v528, 0.6931472
      %v530 = vmax.f32 %v527, -100.0
      %v531 = vmax.f32 %v529, -100.0
      %v532 = vsub.f32 0.0, %v488
      %v533 = vsub.f32 0.0, %v489
      %v534 = vadd.f32 %v532, 1.0
      %v535 = vlog2.pop %v534
      %v536 = vmul.f32 %v535, 0.6931472
      %v537 = vmul.f32 -0.5, %v532
      %v538 = vadd.f32 %v537, 1.0
      %v539 = vmul.f32 %v538, %v532
      %v540 = vand.u32 2147483647, %v532
      %vm541 = vcmp.lt.f32.partialorder %v540, 0.0004427343
      %v542 = vsel %vm541, %v539, %v536
      %v543 = vadd.f32 %v533, 1.0
      %v544 = vlog2.pop %v543
      %v545 = vmul.f32 %v544, 0.6931472
      %v546 = vmul.f32 -0.5, %v533
      %v547 = vadd.f32 %v546, 1.0
      %v548 = vmul.f32 %v547, %v533
      %v549 = vand.u32 2147483647, %v533
      %vm550 = vcmp.lt.f32.partialorder %v549, 0.0004427343
      %v551 = vsel %vm550, %v548, %v545
      %v552 = vmax.f32 %v542, -100.0
      %v553 = vmax.f32 %v551, -100.0
      %v554 = vmul.f32 %v504, %v530
      %v555 = vmul.f32 %v505, %v531
      %v556 = vmul.f32 %v522, %v552
      %v557 = vmul.f32 %v523, %v553
      %v558 = vadd.f32 %v554, %v556
      %v559 = vadd.f32 %v555, %v557
      %v560 = vsub.f32 0.0, %v558
      %v561 = vsub.f32 0.0, %v559
      %v562 = vmul.f32 %v560, %v524
      %v563 = vmul.f32 %v561, %v525
      %v564 = vmul.f32 %v560, %v520
      %v565 = vmul.f32 %v561, %v521
      %v566 = vld [vmem:[%s396] sm:$0xff]
      %v567 = vadd.f32 %v564, %v565
      %v568 = vadd.f32 %v566, %v567
      %569 = vst [vmem:[%s396] sm:$0xff] %v568
      %s570 = scalar_lea.vmem %s396, 8
      %v571 = vld [vmem:[%s570] sm:$0xff]
      %v572 = vadd.f32 %v520, %v521
      %v573 = vadd.f32 %v571, %v572
      %574 = vst [vmem:[%s570] sm:$0xff] %v573
      %s575 = scalar_lea.vmem %s396, 16
      %v576 = vld [vmem:[%s575] sm:$0xff]
      %v577 = vadd.f32 %v524, %v525
      %v578 = vadd.f32 %v576, %v577
      %579 = vst [vmem:[%s575] sm:$0xff] %v578
      %s580 = scalar_lea.vmem %s396, 24
      %v581 = vld [vmem:[%s580] sm:$0xff]
      %v582 = vadd.f32 %v562, %v563
      %v583 = vadd.f32 %v581, %v582
      %584 = vst [vmem:[%s580] sm:$0xff] %v583
      %v585 = vsub.f32 %v491, %v482
      %v586 = vsub.f32 %v492, %v483
      %v587 = vand.u32 2147483647, %v585
      %v588 = vand.u32 2147483647, %v586
      %v589 = vmul.f32 %v587, %v486
      %v590 = vmul.f32 %v588, %v487
      %s591 = scalar_lea.vmem %s396, 32
      %v592 = vld [vmem:[%s591] sm:$0xff]
      %v593 = vadd.f32 %v589, %v590
      %v594 = vadd.f32 %v592, %v593
      %595 = vst [vmem:[%s591] sm:$0xff] %v594
      %s596 = scalar_lea.vmem %s396, 40
      %v597 = vld [vmem:[%s596] sm:$0xff]
      %v598 = vadd.f32 %v486, %v487
      %v599 = vadd.f32 %v597, %v598
      %600 = vst [vmem:[%s596] sm:$0xff] %v599
      %v601 = vmul.f32 %v494, %v520
      %v602 = vmul.f32 %v495, %v521
      %s603 = scalar_lea.vmem %s396, 48
      %v604 = vld [vmem:[%s603] sm:$0xff]
      %v605 = vadd.f32 %v601, %v602
      %v606 = vadd.f32 %v604, %v605
      %607 = vst [vmem:[%s603] sm:$0xff] %v606
      %v608 = vmul.f32 %v494, %v480
      %v609 = vmul.f32 %v495, %v481
      %s610 = scalar_lea.vmem %s396, 56
      %v611 = vld [vmem:[%s610] sm:$0xff]
      %v612 = vadd.f32 %v608, %v609
      %v613 = vadd.f32 %v611, %v612
      %614 = vst [vmem:[%s610] sm:$0xff] %v613
      %v615 = vxor.u32 %v497, 2147483648
      %v616 = vxor.u32 %v498, 2147483648
      %v617 = vmul.f32 %v615, 1.442695
      %v618 = vpow.pop %v617
      %v619 = vmul.f32 %v616, 1.442695
      %v620 = vpow.pop %v619
      %v621 = vadd.f32 %v618, 1.0
      %v622 = vadd.f32 %v620, 1.0
      %v623 = vrcp.pop %v621
      %v624 = vmul.f32 1.0, %v623
      %v625 = vrcp.pop %v622
      %v626 = vmul.f32 1.0, %v625
      %v627 = vmul.f32 %v624, %v518
      %v628 = vmul.f32 %v626, %v519
      %v629 = vsub.f32 1.0, %v624
      %v630 = vsub.f32 1.0, %v626
      %v631 = vsub.f32 1.0, %v518
      %v632 = vsub.f32 1.0, %v519
      %v633 = vmul.f32 %v629, %v631
      %v634 = vmul.f32 %v630, %v632
      %v635 = vadd.f32 %v627, %v633
      %v636 = vadd.f32 %v628, %v634
      %v637 = vmax.f32 %v635, 1e-12
      %v638 = vmax.f32 %v636, 1e-12
      %v639 = vlog2.pop %v637
      %v640 = vmul.f32 %v639, 0.6931472
      %v641 = vlog2.pop %v638
      %v642 = vmul.f32 %v641, 0.6931472
      %v643 = vsub.f32 0.0, %v640
      %v644 = vsub.f32 0.0, %v642
      %v645 = vsub.f32 1.0, %v635
      %v646 = vsub.f32 1.0, %v636
      %v647 = vmul.f32 %v645, %v645
      %v648 = vmul.f32 %v646, %v646
      %v649 = vmul.f32 %v647, %v643
      %v650 = vmul.f32 %v648, %v644
      %v651 = vmul.f32 %v518, 0.25
      %v652 = vmul.f32 %v519, 0.25
      %v653 = vmul.f32 %v631, 0.75
      %v654 = vmul.f32 %v632, 0.75
      %v655 = vadd.f32 %v651, %v653
      %v656 = vadd.f32 %v652, %v654
      %v657 = vmul.f32 %v649, %v655
      %v658 = vmul.f32 %v650, %v656
      %v659 = vxor.u32 %v500, 2147483648
      %v660 = vxor.u32 %v501, 2147483648
      %v661 = vmul.f32 %v659, 1.442695
      %v662 = vpow.pop %v661
      %v663 = vmul.f32 %v660, 1.442695
      %v664 = vpow.pop %v663
      %v665 = vadd.f32 %v662, 1.0
      %v666 = vadd.f32 %v664, 1.0
      %v667 = vrcp.pop %v665
      %v668 = vmul.f32 1.0, %v667
      %v669 = vrcp.pop %v666
      %v670 = vmul.f32 1.0, %v669
      %v671 = vmul.f32 %v668, %v512
      %v672 = vmul.f32 %v670, %v513
      %v673 = vsub.f32 1.0, %v668
      %v674 = vsub.f32 1.0, %v670
      %v675 = vsub.f32 1.0, %v512
      %v676 = vsub.f32 1.0, %v513
      %v677 = vmul.f32 %v673, %v675
      %v678 = vmul.f32 %v674, %v676
      %v679 = vadd.f32 %v671, %v677
      %v680 = vadd.f32 %v672, %v678
      %v681 = vmax.f32 %v679, 1e-12
      %v682 = vmax.f32 %v680, 1e-12
      %v683 = vlog2.pop %v681
      %v684 = vmul.f32 %v683, 0.6931472
      %v685 = vlog2.pop %v682
      %v686 = vmul.f32 %v685, 0.6931472
      %v687 = vsub.f32 0.0, %v684
      %v688 = vsub.f32 0.0, %v686
      %v689 = vsub.f32 1.0, %v679
      %v690 = vsub.f32 1.0, %v680
      %v691 = vmul.f32 %v689, %v689
      %v692 = vmul.f32 %v690, %v690
      %v693 = vmul.f32 %v691, %v687
      %v694 = vmul.f32 %v692, %v688
      %v695 = vmul.f32 %v512, 0.25
      %v696 = vmul.f32 %v513, 0.25
      %v697 = vmul.f32 %v675, 0.75
      %v698 = vmul.f32 %v676, 0.75
      %v699 = vadd.f32 %v695, %v697
      %v700 = vadd.f32 %v696, %v698
      %v701 = vmul.f32 %v693, %v699
      %v702 = vmul.f32 %v694, %v700
      %v703 = vadd.f32 %v657, %v701
      %v704 = vadd.f32 %v658, %v702
      %v705 = vlaneseq
      %v706 = vshrl.u32 %v705, 7
      %v707 = vadd.s32 %v706, 8
      %v708 = vlaneseq
      %v709 = vand.u32 %v708, 127
      %s710 = smul.u32 %s21, 16
      %v711 = vstv %s710
      %v712 = vadd.s32 %v706, %v711
      %v713 = vadd.s32 %v707, %v711
      %v714 = vmul.u32 %v712, 128
      %v715 = vmul.u32 %v713, 128
      %v716 = vadd.s32 %v714, %v709
      %v717 = vadd.s32 %v715, %v709
      %vm718 = vcmp.lt.s32.totalorder %v716, 256
      %vm719 = vcmp.lt.s32.totalorder %v717, 256
      %v720 = vsel %vm718, %v703, 0.0
      %v721 = vsel %vm719, %v704, 0.0
      %s722 = scalar_lea.vmem %s396, 64
      %v723 = vld [vmem:[%s722] sm:$0xff]
      %v724 = vadd.f32 %v720, %v721
      %v725 = vadd.f32 %v723, %v724
      %726 = vst [vmem:[%s722] sm:$0xff] %v725
      %v727 = vsub.f32 %v562, 0.001
      %vm728 = vcmp.gt.f32.partialorder %v727, 0.0
      %v729 = vsel %vm728, 1, 0
      %v730 = vcvt.s32.f32 %v729
      %v731 = vadd.f32 %v730, 0.0
      %v732 = vmul.f32 %v730, %v727
      %v733 = vadd.f32 %v732, 0.0
      %v734 = vsub.f32 %v563, 0.001
      %vm735 = vcmp.gt.f32.partialorder %v734, 0.0
      %v736 = vsel %vm735, 1, 0
      %v737 = vcvt.s32.f32 %v736
      %v738 = vadd.f32 %v731, %v737
      %v739 = vmul.f32 %v737, %v734
      %v740 = vadd.f32 %v733, %v739
      %s741 = scalar_lea.vmem %s396, 72
      %v742 = vld [vmem:[%s741] sm:$0xff]
      %v743 = vadd.f32 %v742, %v738
      %744 = vst [vmem:[%s741] sm:$0xff] %v743
      %s745 = scalar_lea.vmem %s396, 328
      %v746 = vld [vmem:[%s745] sm:$0xff]
      %v747 = vadd.f32 %v746, %v740
      %748 = vst [vmem:[%s745] sm:$0xff] %v747
      %v749 = vsub.f32 %v562, 0.0014497407
      %vm750 = vcmp.gt.f32.partialorder %v749, 0.0
      %v751 = vsel %vm750, 1, 0
      %v752 = vcvt.s32.f32 %v751
      %v753 = vadd.f32 %v752, 0.0
      %v754 = vmul.f32 %v752, %v749
      %v755 = vadd.f32 %v754, 0.0
      %v756 = vsub.f32 %v563, 0.0014497407
      %vm757 = vcmp.gt.f32.partialorder %v756, 0.0
      %v758 = vsel %vm757, 1, 0
      %v759 = vcvt.s32.f32 %v758
      %v760 = vadd.f32 %v753, %v759
      %v761 = vmul.f32 %v759, %v756
      %v762 = vadd.f32 %v755, %v761
      %s763 = scalar_lea.vmem %s396, 80
      %v764 = vld [vmem:[%s763] sm:$0xff]
      %v765 = vadd.f32 %v764, %v760
      %766 = vst [vmem:[%s763] sm:$0xff] %v765
      %s767 = scalar_lea.vmem %s396, 336
      %v768 = vld [vmem:[%s767] sm:$0xff]
      %v769 = vadd.f32 %v768, %v762
      %770 = vst [vmem:[%s767] sm:$0xff] %v769
      %v771 = vsub.f32 %v562, 0.002101748
      %vm772 = vcmp.gt.f32.partialorder %v771, 0.0
      %v773 = vsel %vm772, 1, 0
      %v774 = vcvt.s32.f32 %v773
      %v775 = vadd.f32 %v774, 0.0
      %v776 = vmul.f32 %v774, %v771
      %v777 = vadd.f32 %v776, 0.0
      %v778 = vsub.f32 %v563, 0.002101748
      %vm779 = vcmp.gt.f32.partialorder %v778, 0.0
      %v780 = vsel %vm779, 1, 0
      %v781 = vcvt.s32.f32 %v780
      %v782 = vadd.f32 %v775, %v781
      %v783 = vmul.f32 %v781, %v778
      %v784 = vadd.f32 %v777, %v783
      %s785 = scalar_lea.vmem %s396, 88
      %v786 = vld [vmem:[%s785] sm:$0xff]
      %v787 = vadd.f32 %v786, %v782
      %788 = vst [vmem:[%s785] sm:$0xff] %v787
      %s789 = scalar_lea.vmem %s396, 344
      %v790 = vld [vmem:[%s789] sm:$0xff]
      %v791 = vadd.f32 %v790, %v784
      %792 = vst [vmem:[%s789] sm:$0xff] %v791
      %v793 = vsub.f32 %v562, 0.0030469897
      %vm794 = vcmp.gt.f32.partialorder %v793, 0.0
      %v795 = vsel %vm794, 1, 0
      %v796 = vcvt.s32.f32 %v795
      %v797 = vadd.f32 %v796, 0.0
      %v798 = vmul.f32 %v796, %v793
      %v799 = vadd.f32 %v798, 0.0
      %v800 = vsub.f32 %v563, 0.0030469897
      %vm801 = vcmp.gt.f32.partialorder %v800, 0.0
      %v802 = vsel %vm801, 1, 0
      %v803 = vcvt.s32.f32 %v802
      %v804 = vadd.f32 %v797, %v803
      %v805 = vmul.f32 %v803, %v800
      %v806 = vadd.f32 %v799, %v805
      %s807 = scalar_lea.vmem %s396, 96
      %v808 = vld [vmem:[%s807] sm:$0xff]
      %v809 = vadd.f32 %v808, %v804
      %810 = vst [vmem:[%s807] sm:$0xff] %v809
      %s811 = scalar_lea.vmem %s396, 352
      %v812 = vld [vmem:[%s811] sm:$0xff]
      %v813 = vadd.f32 %v812, %v806
      %814 = vst [vmem:[%s811] sm:$0xff] %v813
      %v815 = vsub.f32 %v562, 0.004417345
      %vm816 = vcmp.gt.f32.partialorder %v815, 0.0
      %v817 = vsel %vm816, 1, 0
      %v818 = vcvt.s32.f32 %v817
      %v819 = vadd.f32 %v818, 0.0
      %v820 = vmul.f32 %v818, %v815
      %v821 = vadd.f32 %v820, 0.0
      %v822 = vsub.f32 %v563, 0.004417345
      %vm823 = vcmp.gt.f32.partialorder %v822, 0.0
      %v824 = vsel %vm823, 1, 0
      %v825 = vcvt.s32.f32 %v824
      %v826 = vadd.f32 %v819, %v825
      %v827 = vmul.f32 %v825, %v822
      %v828 = vadd.f32 %v821, %v827
      %s829 = scalar_lea.vmem %s396, 104
      %v830 = vld [vmem:[%s829] sm:$0xff]
      %v831 = vadd.f32 %v830, %v826
      %832 = vst [vmem:[%s829] sm:$0xff] %v831
      %s833 = scalar_lea.vmem %s396, 360
      %v834 = vld [vmem:[%s833] sm:$0xff]
      %v835 = vadd.f32 %v834, %v828
      %836 = vst [vmem:[%s833] sm:$0xff] %v835
      %v837 = vsub.f32 %v562, 0.006404004
      %vm838 = vcmp.gt.f32.partialorder %v837, 0.0
      %v839 = vsel %vm838, 1, 0
      %v840 = vcvt.s32.f32 %v839
      %v841 = vadd.f32 %v840, 0.0
      %v842 = vmul.f32 %v840, %v837
      %v843 = vadd.f32 %v842, 0.0
      %v844 = vsub.f32 %v563, 0.006404004
      %vm845 = vcmp.gt.f32.partialorder %v844, 0.0
      %v846 = vsel %vm845, 1, 0
      %v847 = vcvt.s32.f32 %v846
      %v848 = vadd.f32 %v841, %v847
      %v849 = vmul.f32 %v847, %v844
      %v850 = vadd.f32 %v843, %v849
      %s851 = scalar_lea.vmem %s396, 112
      %v852 = vld [vmem:[%s851] sm:$0xff]
      %v853 = vadd.f32 %v852, %v848
      %854 = vst [vmem:[%s851] sm:$0xff] %v853
      %s855 = scalar_lea.vmem %s396, 368
      %v856 = vld [vmem:[%s855] sm:$0xff]
      %v857 = vadd.f32 %v856, %v850
      %858 = vst [vmem:[%s855] sm:$0xff] %v857
      %v859 = vsub.f32 %v562, 0.009284145
      %vm860 = vcmp.gt.f32.partialorder %v859, 0.0
      %v861 = vsel %vm860, 1, 0
      %v862 = vcvt.s32.f32 %v861
      %v863 = vadd.f32 %v862, 0.0
      %v864 = vmul.f32 %v862, %v859
      %v865 = vadd.f32 %v864, 0.0
      %v866 = vsub.f32 %v563, 0.009284145
      %vm867 = vcmp.gt.f32.partialorder %v866, 0.0
      %v868 = vsel %vm867, 1, 0
      %v869 = vcvt.s32.f32 %v868
      %v870 = vadd.f32 %v863, %v869
      %v871 = vmul.f32 %v869, %v866
      %v872 = vadd.f32 %v865, %v871
      %s873 = scalar_lea.vmem %s396, 120
      %v874 = vld [vmem:[%s873] sm:$0xff]
      %v875 = vadd.f32 %v874, %v870
      %876 = vst [vmem:[%s873] sm:$0xff] %v875
      %s877 = scalar_lea.vmem %s396, 376
      %v878 = vld [vmem:[%s877] sm:$0xff]
      %v879 = vadd.f32 %v878, %v872
      %880 = vst [vmem:[%s877] sm:$0xff] %v879
      %v881 = vsub.f32 %v562, 0.013459603
      %vm882 = vcmp.gt.f32.partialorder %v881, 0.0
      %v883 = vsel %vm882, 1, 0
      %v884 = vcvt.s32.f32 %v883
      %v885 = vadd.f32 %v884, 0.0
      %v886 = vmul.f32 %v884, %v881
      %v887 = vadd.f32 %v886, 0.0
      %v888 = vsub.f32 %v563, 0.013459603
      %vm889 = vcmp.gt.f32.partialorder %v888, 0.0
      %v890 = vsel %vm889, 1, 0
      %v891 = vcvt.s32.f32 %v890
      %v892 = vadd.f32 %v885, %v891
      %v893 = vmul.f32 %v891, %v888
      %v894 = vadd.f32 %v887, %v893
      %s895 = scalar_lea.vmem %s396, 128
      %v896 = vld [vmem:[%s895] sm:$0xff]
      %v897 = vadd.f32 %v896, %v892
      %898 = vst [vmem:[%s895] sm:$0xff] %v897
      %s899 = scalar_lea.vmem %s396, 384
      %v900 = vld [vmem:[%s899] sm:$0xff]
      %v901 = vadd.f32 %v900, %v894
      %902 = vst [vmem:[%s899] sm:$0xff] %v901
      %v903 = vsub.f32 %v562, 0.019512935
      %vm904 = vcmp.gt.f32.partialorder %v903, 0.0
      %v905 = vsel %vm904, 1, 0
      %v906 = vcvt.s32.f32 %v905
      %v907 = vadd.f32 %v906, 0.0
      %v908 = vmul.f32 %v906, %v903
      %v909 = vadd.f32 %v908, 0.0
      %v910 = vsub.f32 %v563, 0.019512935
      %vm911 = vcmp.gt.f32.partialorder %v910, 0.0
      %v912 = vsel %vm911, 1, 0
      %v913 = vcvt.s32.f32 %v912
      %v914 = vadd.f32 %v907, %v913
      %v915 = vmul.f32 %v913, %v910
      %v916 = vadd.f32 %v909, %v915
      %s917 = scalar_lea.vmem %s396, 136
      %v918 = vld [vmem:[%s917] sm:$0xff]
      %v919 = vadd.f32 %v918, %v914
      %920 = vst [vmem:[%s917] sm:$0xff] %v919
      %s921 = scalar_lea.vmem %s396, 392
      %v922 = vld [vmem:[%s921] sm:$0xff]
      %v923 = vadd.f32 %v922, %v916
      %924 = vst [vmem:[%s921] sm:$0xff] %v923
      %v925 = vsub.f32 %v562, 0.028288694
      %vm926 = vcmp.gt.f32.partialorder %v925, 0.0
      %v927 = vsel %vm926, 1, 0
      %v928 = vcvt.s32.f32 %v927
      %v929 = vadd.f32 %v928, 0.0
      %v930 = vmul.f32 %v928, %v925
      %v931 = vadd.f32 %v930, 0.0
      %v932 = vsub.f32 %v563, 0.028288694
      %vm933 = vcmp.gt.f32.partialorder %v932, 0.0
      %v934 = vsel %vm933, 1, 0
      %v935 = vcvt.s32.f32 %v934
      %v936 = vadd.f32 %v929, %v935
      %v937 = vmul.f32 %v935, %v932
      %v938 = vadd.f32 %v931, %v937
      %s939 = scalar_lea.vmem %s396, 144
      %v940 = vld [vmem:[%s939] sm:$0xff]
      %v941 = vadd.f32 %v940, %v936
      %942 = vst [vmem:[%s939] sm:$0xff] %v941
      %s943 = scalar_lea.vmem %s396, 400
      %v944 = vld [vmem:[%s943] sm:$0xff]
      %v945 = vadd.f32 %v944, %v938
      %946 = vst [vmem:[%s943] sm:$0xff] %v945
      %v947 = vsub.f32 %v562, 0.04101127
      %vm948 = vcmp.gt.f32.partialorder %v947, 0.0
      %v949 = vsel %vm948, 1, 0
      %v950 = vcvt.s32.f32 %v949
      %v951 = vadd.f32 %v950, 0.0
      %v952 = vmul.f32 %v950, %v947
      %v953 = vadd.f32 %v952, 0.0
      %v954 = vsub.f32 %v563, 0.04101127
      %vm955 = vcmp.gt.f32.partialorder %v954, 0.0
      %v956 = vsel %vm955, 1, 0
      %v957 = vcvt.s32.f32 %v956
      %v958 = vadd.f32 %v951, %v957
      %v959 = vmul.f32 %v957, %v954
      %v960 = vadd.f32 %v953, %v959
      %s961 = scalar_lea.vmem %s396, 152
      %v962 = vld [vmem:[%s961] sm:$0xff]
      %v963 = vadd.f32 %v962, %v958
      %964 = vst [vmem:[%s961] sm:$0xff] %v963
      %s965 = scalar_lea.vmem %s396, 408
      %v966 = vld [vmem:[%s965] sm:$0xff]
      %v967 = vadd.f32 %v966, %v960
      %968 = vst [vmem:[%s965] sm:$0xff] %v967
      %v969 = vsub.f32 %v562, 0.059455708
      %vm970 = vcmp.gt.f32.partialorder %v969, 0.0
      %v971 = vsel %vm970, 1, 0
      %v972 = vcvt.s32.f32 %v971
      %v973 = vadd.f32 %v972, 0.0
      %v974 = vmul.f32 %v972, %v969
      %v975 = vadd.f32 %v974, 0.0
      %v976 = vsub.f32 %v563, 0.059455708
      %vm977 = vcmp.gt.f32.partialorder %v976, 0.0
      %v978 = vsel %vm977, 1, 0
      %v979 = vcvt.s32.f32 %v978
      %v980 = vadd.f32 %v973, %v979
      %v981 = vmul.f32 %v979, %v976
      %v982 = vadd.f32 %v975, %v981
      %s983 = scalar_lea.vmem %s396, 160
      %v984 = vld [vmem:[%s983] sm:$0xff]
      %v985 = vadd.f32 %v984, %v980
      %986 = vst [vmem:[%s983] sm:$0xff] %v985
      %s987 = scalar_lea.vmem %s396, 416
      %v988 = vld [vmem:[%s987] sm:$0xff]
      %v989 = vadd.f32 %v988, %v982
      %990 = vst [vmem:[%s987] sm:$0xff] %v989
      %v991 = vsub.f32 %v562, 0.08619536
      %vm992 = vcmp.gt.f32.partialorder %v991, 0.0
      %v993 = vsel %vm992, 1, 0
      %v994 = vcvt.s32.f32 %v993
      %v995 = vadd.f32 %v994, 0.0
      %v996 = vmul.f32 %v994, %v991
      %v997 = vadd.f32 %v996, 0.0
      %v998 = vsub.f32 %v563, 0.08619536
      %vm999 = vcmp.gt.f32.partialorder %v998, 0.0
      %v1000 = vsel %vm999, 1, 0
      %v1001 = vcvt.s32.f32 %v1000
      %v1002 = vadd.f32 %v995, %v1001
      %v1003 = vmul.f32 %v1001, %v998
      %v1004 = vadd.f32 %v997, %v1003
      %s1005 = scalar_lea.vmem %s396, 168
      %v1006 = vld [vmem:[%s1005] sm:$0xff]
      %v1007 = vadd.f32 %v1006, %v1002
      %1008 = vst [vmem:[%s1005] sm:$0xff] %v1007
      %s1009 = scalar_lea.vmem %s396, 424
      %v1010 = vld [vmem:[%s1009] sm:$0xff]
      %v1011 = vadd.f32 %v1010, %v1004
      %1012 = vst [vmem:[%s1009] sm:$0xff] %v1011
      %v1013 = vsub.f32 %v562, 0.124960914
      %vm1014 = vcmp.gt.f32.partialorder %v1013, 0.0
      %v1015 = vsel %vm1014, 1, 0
      %v1016 = vcvt.s32.f32 %v1015
      %v1017 = vadd.f32 %v1016, 0.0
      %v1018 = vmul.f32 %v1016, %v1013
      %v1019 = vadd.f32 %v1018, 0.0
      %v1020 = vsub.f32 %v563, 0.124960914
      %vm1021 = vcmp.gt.f32.partialorder %v1020, 0.0
      %v1022 = vsel %vm1021, 1, 0
      %v1023 = vcvt.s32.f32 %v1022
      %v1024 = vadd.f32 %v1017, %v1023
      %v1025 = vmul.f32 %v1023, %v1020
      %v1026 = vadd.f32 %v1019, %v1025
      %s1027 = scalar_lea.vmem %s396, 176
      %v1028 = vld [vmem:[%s1027] sm:$0xff]
      %v1029 = vadd.f32 %v1028, %v1024
      %1030 = vst [vmem:[%s1027] sm:$0xff] %v1029
      %s1031 = scalar_lea.vmem %s396, 432
      %v1032 = vld [vmem:[%s1031] sm:$0xff]
      %v1033 = vadd.f32 %v1032, %v1026
      %1034 = vst [vmem:[%s1031] sm:$0xff] %v1033
      %v1035 = vsub.f32 %v562, 0.18116093
      %vm1036 = vcmp.gt.f32.partialorder %v1035, 0.0
      %v1037 = vsel %vm1036, 1, 0
      %v1038 = vcvt.s32.f32 %v1037
      %v1039 = vadd.f32 %v1038, 0.0
      %v1040 = vmul.f32 %v1038, %v1035
      %v1041 = vadd.f32 %v1040, 0.0
      %v1042 = vsub.f32 %v563, 0.18116093
      %vm1043 = vcmp.gt.f32.partialorder %v1042, 0.0
      %v1044 = vsel %vm1043, 1, 0
      %v1045 = vcvt.s32.f32 %v1044
      %v1046 = vadd.f32 %v1039, %v1045
      %v1047 = vmul.f32 %v1045, %v1042
      %v1048 = vadd.f32 %v1041, %v1047
      %s1049 = scalar_lea.vmem %s396, 184
      %v1050 = vld [vmem:[%s1049] sm:$0xff]
      %v1051 = vadd.f32 %v1050, %v1046
      %1052 = vst [vmem:[%s1049] sm:$0xff] %v1051
      %s1053 = scalar_lea.vmem %s396, 440
      %v1054 = vld [vmem:[%s1053] sm:$0xff]
      %v1055 = vadd.f32 %v1054, %v1048
      %1056 = vst [vmem:[%s1053] sm:$0xff] %v1055
      %v1057 = vsub.f32 %v562, 0.26263636
      %vm1058 = vcmp.gt.f32.partialorder %v1057, 0.0
      %v1059 = vsel %vm1058, 1, 0
      %v1060 = vcvt.s32.f32 %v1059
      %v1061 = vadd.f32 %v1060, 0.0
      %v1062 = vmul.f32 %v1060, %v1057
      %v1063 = vadd.f32 %v1062, 0.0
      %v1064 = vsub.f32 %v563, 0.26263636
      %vm1065 = vcmp.gt.f32.partialorder %v1064, 0.0
      %v1066 = vsel %vm1065, 1, 0
      %v1067 = vcvt.s32.f32 %v1066
      %v1068 = vadd.f32 %v1061, %v1067
      %v1069 = vmul.f32 %v1067, %v1064
      %v1070 = vadd.f32 %v1063, %v1069
      %s1071 = scalar_lea.vmem %s396, 192
      %v1072 = vld [vmem:[%s1071] sm:$0xff]
      %v1073 = vadd.f32 %v1072, %v1068
      %1074 = vst [vmem:[%s1071] sm:$0xff] %v1073
      %s1075 = scalar_lea.vmem %s396, 448
      %v1076 = vld [vmem:[%s1075] sm:$0xff]
      %v1077 = vadd.f32 %v1076, %v1070
      %1078 = vst [vmem:[%s1075] sm:$0xff] %v1077
      %v1079 = vsub.f32 %v562, 0.3807546
      %vm1080 = vcmp.gt.f32.partialorder %v1079, 0.0
      %v1081 = vsel %vm1080, 1, 0
      %v1082 = vcvt.s32.f32 %v1081
      %v1083 = vadd.f32 %v1082, 0.0
      %v1084 = vmul.f32 %v1082, %v1079
      %v1085 = vadd.f32 %v1084, 0.0
      %v1086 = vsub.f32 %v563, 0.3807546
      %vm1087 = vcmp.gt.f32.partialorder %v1086, 0.0
      %v1088 = vsel %vm1087, 1, 0
      %v1089 = vcvt.s32.f32 %v1088
      %v1090 = vadd.f32 %v1083, %v1089
      %v1091 = vmul.f32 %v1089, %v1086
      %v1092 = vadd.f32 %v1085, %v1091
      %s1093 = scalar_lea.vmem %s396, 200
      %v1094 = vld [vmem:[%s1093] sm:$0xff]
      %v1095 = vadd.f32 %v1094, %v1090
      %1096 = vst [vmem:[%s1093] sm:$0xff] %v1095
      %s1097 = scalar_lea.vmem %s396, 456
      %v1098 = vld [vmem:[%s1097] sm:$0xff]
      %v1099 = vadd.f32 %v1098, %v1092
      %1100 = vst [vmem:[%s1097] sm:$0xff] %v1099
      %v1101 = vsub.f32 %v562, 0.55199546
      %vm1102 = vcmp.gt.f32.partialorder %v1101, 0.0
      %v1103 = vsel %vm1102, 1, 0
      %v1104 = vcvt.s32.f32 %v1103
      %v1105 = vadd.f32 %v1104, 0.0
      %v1106 = vmul.f32 %v1104, %v1101
      %v1107 = vadd.f32 %v1106, 0.0
      %v1108 = vsub.f32 %v563, 0.55199546
      %vm1109 = vcmp.gt.f32.partialorder %v1108, 0.0
      %v1110 = vsel %vm1109, 1, 0
      %v1111 = vcvt.s32.f32 %v1110
      %v1112 = vadd.f32 %v1105, %v1111
      %v1113 = vmul.f32 %v1111, %v1108
      %v1114 = vadd.f32 %v1107, %v1113
      %s1115 = scalar_lea.vmem %s396, 208
      %v1116 = vld [vmem:[%s1115] sm:$0xff]
      %v1117 = vadd.f32 %v1116, %v1112
      %1118 = vst [vmem:[%s1115] sm:$0xff] %v1117
      %s1119 = scalar_lea.vmem %s396, 464
      %v1120 = vld [vmem:[%s1119] sm:$0xff]
      %v1121 = vadd.f32 %v1120, %v1114
      %1122 = vst [vmem:[%s1119] sm:$0xff] %v1121
      %v1123 = vsub.f32 %v562, 0.80025023
      %vm1124 = vcmp.gt.f32.partialorder %v1123, 0.0
      %v1125 = vsel %vm1124, 1, 0
      %v1126 = vcvt.s32.f32 %v1125
      %v1127 = vadd.f32 %v1126, 0.0
      %v1128 = vmul.f32 %v1126, %v1123
      %v1129 = vadd.f32 %v1128, 0.0
      %v1130 = vsub.f32 %v563, 0.80025023
      %vm1131 = vcmp.gt.f32.partialorder %v1130, 0.0
      %v1132 = vsel %vm1131, 1, 0
      %v1133 = vcvt.s32.f32 %v1132
      %v1134 = vadd.f32 %v1127, %v1133
      %v1135 = vmul.f32 %v1133, %v1130
      %v1136 = vadd.f32 %v1129, %v1135
      %s1137 = scalar_lea.vmem %s396, 216
      %v1138 = vld [vmem:[%s1137] sm:$0xff]
      %v1139 = vadd.f32 %v1138, %v1134
      %1140 = vst [vmem:[%s1137] sm:$0xff] %v1139
      %s1141 = scalar_lea.vmem %s396, 472
      %v1142 = vld [vmem:[%s1141] sm:$0xff]
      %v1143 = vadd.f32 %v1142, %v1136
      %1144 = vst [vmem:[%s1141] sm:$0xff] %v1143
      %v1145 = vsub.f32 %v562, 1.1601553
      %vm1146 = vcmp.gt.f32.partialorder %v1145, 0.0
      %v1147 = vsel %vm1146, 1, 0
      %v1148 = vcvt.s32.f32 %v1147
      %v1149 = vadd.f32 %v1148, 0.0
      %v1150 = vmul.f32 %v1148, %v1145
      %v1151 = vadd.f32 %v1150, 0.0
      %v1152 = vsub.f32 %v563, 1.1601553
      %vm1153 = vcmp.gt.f32.partialorder %v1152, 0.0
      %v1154 = vsel %vm1153, 1, 0
      %v1155 = vcvt.s32.f32 %v1154
      %v1156 = vadd.f32 %v1149, %v1155
      %v1157 = vmul.f32 %v1155, %v1152
      %v1158 = vadd.f32 %v1151, %v1157
      %s1159 = scalar_lea.vmem %s396, 224
      %v1160 = vld [vmem:[%s1159] sm:$0xff]
      %v1161 = vadd.f32 %v1160, %v1156
      %1162 = vst [vmem:[%s1159] sm:$0xff] %v1161
      %s1163 = scalar_lea.vmem %s396, 480
      %v1164 = vld [vmem:[%s1163] sm:$0xff]
      %v1165 = vadd.f32 %v1164, %v1158
      %1166 = vst [vmem:[%s1163] sm:$0xff] %v1165
      %v1167 = vsub.f32 %v562, 1.6819243
      %vm1168 = vcmp.gt.f32.partialorder %v1167, 0.0
      %v1169 = vsel %vm1168, 1, 0
      %v1170 = vcvt.s32.f32 %v1169
      %v1171 = vadd.f32 %v1170, 0.0
      %v1172 = vmul.f32 %v1170, %v1167
      %v1173 = vadd.f32 %v1172, 0.0
      %v1174 = vsub.f32 %v563, 1.6819243
      %vm1175 = vcmp.gt.f32.partialorder %v1174, 0.0
      %v1176 = vsel %vm1175, 1, 0
      %v1177 = vcvt.s32.f32 %v1176
      %v1178 = vadd.f32 %v1171, %v1177
      %v1179 = vmul.f32 %v1177, %v1174
      %v1180 = vadd.f32 %v1173, %v1179
      %s1181 = scalar_lea.vmem %s396, 232
      %v1182 = vld [vmem:[%s1181] sm:$0xff]
      %v1183 = vadd.f32 %v1182, %v1178
      %1184 = vst [vmem:[%s1181] sm:$0xff] %v1183
      %s1185 = scalar_lea.vmem %s396, 488
      %v1186 = vld [vmem:[%s1185] sm:$0xff]
      %v1187 = vadd.f32 %v1186, %v1180
      %1188 = vst [vmem:[%s1185] sm:$0xff] %v1187
      %v1189 = vsub.f32 %v562, 2.438354
      %vm1190 = vcmp.gt.f32.partialorder %v1189, 0.0
      %v1191 = vsel %vm1190, 1, 0
      %v1192 = vcvt.s32.f32 %v1191
      %v1193 = vadd.f32 %v1192, 0.0
      %v1194 = vmul.f32 %v1192, %v1189
      %v1195 = vadd.f32 %v1194, 0.0
      %v1196 = vsub.f32 %v563, 2.438354
      %vm1197 = vcmp.gt.f32.partialorder %v1196, 0.0
      %v1198 = vsel %vm1197, 1, 0
      %v1199 = vcvt.s32.f32 %v1198
      %v1200 = vadd.f32 %v1193, %v1199
      %v1201 = vmul.f32 %v1199, %v1196
      %v1202 = vadd.f32 %v1195, %v1201
      %s1203 = scalar_lea.vmem %s396, 240
      %v1204 = vld [vmem:[%s1203] sm:$0xff]
      %v1205 = vadd.f32 %v1204, %v1200
      %1206 = vst [vmem:[%s1203] sm:$0xff] %v1205
      %s1207 = scalar_lea.vmem %s396, 496
      %v1208 = vld [vmem:[%s1207] sm:$0xff]
      %v1209 = vadd.f32 %v1208, %v1202
      %1210 = vst [vmem:[%s1207] sm:$0xff] %v1209
      %v1211 = vsub.f32 %v562, 3.534981
      %vm1212 = vcmp.gt.f32.partialorder %v1211, 0.0
      %v1213 = vsel %vm1212, 1, 0
      %v1214 = vcvt.s32.f32 %v1213
      %v1215 = vadd.f32 %v1214, 0.0
      %v1216 = vmul.f32 %v1214, %v1211
      %v1217 = vadd.f32 %v1216, 0.0
      %v1218 = vsub.f32 %v563, 3.534981
      %vm1219 = vcmp.gt.f32.partialorder %v1218, 0.0
      %v1220 = vsel %vm1219, 1, 0
      %v1221 = vcvt.s32.f32 %v1220
      %v1222 = vadd.f32 %v1215, %v1221
      %v1223 = vmul.f32 %v1221, %v1218
      %v1224 = vadd.f32 %v1217, %v1223
      %s1225 = scalar_lea.vmem %s396, 248
      %v1226 = vld [vmem:[%s1225] sm:$0xff]
      %v1227 = vadd.f32 %v1226, %v1222
      %1228 = vst [vmem:[%s1225] sm:$0xff] %v1227
      %s1229 = scalar_lea.vmem %s396, 504
      %v1230 = vld [vmem:[%s1229] sm:$0xff]
      %v1231 = vadd.f32 %v1230, %v1224
      %1232 = vst [vmem:[%s1229] sm:$0xff] %v1231
      %v1233 = vsub.f32 %v562, 5.124806
      %vm1234 = vcmp.gt.f32.partialorder %v1233, 0.0
      %v1235 = vsel %vm1234, 1, 0
      %v1236 = vcvt.s32.f32 %v1235
      %v1237 = vadd.f32 %v1236, 0.0
      %v1238 = vmul.f32 %v1236, %v1233
      %v1239 = vadd.f32 %v1238, 0.0
      %v1240 = vsub.f32 %v563, 5.124806
      %vm1241 = vcmp.gt.f32.partialorder %v1240, 0.0
      %v1242 = vsel %vm1241, 1, 0
      %v1243 = vcvt.s32.f32 %v1242
      %v1244 = vadd.f32 %v1237, %v1243
      %v1245 = vmul.f32 %v1243, %v1240
      %v1246 = vadd.f32 %v1239, %v1245
      %s1247 = scalar_lea.vmem %s396, 256
      %v1248 = vld [vmem:[%s1247] sm:$0xff]
      %v1249 = vadd.f32 %v1248, %v1244
      %1250 = vst [vmem:[%s1247] sm:$0xff] %v1249
      %s1251 = scalar_lea.vmem %s396, 512
      %v1252 = vld [vmem:[%s1251] sm:$0xff]
      %v1253 = vadd.f32 %v1252, %v1246
      %1254 = vst [vmem:[%s1251] sm:$0xff] %v1253
      %v1255 = vsub.f32 %v562, 7.4296393
      %vm1256 = vcmp.gt.f32.partialorder %v1255, 0.0
      %v1257 = vsel %vm1256, 1, 0
      %v1258 = vcvt.s32.f32 %v1257
      %v1259 = vadd.f32 %v1258, 0.0
      %v1260 = vmul.f32 %v1258, %v1255
      %v1261 = vadd.f32 %v1260, 0.0
      %v1262 = vsub.f32 %v563, 7.4296393
      %vm1263 = vcmp.gt.f32.partialorder %v1262, 0.0
      %v1264 = vsel %vm1263, 1, 0
      %v1265 = vcvt.s32.f32 %v1264
      %v1266 = vadd.f32 %v1259, %v1265
      %v1267 = vmul.f32 %v1265, %v1262
      %v1268 = vadd.f32 %v1261, %v1267
      %s1269 = scalar_lea.vmem %s396, 264
      %v1270 = vld [vmem:[%s1269] sm:$0xff]
      %v1271 = vadd.f32 %v1270, %v1266
      %1272 = vst [vmem:[%s1269] sm:$0xff] %v1271
      %s1273 = scalar_lea.vmem %s396, 520
      %v1274 = vld [vmem:[%s1273] sm:$0xff]
      %v1275 = vadd.f32 %v1274, %v1268
      %1276 = vst [vmem:[%s1273] sm:$0xff] %v1275
      %v1277 = vsub.f32 %v562, 10.77105
      %vm1278 = vcmp.gt.f32.partialorder %v1277, 0.0
      %v1279 = vsel %vm1278, 1, 0
      %v1280 = vcvt.s32.f32 %v1279
      %v1281 = vadd.f32 %v1280, 0.0
      %v1282 = vmul.f32 %v1280, %v1277
      %v1283 = vadd.f32 %v1282, 0.0
      %v1284 = vsub.f32 %v563, 10.77105
      %vm1285 = vcmp.gt.f32.partialorder %v1284, 0.0
      %v1286 = vsel %vm1285, 1, 0
      %v1287 = vcvt.s32.f32 %v1286
      %v1288 = vadd.f32 %v1281, %v1287
      %v1289 = vmul.f32 %v1287, %v1284
      %v1290 = vadd.f32 %v1283, %v1289
      %s1291 = scalar_lea.vmem %s396, 272
      %v1292 = vld [vmem:[%s1291] sm:$0xff]
      %v1293 = vadd.f32 %v1292, %v1288
      %1294 = vst [vmem:[%s1291] sm:$0xff] %v1293
      %s1295 = scalar_lea.vmem %s396, 528
      %v1296 = vld [vmem:[%s1295] sm:$0xff]
      %v1297 = vadd.f32 %v1296, %v1290
      %1298 = vst [vmem:[%s1295] sm:$0xff] %v1297
      %v1299 = vsub.f32 %v562, 15.61523
      %vm1300 = vcmp.gt.f32.partialorder %v1299, 0.0
      %v1301 = vsel %vm1300, 1, 0
      %v1302 = vcvt.s32.f32 %v1301
      %v1303 = vadd.f32 %v1302, 0.0
      %v1304 = vmul.f32 %v1302, %v1299
      %v1305 = vadd.f32 %v1304, 0.0
      %v1306 = vsub.f32 %v563, 15.61523
      %vm1307 = vcmp.gt.f32.partialorder %v1306, 0.0
      %v1308 = vsel %vm1307, 1, 0
      %v1309 = vcvt.s32.f32 %v1308
      %v1310 = vadd.f32 %v1303, %v1309
      %v1311 = vmul.f32 %v1309, %v1306
      %v1312 = vadd.f32 %v1305, %v1311
      %s1313 = scalar_lea.vmem %s396, 280
      %v1314 = vld [vmem:[%s1313] sm:$0xff]
      %v1315 = vadd.f32 %v1314, %v1310
      %1316 = vst [vmem:[%s1313] sm:$0xff] %v1315
      %s1317 = scalar_lea.vmem %s396, 536
      %v1318 = vld [vmem:[%s1317] sm:$0xff]
      %v1319 = vadd.f32 %v1318, %v1312
      %1320 = vst [vmem:[%s1317] sm:$0xff] %v1319
      %v1321 = vsub.f32 %v562, 22.638035
      %vm1322 = vcmp.gt.f32.partialorder %v1321, 0.0
      %v1323 = vsel %vm1322, 1, 0
      %v1324 = vcvt.s32.f32 %v1323
      %v1325 = vadd.f32 %v1324, 0.0
      %v1326 = vmul.f32 %v1324, %v1321
      %v1327 = vadd.f32 %v1326, 0.0
      %v1328 = vsub.f32 %v563, 22.638035
      %vm1329 = vcmp.gt.f32.partialorder %v1328, 0.0
      %v1330 = vsel %vm1329, 1, 0
      %v1331 = vcvt.s32.f32 %v1330
      %v1332 = vadd.f32 %v1325, %v1331
      %v1333 = vmul.f32 %v1331, %v1328
      %v1334 = vadd.f32 %v1327, %v1333
      %s1335 = scalar_lea.vmem %s396, 288
      %v1336 = vld [vmem:[%s1335] sm:$0xff]
      %v1337 = vadd.f32 %v1336, %v1332
      %1338 = vst [vmem:[%s1335] sm:$0xff] %v1337
      %s1339 = scalar_lea.vmem %s396, 544
      %v1340 = vld [vmem:[%s1339] sm:$0xff]
      %v1341 = vadd.f32 %v1340, %v1334
      %1342 = vst [vmem:[%s1339] sm:$0xff] %v1341
      %v1343 = vsub.f32 %v562, 32.81928
      %vm1344 = vcmp.gt.f32.partialorder %v1343, 0.0
      %v1345 = vsel %vm1344, 1, 0
      %v1346 = vcvt.s32.f32 %v1345
      %v1347 = vadd.f32 %v1346, 0.0
      %v1348 = vmul.f32 %v1346, %v1343
      %v1349 = vadd.f32 %v1348, 0.0
      %v1350 = vsub.f32 %v563, 32.81928
      %vm1351 = vcmp.gt.f32.partialorder %v1350, 0.0
      %v1352 = vsel %vm1351, 1, 0
      %v1353 = vcvt.s32.f32 %v1352
      %v1354 = vadd.f32 %v1347, %v1353
      %v1355 = vmul.f32 %v1353, %v1350
      %v1356 = vadd.f32 %v1349, %v1355
      %s1357 = scalar_lea.vmem %s396, 296
      %v1358 = vld [vmem:[%s1357] sm:$0xff]
      %v1359 = vadd.f32 %v1358, %v1354
      %1360 = vst [vmem:[%s1357] sm:$0xff] %v1359
      %s1361 = scalar_lea.vmem %s396, 552
      %v1362 = vld [vmem:[%s1361] sm:$0xff]
      %v1363 = vadd.f32 %v1362, %v1356
      %1364 = vst [vmem:[%s1361] sm:$0xff] %v1363
      %v1365 = vsub.f32 %v562, 47.579445
      %vm1366 = vcmp.gt.f32.partialorder %v1365, 0.0
      %v1367 = vsel %vm1366, 1, 0
      %v1368 = vcvt.s32.f32 %v1367
      %v1369 = vadd.f32 %v1368, 0.0
      %v1370 = vmul.f32 %v1368, %v1365
      %v1371 = vadd.f32 %v1370, 0.0
      %v1372 = vsub.f32 %v563, 47.579445
      %vm1373 = vcmp.gt.f32.partialorder %v1372, 0.0
      %v1374 = vsel %vm1373, 1, 0
      %v1375 = vcvt.s32.f32 %v1374
      %v1376 = vadd.f32 %v1369, %v1375
      %v1377 = vmul.f32 %v1375, %v1372
      %v1378 = vadd.f32 %v1371, %v1377
      %s1379 = scalar_lea.vmem %s396, 304
      %v1380 = vld [vmem:[%s1379] sm:$0xff]
      %v1381 = vadd.f32 %v1380, %v1376
      %1382 = vst [vmem:[%s1379] sm:$0xff] %v1381
      %s1383 = scalar_lea.vmem %s396, 560
      %v1384 = vld [vmem:[%s1383] sm:$0xff]
      %v1385 = vadd.f32 %v1384, %v1378
      %1386 = vst [vmem:[%s1383] sm:$0xff] %v1385
      %v1387 = vsub.f32 %v562, 68.97785
      %vm1388 = vcmp.gt.f32.partialorder %v1387, 0.0
      %v1389 = vsel %vm1388, 1, 0
      %v1390 = vcvt.s32.f32 %v1389
      %v1391 = vadd.f32 %v1390, 0.0
      %v1392 = vmul.f32 %v1390, %v1387
      %v1393 = vadd.f32 %v1392, 0.0
      %v1394 = vsub.f32 %v563, 68.97785
      %vm1395 = vcmp.gt.f32.partialorder %v1394, 0.0
      %v1396 = vsel %vm1395, 1, 0
      %v1397 = vcvt.s32.f32 %v1396
      %v1398 = vadd.f32 %v1391, %v1397
      %v1399 = vmul.f32 %v1397, %v1394
      %v1400 = vadd.f32 %v1393, %v1399
      %s1401 = scalar_lea.vmem %s396, 312
      %v1402 = vld [vmem:[%s1401] sm:$0xff]
      %v1403 = vadd.f32 %v1402, %v1398
      %1404 = vst [vmem:[%s1401] sm:$0xff] %v1403
      %s1405 = scalar_lea.vmem %s396, 568
      %v1406 = vld [vmem:[%s1405] sm:$0xff]
      %v1407 = vadd.f32 %v1406, %v1400
      %1408 = vst [vmem:[%s1405] sm:$0xff] %v1407
      %v1409 = vsub.f32 %v562, 100.0
      %vm1410 = vcmp.gt.f32.partialorder %v1409, 0.0
      %v1411 = vsel %vm1410, 1, 0
      %v1412 = vcvt.s32.f32 %v1411
      %v1413 = vadd.f32 %v1412, 0.0
      %v1414 = vmul.f32 %v1412, %v1409
      %v1415 = vadd.f32 %v1414, 0.0
      %v1416 = vsub.f32 %v563, 100.0
      %vm1417 = vcmp.gt.f32.partialorder %v1416, 0.0
      %v1418 = vsel %vm1417, 1, 0
      %v1419 = vcvt.s32.f32 %v1418
      %v1420 = vadd.f32 %v1413, %v1419
      %v1421 = vmul.f32 %v1419, %v1416
      %v1422 = vadd.f32 %v1415, %v1421
      %s1423 = scalar_lea.vmem %s396, 320
      %v1424 = vld [vmem:[%s1423] sm:$0xff]
      %v1425 = vadd.f32 %v1424, %v1420
      %1426 = vst [vmem:[%s1423] sm:$0xff] %v1425
      %s1427 = scalar_lea.vmem %s396, 576
      %v1428 = vld [vmem:[%s1427] sm:$0xff]
      %v1429 = vadd.f32 %v1428, %v1422
      %1430 = vst [vmem:[%s1427] sm:$0xff] %v1429
      %p1431 = scmp.lt.s32.totalorder %s20, 1
      %s1432 = scalar_select %p1431, %s20, 1
      %s1433 = smul.addr %s1432, 73
      %s1434 = smul.addr %s1433, 8
      %s1435 = scalar_lea.vmem %s5, %s1434
      // Predicated region
      $region45: #{db_loss_intersection.1} parent=39 // pred_check
        %p1436 = pneg %p186
      $region46: #{db_loss_intersection.1} parent=39 // pred_check_branch
        %1438 = sbr.rel (%p1436) target = $region48
      $region47: #{db_loss_intersection.1} parent=39 // pred_region
        _
      $region48: #{db_loss_intersection.1} parent=39 // pred_fallthru
        _
    $region40: #{db_loss_intersection.1} parent=5 // pred_fallthru
      _
    %p1439 = scmp.le.s32.totalorder 2, %s11
    // Predicated region
    $region49: #{db_loss_intersection.1} parent=5 // pred_check
      %p1440 = pneg %p1439
    $region50: #{db_loss_intersection.1} parent=5 // pred_check_branch
      %1442 = sbr.rel (%p1440) target = $region52
    $region51: #{db_loss_intersection.1} parent=5 // pred_region
      %s1443 = ssub.s32 %s11, 2
      // Predicated region
      $region53: #{db_loss_intersection.1} parent=51 // pred_check
        %p1444 = pneg %p192
      $region54: #{db_loss_intersection.1} parent=51 // pred_check_branch
        %1446 = sbr.rel (%p1444) target = $region56
      $region55: #{db_loss_intersection.1} parent=51 // pred_region
        %p1447 = scmp.lt.s32.totalorder %s22, 1
        %s1448 = scalar_select %p1447, %s22, 1
        %s1449 = smul.addr %s1448, 73
        %s1450 = smul.addr %s1449, 8
        %s1451 = scalar_lea.vmem %s5, %s1450
      $region56: #{db_loss_intersection.1} parent=51 // pred_fallthru
        _
    $region52: #{db_loss_intersection.1} parent=5 // pred_fallthru
      _
  $region6: #{db_loss_intersection.1} parent=0 // loop_footer
    %s15 = sadd.s32 1, %s11
  $region7: #{db_loss_intersection.1} parent=0 // loop_footer_branch
    %10 = sbr.rel target = $region3
  $region8: #{db_loss_intersection.1} parent=0 // loop_exit
    _

</llo_original>
